<compile_context>
chip_gen: v7x
topology: tpu7x:2x2x1
jax: 0.10.0
libtpu: 0.0.40
codegen_flags: <defaults>
</compile_context>

<pallas_src>
import functools
import math

import jax
import jax.numpy as jnp
from jax.experimental import pallas as pl
from jax.experimental.pallas import tpu as pltpu

_TOKENS_PER_STEP = 2048   # target attention tokens handled per grid step
_TILE_TOKENS_MAX = 2048   # max tokens per in-kernel matmul tile (bounds VMEM)


# ---------------------------------------------------------------------------
# Fused kernel: input_proj + PE add + QKV + per-chunk attention + permute + fc
# ---------------------------------------------------------------------------

def _fused_pose_attn_kernel(*refs, d_model, cs, nw, tile_rows, has_input_proj):
    if has_input_proj:
        (x_ref, pe_ref, w_in_ref, b_in_ref,
         w_qkv_ref, b_qkv_ref, w_fc_ref, b_fc_ref, o_ref) = refs
    else:
        (x_ref, pe_ref,
         w_qkv_ref, b_qkv_ref, w_fc_ref, b_fc_ref, o_ref) = refs
        w_in_ref = b_in_ref = None

    # Weights are VMEM-resident (constant-index BlockSpecs); load/broadcast once.
    w_qkv = w_qkv_ref[...]
    b_qkv = b_qkv_ref[...]
    w_fc = w_fc_ref[...]
    b_fc = b_fc_ref[...]
    if has_input_proj:
        w_in = w_in_ref[...]
        b_in = b_in_ref[...]

    def fused_tile(x_blk, pe_blk):
        """x_blk: (rows, cs, Cin); pe_blk: (rows, cs, d).

        Each row r indexes (chunk, w_in) — the within-chunk column; axis 1
        indexes h_in (the attention sequence). Returns fc(attn) as
        (rows, cs, d_model) f32."""
        rows = x_blk.shape[0]
        t = rows * cs
        xf = x_blk.reshape(t, x_blk.shape[-1]).astype(jnp.float32)
        if has_input_proj:
            h = jnp.dot(xf, w_in, preferred_element_type=jnp.float32) + b_in
        else:
            h = xf
        h = h + pe_blk.reshape(t, d_model).astype(jnp.float32)
        qkv = jnp.dot(h, w_qkv, preferred_element_type=jnp.float32) + b_qkv
        # Lane-aligned slices (d_model % 128 == 0); 1/sqrt(d_k) pre-folded in W_q.
        q = qkv[:, 0:d_model].reshape(rows, cs, d_model)
        k = qkv[:, d_model:2 * d_model].reshape(rows, cs, d_model)
        v = qkv[:, 2 * d_model:3 * d_model].reshape(rows, cs, d_model)
        # Per within-chunk column sequence:  s[r, h, g] = q(r, h) . k(r, g)
        s = jnp.einsum("rqd,rkd->rqk", q, k, preferred_element_type=jnp.float32)
        m = jnp.max(s, axis=-1, keepdims=True)
        p = jnp.exp(s - m)
        p = p * pl.reciprocal(jnp.sum(p, axis=-1, keepdims=True), approx=True)
        o = jnp.einsum("rqk,rkd->rqd", p, v, preferred_element_type=jnp.float32)
        y = jnp.dot(o.reshape(t, d_model), w_fc,
                    preferred_element_type=jnp.float32) + b_fc
        return y.reshape(rows, cs, d_model)

    rows_total = nw * cs
    if tile_rows >= rows_total:
        # Small chunk_size: one fused matmul pass over the whole (nw-chunk) step.
        # torch's output permute puts pixel (hc*cs + w_in, wc*cs + h_in) <-
        # fc(attn[seq=w_in, pos=h_in]); y[wc] below is already (w_in, h_in, d)
        # ordered, so each store is a direct lane-dense NHWC sub-block write.
        y = fused_tile(x_ref[0], pe_ref[...]).reshape(nw, cs, cs, d_model)
        for wc in range(nw):
            o_ref[0, :, wc * cs:(wc + 1) * cs, :] = y[wc].astype(o_ref.dtype)
    else:
        # Large chunk_size: bound VMEM by looping over w_in row-tiles; every row
        # is an independent attention sequence so tiles are fully decoupled.
        n_tiles = cs // tile_rows
        for wc in range(nw):
            for ti in range(n_tiles):
                r0 = wc * cs + ti * tile_rows
                y = fused_tile(x_ref[0, r0:r0 + tile_rows],
                               pe_ref[r0:r0 + tile_rows])
                o_ref[0, ti * tile_rows:(ti + 1) * tile_rows,
                      wc * cs:(wc + 1) * cs, :] = y.astype(o_ref.dtype)


# ---------------------------------------------------------------------------
# Tiling / VMEM heuristics
# ---------------------------------------------------------------------------

def _choose_chunks_per_step(w_chunks, cs):
    """Largest divisor of W_chunks whose chunks hold <= _TOKENS_PER_STEP tokens."""
    target = max(1, _TOKENS_PER_STEP // (cs * cs))
    nw = 1
    for cand in range(1, w_chunks + 1):
        if w_chunks % cand == 0 and cand <= target:
            nw = cand
    return nw


def _choose_tile_rows(nw, cs):
    """In-kernel row-tile size (multiple of 8, divides cs) bounding live tokens."""
    rows_total = nw * cs
    if rows_total * cs <= _TILE_TOKENS_MAX:
        return rows_total                       # single fused pass per grid step
    tr = max(8, (_TILE_TOKENS_MAX // cs) // 8 * 8)
    tr = min(tr, cs)
    while cs % tr != 0:
        tr -= 8
    return max(tr, 8)


def _vmem_limit_bytes(nw, cs, c_in, d_model, tile_rows, x_itemsize):
    rows = nw * cs
    tokens = rows * cs
    tile_tokens = min(tile_rows, rows) * cs
    # double-buffered input / PE / output blocks
    blocks = 2 * tokens * (c_in * x_itemsize + 4 * d_model + 4 * d_model)
    weights = 4 * (c_in * d_model + 3 * d_model * d_model + d_model * d_model
                   + 5 * d_model)
    live = 4 * tile_tokens * 6 * d_model + 4 * 2 * tile_tokens * cs
    est = int(1.3 * (blocks + weights + live)) + (2 << 20)
    try:
        phys = int(pltpu.get_tpu_info().vmem_capacity_bytes)
    except Exception:
        phys = 64 * 1024 * 1024                 # conservative (v7x physical VMEM)
    return max(32 * 1024 * 1024, min(est, int(0.9 * phys), 128 * 1024 * 1024))


# ---------------------------------------------------------------------------
# Positional encoding + full forward (reshape/param plumbing only in XLA)
# ---------------------------------------------------------------------------

def positional_encoding_whd(d_model, H, W):
    """PositionalEncoding2D laid out as (W, H, d_model) — token-(w, h) order."""
    div = jnp.exp(jnp.arange(0, d_model // 2, 2, dtype=jnp.float32)
                  * (-math.log(10000.0) / d_model))                       # (n,)
    n = div.shape[0]
    h_pos = jnp.arange(H, dtype=jnp.float32)
    w_pos = jnp.arange(W, dtype=jnp.float32)
    sin_ch = jnp.broadcast_to(jnp.sin(h_pos[None, :, None] * div[None, None, :]), (W, H, n))
    cos_ch = jnp.broadcast_to(jnp.cos(w_pos[:, None, None] * div[None, None, :]), (W, H, n))
    inter = jnp.stack([sin_ch, cos_ch], axis=-1).reshape(W, H, 2 * n)     # even=sin, odd=cos
    return jnp.concatenate(
        [inter, jnp.zeros((W, H, d_model - 2 * n), jnp.float32)], axis=-1)


@functools.partial(jax.jit, static_argnames=("d_model", "n_heads", "chunk_size"))
def pose_attention_forward(params, pose_features, *, d_model, n_heads, chunk_size):
    B, c_in, H, W = pose_features.shape
    cs = chunk_size
    assert H % cs == 0 and W % cs == 0, "H/W must be divisible by chunk_size"
    assert cs % 8 == 0 and d_model % 128 == 0, "TPU tiling guard (tested envelope)"
    # n_heads only sets the score scale — PoseAttention never splits heads.
    d_k = d_model // n_heads
    scale = 1.0 / math.sqrt(d_k)

    h_chunks, w_chunks = H // cs, W // cs
    nw = _choose_chunks_per_step(w_chunks, cs)
    tile_rows = _choose_tile_rows(nw, cs)

    # NCHW -> (B, W, H, Cin): tokens in (w, h) order so the within-chunk columns
    # (w_in) are the leading batch axis of the attention einsums and the torch
    # output permute becomes a direct NHWC block store.
    x_bwhc = jnp.transpose(pose_features, (0, 3, 2, 1))
    pe_whd = positional_encoding_whd(d_model, H, W)                        # (W, H, d)

    # Fold 1/sqrt(d_k) into W_q / b_q; fuse Q|K|V into a single matmul.
    w_qkv = jnp.concatenate([params["wq"] * scale, params["wk"], params["wv"]], axis=1)
    b_qkv = jnp.concatenate([params["bq"] * scale, params["bk"], params["bv"]], axis=0)

    has_proj = c_in != d_model
    grid = (h_chunks, w_chunks // nw, B)                                   # B innermost

    in_specs = [
        pl.BlockSpec((1, nw * cs, cs, c_in), lambda hc, wg, b: (b, wg, hc, 0)),
        pl.BlockSpec((nw * cs, cs, d_model), lambda hc, wg, b: (wg, hc, 0)),
    ]
    operands = [x_bwhc, pe_whd]
    if has_proj:
        in_specs += [
            pl.BlockSpec((c_in, d_model), lambda hc, wg, b: (0, 0)),
            pl.BlockSpec((1, d_model), lambda hc, wg, b: (0, 0)),
        ]
        operands += [params["in_w"], params["in_b"].reshape(1, d_model)]
    in_specs += [
        pl.BlockSpec((d_model, 3 * d_model), lambda hc, wg, b: (0, 0)),
        pl.BlockSpec((1, 3 * d_model), lambda hc, wg, b: (0, 0)),
        pl.BlockSpec((d_model, d_model), lambda hc, wg, b: (0, 0)),
        pl.BlockSpec((1, d_model), lambda hc, wg, b: (0, 0)),
    ]
    operands += [w_qkv, b_qkv.reshape(1, 3 * d_model),
                 params["fc_w"], params["fc_b"].reshape(1, d_model)]

    y_nhwc = pl.pallas_call(
        functools.partial(_fused_pose_attn_kernel, d_model=d_model, cs=cs, nw=nw,
                          tile_rows=tile_rows, has_input_proj=has_proj),
        out_shape=jax.ShapeDtypeStruct((B, H, W, d_model), pose_features.dtype),
        grid_spec=pltpu.PrefetchScalarGridSpec(
            num_scalar_prefetch=0,
            grid=grid,
            in_specs=in_specs,
            out_specs=pl.BlockSpec((1, cs, nw * cs, d_model),
                                   lambda hc, wg, b: (b, hc, wg, 0)),
        ),
        compiler_params=pltpu.CompilerParams(
            dimension_semantics=("parallel", "parallel", "parallel"),
            vmem_limit_bytes=_vmem_limit_bytes(
                nw, cs, c_in, d_model, tile_rows, pose_features.dtype.itemsize),
        ),
    )(*operands)
    return jnp.transpose(y_nhwc, (0, 3, 1, 2))                             # NHWC -> NCHW


# ---------------------------------------------------------------------------
# Deterministic parameter init (shapes follow the module's __init__)
# ---------------------------------------------------------------------------

def init_params(key, input_dim, d_model):
    ks = jax.random.split(key, 10)
    w = lambda k, s: 0.02 * jax.random.normal(k, s, jnp.float32)
    p = {
        "wq": w(ks[0], (d_model, d_model)), "bq": w(ks[1], (d_model,)),
        "wk": w(ks[2], (d_model, d_model)), "bk": w(ks[3], (d_model,)),
        "wv": w(ks[4], (d_model, d_model)), "bv": w(ks[5], (d_model,)),
        "fc_w": w(ks[6], (d_model, d_model)), "fc_b": w(ks[7], (d_model,)),
    }
    if input_dim != d_model:
        p["in_w"] = w(ks[8], (input_dim, d_model))
        p["in_b"] = w(ks[9], (d_model,))
    return p


# ---------------------------------------------------------------------------
# Pure-jnp reference (literal transcription of the PyTorch forward) for checks
# ---------------------------------------------------------------------------

def _pe_ref(d_model, H, W):
    div = jnp.exp(jnp.arange(0, d_model // 2, 2, dtype=jnp.float32)
                  * (-math.log(10000.0) / d_model))
    y_pos = jnp.broadcast_to(jnp.arange(H, dtype=jnp.float32)[:, None], (H, W))
    x_pos = jnp.broadcast_to(jnp.arange(W, dtype=jnp.float32)[None, :], (H, W))
    pe = jnp.zeros((d_model, H, W), jnp.float32)
    pe = pe.at[0:d_model // 2:2].set(jnp.sin(y_pos[None] * div[:, None, None]))
    pe = pe.at[1:d_model // 2:2].set(jnp.cos(x_pos[None] * div[:, None, None]))
    return pe


@functools.partial(jax.jit, static_argnames=("d_model", "n_heads", "chunk_size"))
def reference_forward(params, pose_features, *, d_model, n_heads, chunk_size):
    B, Cin, H, W = pose_features.shape
    cs = chunk_size
    Hc, Wc = H // cs, W // cs
    d_k = d_model // n_heads
    x = pose_features
    if Cin != d_model:
        x = jnp.einsum("bihw,io->bohw", x, params["in_w"]) \
            + params["in_b"][None, :, None, None]
    x = x + _pe_ref(d_model, H, W)[None]
    x = x.reshape(B, d_model, Hc, cs, Wc, cs)
    x = jnp.transpose(x, (0, 2, 4, 1, 3, 5)).reshape(-1, d_model, cs * cs)
    x = jnp.transpose(x, (0, 2, 1))
    q = x @ params["wq"] + params["bq"]
    k = x @ params["wk"] + params["bk"]
    v = x @ params["wv"] + params["bv"]

    def split_chunks(t):
        N, T, C = t.shape
        return jnp.transpose(t.reshape(N, T // cs, cs, C), (0, 2, 1, 3)).reshape(-1, cs, C)

    qc, kc, vc = split_chunks(q), split_chunks(k), split_chunks(v)
    s = jnp.einsum("mld,mgd->mlg", qc, kc) / jnp.sqrt(jnp.float32(d_k))
    a = jnp.einsum("mlg,mgd->mld", jax.nn.softmax(s, axis=-1), vc)
    a = a.reshape(B, Hc, Wc, cs, cs, d_model)
    a = jnp.transpose(a, (0, 5, 1, 3, 2, 4)).reshape(B, d_model, H, W)
    return jnp.einsum("bchw,co->bohw", a, params["fc_w"]) \
        + params["fc_b"][None, :, None, None]


if __name__ == "__main__":
    # Small shapes consistent with the module (defaults: d_model=256, chunk_size=64,
    # n_heads=4 — scaled down here: d_model=128, chunk_size=8).
    B, input_dim, H, W = 2, 17, 16, 16
    d_model, n_heads, chunk_size = 128, 4, 8

    key = jax.random.PRNGKey(0)
    kp, kx = jax.random.split(key)
    params = init_params(kp, input_dim, d_model)
    pose_features = jax.random.normal(kx, (B, input_dim, H, W), jnp.float32)

    out = pose_attention_forward(params, pose_features, d_model=d_model,
                                 n_heads=n_heads, chunk_size=chunk_size)
    out = jax.block_until_ready(out)
    assert out.shape == (B, d_model, H, W)
    assert bool(jnp.all(jnp.isfinite(out)))

    ref = jax.block_until_ready(
        reference_forward(params, pose_features, d_model=d_model,
                          n_heads=n_heads, chunk_size=chunk_size))
    assert jnp.allclose(out, ref, atol=2e-2, rtol=2e-2), \
        f"max abs err {float(jnp.max(jnp.abs(out - ref)))}"
    print("KERNEL_OK")
</pallas_src>

<mosaic_0001>
module attributes {stable_mosaic.version = 11 : i64} {
  func.func @_fused_pose_attn_kernel(%arg0: i32, %arg1: i32, %arg2: i32, %arg3: memref<1x16x8x17xf32, #tpu.memory_space<vmem>>, %arg4: memref<16x8x128xf32, #tpu.memory_space<vmem>>, %arg5: memref<17x128xf32, #tpu.memory_space<vmem>>, %arg6: memref<1x128xf32, #tpu.memory_space<vmem>>, %arg7: memref<128x384xf32, #tpu.memory_space<vmem>>, %arg8: memref<1x384xf32, #tpu.memory_space<vmem>>, %arg9: memref<128x128xf32, #tpu.memory_space<vmem>>, %arg10: memref<1x128xf32, #tpu.memory_space<vmem>>, %arg11: memref<1x8x16x128xf32, #tpu.memory_space<vmem>>) attributes {dimension_semantics = [#tpu.dimension_semantics<parallel>, #tpu.dimension_semantics<parallel>, #tpu.dimension_semantics<parallel>], iteration_bounds = array<i64: 2, 1, 2>, scalar_prefetch = 0 : i64, scratch_operands = 0 : i64, tpu.core_type = #tpu.core_type<tc>, window_params = [{transform_indices = @transform_0, window_bounds = array<i64: 1, 16, 8, 17>}, {transform_indices = @transform_1, window_bounds = array<i64: 16, 8, 128>}, {pipeline_mode = #tpu.pipeline_mode<synchronous>, transform_indices = @transform_2, window_bounds = array<i64: 17, 128>}, {pipeline_mode = #tpu.pipeline_mode<synchronous>, transform_indices = @transform_3, window_bounds = array<i64: 1, 128>}, {pipeline_mode = #tpu.pipeline_mode<synchronous>, transform_indices = @transform_4, window_bounds = array<i64: 128, 384>}, {pipeline_mode = #tpu.pipeline_mode<synchronous>, transform_indices = @transform_5, window_bounds = array<i64: 1, 384>}, {pipeline_mode = #tpu.pipeline_mode<synchronous>, transform_indices = @transform_6, window_bounds = array<i64: 128, 128>}, {pipeline_mode = #tpu.pipeline_mode<synchronous>, transform_indices = @transform_7, window_bounds = array<i64: 1, 128>}, {transform_indices = @transform_8, window_bounds = array<i64: 1, 8, 16, 128>}]} {
    %c0 = arith.constant 0 : index
    %c0_0 = arith.constant 0 : index
    %0 = vector.load %arg7[%c0, %c0_0] : memref<128x384xf32, #tpu.memory_space<vmem>>, vector<128x384xf32>
    %c0_1 = arith.constant 0 : index
    %c0_2 = arith.constant 0 : index
    %1 = vector.load %arg8[%c0_1, %c0_2] : memref<1x384xf32, #tpu.memory_space<vmem>>, vector<1x384xf32>
    %c0_3 = arith.constant 0 : index
    %c0_4 = arith.constant 0 : index
    %2 = vector.load %arg9[%c0_3, %c0_4] : memref<128x128xf32, #tpu.memory_space<vmem>>, vector<128x128xf32>
    %c0_5 = arith.constant 0 : index
    %c0_6 = arith.constant 0 : index
    %3 = vector.load %arg10[%c0_5, %c0_6] : memref<1x128xf32, #tpu.memory_space<vmem>>, vector<1x128xf32>
    %c0_7 = arith.constant 0 : index
    %c0_8 = arith.constant 0 : index
    %4 = vector.load %arg5[%c0_7, %c0_8] : memref<17x128xf32, #tpu.memory_space<vmem>>, vector<17x128xf32>
    %c0_9 = arith.constant 0 : index
    %c0_10 = arith.constant 0 : index
    %5 = vector.load %arg6[%c0_9, %c0_10] : memref<1x128xf32, #tpu.memory_space<vmem>>, vector<1x128xf32>
    %c0_11 = arith.constant 0 : index
    %c0_12 = arith.constant 0 : index
    %c0_13 = arith.constant 0 : index
    %c0_14 = arith.constant 0 : index
    %6 = vector.load %arg3[%c0_11, %c0_12, %c0_13, %c0_14] : memref<1x16x8x17xf32, #tpu.memory_space<vmem>>, vector<1x16x8x17xf32>
    %7 = vector.shape_cast %6 : vector<1x16x8x17xf32> to vector<16x8x17xf32>
    %c0_15 = arith.constant 0 : index
    %c0_16 = arith.constant 0 : index
    %c0_17 = arith.constant 0 : index
    %8 = vector.load %arg4[%c0_15, %c0_16, %c0_17] : memref<16x8x128xf32, #tpu.memory_space<vmem>>, vector<16x8x128xf32>
    %9 = vector.shape_cast %7 : vector<16x8x17xf32> to vector<128x17xf32>
    %cst = arith.constant dense<0.000000e+00> : vector<128x128xf32>
    %10 = tpu.matmul %9, %4, %cst {dimension_numbers = #tpu.dot_dimension_numbers<[1], [0], [0], [1], [0, 0, 1, 1], [], []>} : vector<128x17xf32>, vector<17x128xf32>, vector<128x128xf32> -> vector<128x128xf32>
    %11 = vector.broadcast %5 : vector<1x128xf32> to vector<128x128xf32>
    %12 = arith.addf %10, %11 : vector<128x128xf32>
    %13 = vector.shape_cast %8 : vector<16x8x128xf32> to vector<128x128xf32>
    %14 = arith.addf %12, %13 : vector<128x128xf32>
    %cst_18 = arith.constant dense<0.000000e+00> : vector<128x384xf32>
    %15 = tpu.matmul %14, %0, %cst_18 {dimension_numbers = #tpu.dot_dimension_numbers<[1], [0], [0], [1], [0, 0, 1, 1], [], []>} : vector<128x128xf32>, vector<128x384xf32>, vector<128x384xf32> -> vector<128x384xf32>
    %16 = vector.broadcast %1 : vector<1x384xf32> to vector<128x384xf32>
    %17 = arith.addf %15, %16 : vector<128x384xf32>
    %18 = vector.extract_strided_slice %17 {offsets = [0, 0], sizes = [128, 128], strides = [1, 1]} : vector<128x384xf32> to vector<128x128xf32>
    %19 = vector.shape_cast %18 : vector<128x128xf32> to vector<16x8x128xf32>
    %20 = vector.extract_strided_slice %17 {offsets = [0, 128], sizes = [128, 128], strides = [1, 1]} : vector<128x384xf32> to vector<128x128xf32>
    %21 = vector.shape_cast %20 : vector<128x128xf32> to vector<16x8x128xf32>
    %22 = vector.extract_strided_slice %17 {offsets = [0, 256], sizes = [128, 128], strides = [1, 1]} : vector<128x384xf32> to vector<128x128xf32>
    %23 = vector.shape_cast %22 : vector<128x128xf32> to vector<16x8x128xf32>
    "tpu.trace_start"() <{level = 10 : i32, message = "rqd,rkd->rqk"}> : () -> ()
    %cst_19 = arith.constant dense<0.000000e+00> : vector<16x8x8xf32>
    %24 = tpu.matmul %19, %21, %cst_19 {dimension_numbers = #tpu.dot_dimension_numbers<[2], [2], [1], [1], [0, 0, 0, 1, 1, 1], [0], [0]>} : vector<16x8x128xf32>, vector<16x8x128xf32>, vector<16x8x8xf32> -> vector<16x8x8xf32>
    "tpu.trace_stop"() : () -> ()
    %cst_20 = arith.constant dense<0xFF800000> : vector<16x8xf32>
    %25 = vector.multi_reduction <maximumf>, %24, %cst_20 [2] : vector<16x8x8xf32> to vector<16x8xf32>
    %26 = vector.shape_cast %25 : vector<16x8xf32> to vector<16x8x1xf32>
    %27 = vector.broadcast %26 : vector<16x8x1xf32> to vector<16x8x8xf32>
    %28 = arith.subf %24, %27 : vector<16x8x8xf32>
    %29 = math.exp %28 : vector<16x8x8xf32>
    %cst_21 = arith.constant dense<0.000000e+00> : vector<16x8xf32>
    %30 = vector.multi_reduction <add>, %29, %cst_21 [2] : vector<16x8x8xf32> to vector<16x8xf32>
    %31 = vector.shape_cast %30 : vector<16x8xf32> to vector<16x8x1xf32>
    %32 = tpu.reciprocal %31 {approx = true} : vector<16x8x1xf32> -> vector<16x8x1xf32>
    %33 = vector.broadcast %32 : vector<16x8x1xf32> to vector<16x8x8xf32>
    %34 = arith.mulf %29, %33 : vector<16x8x8xf32>
    "tpu.trace_start"() <{level = 10 : i32, message = "rqk,rkd->rqd"}> : () -> ()
    %cst_22 = arith.constant dense<0.000000e+00> : vector<16x8x128xf32>
    %35 = tpu.matmul %34, %23, %cst_22 {dimension_numbers = #tpu.dot_dimension_numbers<[2], [1], [1], [2], [0, 0, 0, 1, 1, 2], [0], [0]>} : vector<16x8x8xf32>, vector<16x8x128xf32>, vector<16x8x128xf32> -> vector<16x8x128xf32>
    "tpu.trace_stop"() : () -> ()
    %36 = vector.shape_cast %35 : vector<16x8x128xf32> to vector<128x128xf32>
    %cst_23 = arith.constant dense<0.000000e+00> : vector<128x128xf32>
    %37 = tpu.matmul %36, %2, %cst_23 {dimension_numbers = #tpu.dot_dimension_numbers<[1], [0], [0], [1], [0, 0, 1, 1], [], []>} : vector<128x128xf32>, vector<128x128xf32>, vector<128x128xf32> -> vector<128x128xf32>
    %38 = vector.broadcast %3 : vector<1x128xf32> to vector<128x128xf32>
    %39 = arith.addf %37, %38 : vector<128x128xf32>
    %40 = vector.shape_cast %39 : vector<128x128xf32> to vector<16x8x128xf32>
    %41 = vector.shape_cast %40 : vector<16x8x128xf32> to vector<2x8x8x128xf32>
    %42 = vector.extract_strided_slice %41 {offsets = [0, 0, 0, 0], sizes = [1, 8, 8, 128], strides = [1, 1, 1, 1]} : vector<2x8x8x128xf32> to vector<1x8x8x128xf32>
    %43 = vector.shape_cast %42 : vector<1x8x8x128xf32> to vector<8x8x128xf32>
    %c0_24 = arith.constant 0 : index
    %c0_25 = arith.constant 0 : index
    %c0_26 = arith.constant 0 : index
    %c0_27 = arith.constant 0 : index
    %44 = vector.load %arg11[%c0_24, %c0_25, %c0_26, %c0_27] : memref<1x8x16x128xf32, #tpu.memory_space<vmem>>, vector<1x8x8x128xf32>
    %45 = vector.shape_cast %44 : vector<1x8x8x128xf32> to vector<8x8x128xf32>
    %46 = vector.shape_cast %43 : vector<8x8x128xf32> to vector<1x8x8x128xf32>
    tpu.vector_store %arg11[%c0_24, %c0_25, %c0_26, %c0_27], %46 {strides = array<i32>} : memref<1x8x16x128xf32, #tpu.memory_space<vmem>>, vector<1x8x8x128xf32>,
    %47 = vector.extract_strided_slice %41 {offsets = [1, 0, 0, 0], sizes = [1, 8, 8, 128], strides = [1, 1, 1, 1]} : vector<2x8x8x128xf32> to vector<1x8x8x128xf32>
    %48 = vector.shape_cast %47 : vector<1x8x8x128xf32> to vector<8x8x128xf32>
    %c0_28 = arith.constant 0 : index
    %c0_29 = arith.constant 0 : index
    %c8 = arith.constant 8 : index
    %c0_30 = arith.constant 0 : index
    %49 = vector.load %arg11[%c0_28, %c0_29, %c8, %c0_30] : memref<1x8x16x128xf32, #tpu.memory_space<vmem>>, vector<1x8x8x128xf32>
    %50 = vector.shape_cast %49 : vector<1x8x8x128xf32> to vector<8x8x128xf32>
    %51 = vector.shape_cast %48 : vector<8x8x128xf32> to vector<1x8x8x128xf32>
    tpu.vector_store %arg11[%c0_28, %c0_29, %c8, %c0_30], %51 {strides = array<i32>} : memref<1x8x16x128xf32, #tpu.memory_space<vmem>>, vector<1x8x8x128xf32>,
    return
  }
  func.func @transform_0(%arg0: i32, %arg1: i32, %arg2: i32) -> (i32, i32, i32, i32) {
    %c0_i32 = arith.constant 0 : i32
    %c0_i32_0 = arith.constant 0 : i32
    return %arg2, %arg1, %arg0, %c0_i32 : i32, i32, i32, i32
  }
  func.func @transform_1(%arg0: i32, %arg1: i32, %arg2: i32) -> (i32, i32, i32) {
    %c0_i32 = arith.constant 0 : i32
    %c0_i32_0 = arith.constant 0 : i32
    return %arg1, %arg0, %c0_i32 : i32, i32, i32
  }
  func.func @transform_2(%arg0: i32, %arg1: i32, %arg2: i32) -> (i32, i32) {
    %c0_i32 = arith.constant 0 : i32
    %c0_i32_0 = arith.constant 0 : i32
    %c0_i32_1 = arith.constant 0 : i32
    return %c0_i32, %c0_i32_0 : i32, i32
  }
  func.func @transform_3(%arg0: i32, %arg1: i32, %arg2: i32) -> (i32, i32) {
    %c0_i32 = arith.constant 0 : i32
    %c0_i32_0 = arith.constant 0 : i32
    %c0_i32_1 = arith.constant 0 : i32
    return %c0_i32, %c0_i32_0 : i32, i32
  }
  func.func @transform_4(%arg0: i32, %arg1: i32, %arg2: i32) -> (i32, i32) {
    %c0_i32 = arith.constant 0 : i32
    %c0_i32_0 = arith.constant 0 : i32
    %c0_i32_1 = arith.constant 0 : i32
    return %c0_i32, %c0_i32_0 : i32, i32
  }
  func.func @transform_5(%arg0: i32, %arg1: i32, %arg2: i32) -> (i32, i32) {
    %c0_i32 = arith.constant 0 : i32
    %c0_i32_0 = arith.constant 0 : i32
    %c0_i32_1 = arith.constant 0 : i32
    return %c0_i32, %c0_i32_0 : i32, i32
  }
  func.func @transform_6(%arg0: i32, %arg1: i32, %arg2: i32) -> (i32, i32) {
    %c0_i32 = arith.constant 0 : i32
    %c0_i32_0 = arith.constant 0 : i32
    %c0_i32_1 = arith.constant 0 : i32
    return %c0_i32, %c0_i32_0 : i32, i32
  }
  func.func @transform_7(%arg0: i32, %arg1: i32, %arg2: i32) -> (i32, i32) {
    %c0_i32 = arith.constant 0 : i32
    %c0_i32_0 = arith.constant 0 : i32
    %c0_i32_1 = arith.constant 0 : i32
    return %c0_i32, %c0_i32_0 : i32, i32
  }
  func.func @transform_8(%arg0: i32, %arg1: i32, %arg2: i32) -> (i32, i32, i32, i32) {
    %c0_i32 = arith.constant 0 : i32
    %c0_i32_0 = arith.constant 0 : i32
    return %arg2, %arg0, %arg1, %c0_i32 : i32, i32, i32, i32
  }
}

</mosaic_0001>

<llo_original>
// kernel: pose_attention_forward.1
$region0: #{pose_attention_forward.1}
  #allocation0 [shape = 'u32[]', space=smem, size = 0x4, offset = 0x4, fixed_abs, tag = 'smem constant byte address 0x4 - core index']
  #allocation1 [shape = 'u32[144,128]{1,0:T(1,128)}', space=vmem, size = 0x12000, scoped, tag = 'internal scratch']
  %s0 = inlined_call_operand.vmem [shape: f32[2,16,16,17], index: 0, kind: input, shape index: {}]
  %s1 = inlined_call_operand.vmem [shape: f32[16,16,128], index: 1, kind: input, shape index: {}]
  %s2 = inlined_call_operand.vmem [shape: f32[17,128], index: 2, kind: input, shape index: {}]
  %s3 = inlined_call_operand.vmem [shape: f32[1,128], index: 3, kind: input, shape index: {}]
  %s4 = inlined_call_operand.vmem [shape: f32[128,384], index: 4, kind: input, shape index: {}]
  %s5 = inlined_call_operand.vmem [shape: f32[1,384], index: 5, kind: input, shape index: {}]
  %s6 = inlined_call_operand.vmem [shape: f32[128,128], index: 6, kind: input, shape index: {}]
  %s7 = inlined_call_operand.vmem [shape: f32[1,128], index: 7, kind: input, shape index: {}]
  %s8 = inlined_call_operand.hbm [shape: f32[2,16,16,128], index: 8, kind: output, shape index: {}]
  %s9 = sld [smem:[#allocation0]]
  $region141: #{pose_attention_forward.1} parent=0
    _
  %s11 = ssub.s32 1, %s9
  %s12 = scalar_select 0, %s11, %s9
  $region1: #{pose_attention_forward.1} parent=0
    #allocation2 [shape = 'u8[131072]{0}', space=vmem, size = 0x20000, scoped, tag = 'input window, operand 0']
    #allocation3 [shape = 'u8[131072]{0}', space=vmem, size = 0x20000, scoped, tag = 'input window, operand 1']
    #allocation4 [shape = 'u8[131072]{0}', space=vmem, size = 0x20000, scoped, tag = 'output window, operand 0']
    #allocation5 [shape = 's32[2]{0}', space=sflag, size = 0x8, scoped, tag = 'scoped memory for pose_attention_forward.1']
    %13 = vsyncpa [#allocation5], 0
    %s14 = scalar_lea.sflag [#allocation5], 1
    %15 = vsyncpa %s14, 0
    loop: start=0, step=1, limit=6
    $region2: #{pose_attention_forward.1} parent=1 // loop_pre_header
      _
    $region3: #{pose_attention_forward.1} parent=1 // loop_header
      %s17 = sphi 0, %s21
      %p18 = scmp.ge.s32.totalorder %s17, 6
      %s24 = sphi 0, %s43
      %s25 = sphi 0, %s39
      %s26 = sphi 0, %s35
      %s27 = sphi 0, %s24
      %s28 = sphi 0, %s25
      %s29 = sphi 0, %s26
      %s30 = sphi 0, %s27
      %s31 = sphi 0, %s28
      %s32 = sphi 0, %s29
      %s50 = sphi 0, %s52
      %s53 = sphi 0, %s50
      %s54 = sphi 0, %s53
      %s70 = sphi 0, %s54
      %s78 = sphi 0, %s80
      %s81 = sphi 0, %s78
      %s82 = sphi 0, %s81
      %s98 = sphi 0, %s82
      %s102 = sphi 0, %s102
      %s104 = sphi 0, %s102
      %s105 = sphi 0, %s104
      %s119 = sphi 0, %s105
      %s123 = sphi 0, %s123
      %s125 = sphi 0, %s123
      %s126 = sphi 0, %s125
      %s140 = sphi 0, %s126
      %s144 = sphi 0, %s144
      %s146 = sphi 0, %s144
      %s147 = sphi 0, %s146
      %s161 = sphi 0, %s147
      %s165 = sphi 0, %s165
      %s167 = sphi 0, %s165
      %s168 = sphi 0, %s167
      %s182 = sphi 0, %s168
      %s186 = sphi 0, %s186
      %s188 = sphi 0, %s186
      %s189 = sphi 0, %s188
      %s203 = sphi 0, %s189
      %s207 = sphi 0, %s207
      %s209 = sphi 0, %s207
      %s210 = sphi 0, %s209
      %s224 = sphi 0, %s210
      %s234 = sphi 0, %s236
      %s237 = sphi 0, %s234
      %s238 = sphi 0, %s237
      %s254 = sphi 0, %s238
    $region4: #{pose_attention_forward.1} parent=1 // loop_header_branch
      %20 = sbr.rel (%p18) target = $region8
    $region5: #{pose_attention_forward.1} parent=1 // loop_body
      %s22 = ssub.s32 %s17, 1
      %s23 = ssub.s32 %s17, 2
      %s33 = sadd.s32 1, %s26
      %p34 = scmp.ge.s32.totalorder %s33, 2
      %s35 = scalar_select %p34, 0, %s33
      %s36 = sadd.s32 1, %s25
      %s37 = scalar_select %p34, %s36, %s25
      %p38 = scmp.ge.s32.totalorder %s37, 1
      %s39 = scalar_select %p38, 0, %s37
      %s40 = sadd.s32 1, %s24
      %s41 = scalar_select %p38, %s40, %s24
      %p42 = scmp.ge.s32.totalorder %s41, 2
      %s43 = scalar_select %p42, 0, %s41
      %s44 = ssub.s32 %s26, %s35
      %s45 = ssub.s32 %s25, %s39
      %s46 = sor.u32 %s44, %s45
      %s47 = ssub.s32 %s24, %s43
      %s48 = sor.u32 %s46, %s47
      %p49 = scmp.eq.s32.totalorder %s48, 0
      %s51 = sadd.s32 %s50, 1
      %s52 = scalar_select %p49, %s50, %s51
      %p55 = pneg %p49
      %p56 = scmp.eq.s32.totalorder %s17, 3
      %p57 = por %p55, %p56
      %p58 = scmp.ne.s32.totalorder %s50, %s53
      %p59 = scmp.eq.s32.totalorder %s17, 0
      %p60 = por %p58, %p59
      %p61 = scmp.ne.s32.totalorder %s50, %s53
      %p62 = scmp.eq.s32.totalorder %s22, 3
      %p63 = por %p61, %p62
      %p64 = scmp.ne.s32.totalorder %s53, %s54
      %p65 = scmp.eq.s32.totalorder %s22, 0
      %p66 = por %p64, %p65
      %p67 = scmp.ne.s32.totalorder %s53, %s54
      %p68 = scmp.eq.s32.totalorder %s23, 3
      %p69 = por %p67, %p68
      %p71 = scmp.ne.s32.totalorder %s54, %s70
      %p72 = scmp.eq.s32.totalorder %s23, 0
      %p73 = por %p71, %p72
      %s74 = ssub.s32 %s25, %s39
      %s75 = ssub.s32 %s24, %s43
      %s76 = sor.u32 %s74, %s75
      %p77 = scmp.eq.s32.totalorder %s76, 0
      %s79 = sadd.s32 %s78, 1
      %s80 = scalar_select %p77, %s78, %s79
      %p83 = pneg %p77
      %p84 = scmp.eq.s32.totalorder %s17, 3
      %p85 = por %p83, %p84
      %p86 = scmp.ne.s32.totalorder %s78, %s81
      %p87 = scmp.eq.s32.totalorder %s17, 0
      %p88 = por %p86, %p87
      %p89 = scmp.ne.s32.totalorder %s78, %s81
      %p90 = scmp.eq.s32.totalorder %s22, 3
      %p91 = por %p89, %p90
      %p92 = scmp.ne.s32.totalorder %s81, %s82
      %p93 = scmp.eq.s32.totalorder %s22, 0
      %p94 = por %p92, %p93
      %p95 = scmp.ne.s32.totalorder %s81, %s82
      %p96 = scmp.eq.s32.totalorder %s23, 3
      %p97 = por %p95, %p96
      %p99 = scmp.ne.s32.totalorder %s82, %s98
      %p100 = scmp.eq.s32.totalorder %s23, 0
      %p101 = por %p99, %p100
      %s103 = sadd.s32 %s102, 1
      %p106 = scmp.eq.s32.totalorder %s17, 3
      %p107 = scmp.ne.s32.totalorder %s102, %s104
      %p108 = scmp.eq.s32.totalorder %s17, 0
      %p109 = por %p107, %p108
      %p110 = scmp.ne.s32.totalorder %s102, %s104
      %p111 = scmp.eq.s32.totalorder %s22, 3
      %p112 = por %p110, %p111
      %p113 = scmp.ne.s32.totalorder %s104, %s105
      %p114 = scmp.eq.s32.totalorder %s22, 0
      %p115 = por %p113, %p114
      %p116 = scmp.ne.s32.totalorder %s104, %s105
      %p117 = scmp.eq.s32.totalorder %s23, 3
      %p118 = por %p116, %p117
      %p120 = scmp.ne.s32.totalorder %s105, %s119
      %p121 = scmp.eq.s32.totalorder %s23, 0
      %p122 = por %p120, %p121
      %s124 = sadd.s32 %s123, 1
      %p127 = scmp.eq.s32.totalorder %s17, 3
      %p128 = scmp.ne.s32.totalorder %s123, %s125
      %p129 = scmp.eq.s32.totalorder %s17, 0
      %p130 = por %p128, %p129
      %p131 = scmp.ne.s32.totalorder %s123, %s125
      %p132 = scmp.eq.s32.totalorder %s22, 3
      %p133 = por %p131, %p132
      %p134 = scmp.ne.s32.totalorder %s125, %s126
      %p135 = scmp.eq.s32.totalorder %s22, 0
      %p136 = por %p134, %p135
      %p137 = scmp.ne.s32.totalorder %s125, %s126
      %p138 = scmp.eq.s32.totalorder %s23, 3
      %p139 = por %p137, %p138
      %p141 = scmp.ne.s32.totalorder %s126, %s140
      %p142 = scmp.eq.s32.totalorder %s23, 0
      %p143 = por %p141, %p142
      %s145 = sadd.s32 %s144, 1
      %p148 = scmp.eq.s32.totalorder %s17, 3
      %p149 = scmp.ne.s32.totalorder %s144, %s146
      %p150 = scmp.eq.s32.totalorder %s17, 0
      %p151 = por %p149, %p150
      %p152 = scmp.ne.s32.totalorder %s144, %s146
      %p153 = scmp.eq.s32.totalorder %s22, 3
      %p154 = por %p152, %p153
      %p155 = scmp.ne.s32.totalorder %s146, %s147
      %p156 = scmp.eq.s32.totalorder %s22, 0
      %p157 = por %p155, %p156
      %p158 = scmp.ne.s32.totalorder %s146, %s147
      %p159 = scmp.eq.s32.totalorder %s23, 3
      %p160 = por %p158, %p159
      %p162 = scmp.ne.s32.totalorder %s147, %s161
      %p163 = scmp.eq.s32.totalorder %s23, 0
      %p164 = por %p162, %p163
      %s166 = sadd.s32 %s165, 1
      %p169 = scmp.eq.s32.totalorder %s17, 3
      %p170 = scmp.ne.s32.totalorder %s165, %s167
      %p171 = scmp.eq.s32.totalorder %s17, 0
      %p172 = por %p170, %p171
      %p173 = scmp.ne.s32.totalorder %s165, %s167
      %p174 = scmp.eq.s32.totalorder %s22, 3
      %p175 = por %p173, %p174
      %p176 = scmp.ne.s32.totalorder %s167, %s168
      %p177 = scmp.eq.s32.totalorder %s22, 0
      %p178 = por %p176, %p177
      %p179 = scmp.ne.s32.totalorder %s167, %s168
      %p180 = scmp.eq.s32.totalorder %s23, 3
      %p181 = por %p179, %p180
      %p183 = scmp.ne.s32.totalorder %s168, %s182
      %p184 = scmp.eq.s32.totalorder %s23, 0
      %p185 = por %p183, %p184
      %s187 = sadd.s32 %s186, 1
      %p190 = scmp.eq.s32.totalorder %s17, 3
      %p191 = scmp.ne.s32.totalorder %s186, %s188
      %p192 = scmp.eq.s32.totalorder %s17, 0
      %p193 = por %p191, %p192
      %p194 = scmp.ne.s32.totalorder %s186, %s188
      %p195 = scmp.eq.s32.totalorder %s22, 3
      %p196 = por %p194, %p195
      %p197 = scmp.ne.s32.totalorder %s188, %s189
      %p198 = scmp.eq.s32.totalorder %s22, 0
      %p199 = por %p197, %p198
      %p200 = scmp.ne.s32.totalorder %s188, %s189
      %p201 = scmp.eq.s32.totalorder %s23, 3
      %p202 = por %p200, %p201
      %p204 = scmp.ne.s32.totalorder %s189, %s203
      %p205 = scmp.eq.s32.totalorder %s23, 0
      %p206 = por %p204, %p205
      %s208 = sadd.s32 %s207, 1
      %p211 = scmp.eq.s32.totalorder %s17, 3
      %p212 = scmp.ne.s32.totalorder %s207, %s209
      %p213 = scmp.eq.s32.totalorder %s17, 0
      %p214 = por %p212, %p213
      %p215 = scmp.ne.s32.totalorder %s207, %s209
      %p216 = scmp.eq.s32.totalorder %s22, 3
      %p217 = por %p215, %p216
      %p218 = scmp.ne.s32.totalorder %s209, %s210
      %p219 = scmp.eq.s32.totalorder %s22, 0
      %p220 = por %p218, %p219
      %p221 = scmp.ne.s32.totalorder %s209, %s210
      %p222 = scmp.eq.s32.totalorder %s23, 3
      %p223 = por %p221, %p222
      %p225 = scmp.ne.s32.totalorder %s210, %s224
      %p226 = scmp.eq.s32.totalorder %s23, 0
      %p227 = por %p225, %p226
      %s228 = ssub.s32 %s26, %s35
      %s229 = ssub.s32 %s24, %s43
      %s230 = sor.u32 %s228, %s229
      %s231 = ssub.s32 %s25, %s39
      %s232 = sor.u32 %s230, %s231
      %p233 = scmp.eq.s32.totalorder %s232, 0
      %s235 = sadd.s32 %s234, 1
      %s236 = scalar_select %p233, %s234, %s235
      %p239 = pneg %p233
      %p240 = scmp.eq.s32.totalorder %s17, 3
      %p241 = por %p239, %p240
      %p242 = scmp.ne.s32.totalorder %s234, %s237
      %p243 = scmp.eq.s32.totalorder %s17, 0
      %p244 = por %p242, %p243
      %p245 = scmp.ne.s32.totalorder %s234, %s237
      %p246 = scmp.eq.s32.totalorder %s22, 3
      %p247 = por %p245, %p246
      %p248 = scmp.ne.s32.totalorder %s237, %s238
      %p249 = scmp.eq.s32.totalorder %s22, 0
      %p250 = por %p248, %p249
      %p251 = scmp.ne.s32.totalorder %s237, %s238
      %p252 = scmp.eq.s32.totalorder %s23, 3
      %p253 = por %p251, %p252
      %p255 = scmp.ne.s32.totalorder %s238, %s254
      %p256 = scmp.eq.s32.totalorder %s23, 0
      %p257 = por %p255, %p256
      %p258 = scmp.le.s32.totalorder 1, %s17
      %p259 = scmp.lt.s32.totalorder %s17, 5
      %p260 = pnand %p258, %p259
      %p261 = pneg %p260
      // Predicated region
      $region9: #{pose_attention_forward.1} parent=5 // pred_check
        _
      $region10: #{pose_attention_forward.1} parent=5 // pred_check_branch
        %263 = sbr.rel (%p260) target = $region12
      $region11: #{pose_attention_forward.1} parent=5 // pred_region
        %s264 = ssub.s32 %s17, 1
        // Predicated region
        $region13: #{pose_attention_forward.1} parent=11 // pred_check
          %p265 = pneg %p115
        $region14: #{pose_attention_forward.1} parent=11 // pred_check_branch
          %267 = sbr.rel (%p265) target = $region16
        $region15: #{pose_attention_forward.1} parent=11 // pred_region
          _
        $region16: #{pose_attention_forward.1} parent=11 // pred_fallthru
          _
        // Predicated region
        $region17: #{pose_attention_forward.1} parent=11 // pred_check
          %p268 = pneg %p136
        $region18: #{pose_attention_forward.1} parent=11 // pred_check_branch
          %270 = sbr.rel (%p268) target = $region20
        $region19: #{pose_attention_forward.1} parent=11 // pred_region
          _
        $region20: #{pose_attention_forward.1} parent=11 // pred_fallthru
          _
        // Predicated region
        $region21: #{pose_attention_forward.1} parent=11 // pred_check
          %p271 = pneg %p157
        $region22: #{pose_attention_forward.1} parent=11 // pred_check_branch
          %273 = sbr.rel (%p271) target = $region24
        $region23: #{pose_attention_forward.1} parent=11 // pred_region
          _
        $region24: #{pose_attention_forward.1} parent=11 // pred_fallthru
          _
        // Predicated region
        $region25: #{pose_attention_forward.1} parent=11 // pred_check
          %p274 = pneg %p178
        $region26: #{pose_attention_forward.1} parent=11 // pred_check_branch
          %276 = sbr.rel (%p274) target = $region28
        $region27: #{pose_attention_forward.1} parent=11 // pred_region
          _
        $region28: #{pose_attention_forward.1} parent=11 // pred_fallthru
          _
        // Predicated region
        $region29: #{pose_attention_forward.1} parent=11 // pred_check
          %p277 = pneg %p199
        $region30: #{pose_attention_forward.1} parent=11 // pred_check_branch
          %279 = sbr.rel (%p277) target = $region32
        $region31: #{pose_attention_forward.1} parent=11 // pred_region
          _
        $region32: #{pose_attention_forward.1} parent=11 // pred_fallthru
          _
        // Predicated region
        $region33: #{pose_attention_forward.1} parent=11 // pred_check
          %p280 = pneg %p220
        $region34: #{pose_attention_forward.1} parent=11 // pred_check_branch
          %282 = sbr.rel (%p280) target = $region36
        $region35: #{pose_attention_forward.1} parent=11 // pred_region
          _
        $region36: #{pose_attention_forward.1} parent=11 // pred_fallthru
          _
      $region12: #{pose_attention_forward.1} parent=5 // pred_fallthru
        _
      %p283 = scmp.lt.s32.totalorder %s17, 4
      // Predicated region
      $region37: #{pose_attention_forward.1} parent=5 // pred_check
        %p284 = pneg %p283
      $region38: #{pose_attention_forward.1} parent=5 // pred_check_branch
        %286 = sbr.rel (%p284) target = $region40
      $region39: #{pose_attention_forward.1} parent=5 // pred_region
        // Predicated region
        $region41: #{pose_attention_forward.1} parent=39 // pred_check
          %p287 = pneg %p60
        $region42: #{pose_attention_forward.1} parent=39 // pred_check_branch
          %289 = sbr.rel (%p287) target = $region44
        $region43: #{pose_attention_forward.1} parent=39 // pred_region
          %s290 = sand.u32 %s50, 1
          %s291 = sand.u32 %s50, 1
          %s292 = smul.addr %s291, 128
          %s293 = scalar_lea.vmem [#allocation2], %s292
          %s294 = smul.u32 16, %s25
          %s295 = smul.addr %s294, 2
          %s296 = sadd.s32 %s24, %s295
          %s297 = smul.addr %s26, 32
          %s298 = sadd.s32 %s296, %s297
          %s299 = smul.addr %s298, 8
          %s300 = scalar_lea.vmem %s0, %s299
          // Predicated region
          $region45: #{pose_attention_forward.1} parent=43 // pred_check
            _
          $region46: #{pose_attention_forward.1} parent=43 // pred_check_branch
            %302 = sbr.rel (0) target = $region48
          $region47: #{pose_attention_forward.1} parent=43 // pred_region
            // Predicated region
            $region49: #{pose_attention_forward.1} parent=47 // pred_check
              _
            $region50: #{pose_attention_forward.1} parent=47 // pred_check_branch
              %304 = sbr.rel (0) target = $region52
            $region51: #{pose_attention_forward.1} parent=47 // pred_region
              // Predicated region
              $region64: #{pose_attention_forward.1} parent=51 // pred_check
                _
              $region65: #{pose_attention_forward.1} parent=51 // pred_check_branch
                %349 = sbr.rel (0) target = $region67
              $region66: #{pose_attention_forward.1} parent=51 // pred_region
                loop: start=0, step=1, limit=1
                $region68: #{pose_attention_forward.1} parent=66 // loop_pre_header
                  _
                $region69: #{pose_attention_forward.1} parent=66 // loop_header
                  %s351 = sphi 0, %s355
                  %p352 = scmp.ge.s32.totalorder %s351, 1
                  %s356 = sphi %s300, %s300
                  %s357 = sphi %s293, %s293
                $region70: #{pose_attention_forward.1} parent=66 // loop_header_branch
                  %354 = sbr.rel (%p352) target = $region74
                $region71: #{pose_attention_forward.1} parent=66 // loop_body
                  %v358 = vld [vmem:[%s356] sm:$0xff]
                  %359 = vst [vmem:[%s357] sm:$0xff] %v358
                  %v360 = vld [vmem:[%s356 + $0x10] sm:$0xff]
                  %361 = vst [vmem:[%s357 + $0x8] sm:$0xff] %v360
                  %v362 = vld [vmem:[%s356 + $0x20] sm:$0xff]
                  %363 = vst [vmem:[%s357 + $0x10] sm:$0xff] %v362
                  %v364 = vld [vmem:[%s356 + $0x30] sm:$0xff]
                  %365 = vst [vmem:[%s357 + $0x18] sm:$0xff] %v364
                  %v366 = vld [vmem:[%s356 + $0x40] sm:$0xff]
                  %367 = vst [vmem:[%s357 + $0x20] sm:$0xff] %v366
                  %v368 = vld [vmem:[%s356 + $0x50] sm:$0xff]
                  %369 = vst [vmem:[%s357 + $0x28] sm:$0xff] %v368
                  %v370 = vld [vmem:[%s356 + $0x60] sm:$0xff]
                  %371 = vst [vmem:[%s357 + $0x30] sm:$0xff] %v370
                  %v372 = vld [vmem:[%s356 + $0x70] sm:$0xff]
                  %373 = vst [vmem:[%s357 + $0x38] sm:$0xff] %v372
                  %v374 = vld [vmem:[%s356 + $0x80] sm:$0xff]
                  %375 = vst [vmem:[%s357 + $0x40] sm:$0xff] %v374
                  %v376 = vld [vmem:[%s356 + $0x90] sm:$0xff]
                  %377 = vst [vmem:[%s357 + $0x48] sm:$0xff] %v376
                  %v378 = vld [vmem:[%s356 + $0xa0] sm:$0xff]
                  %379 = vst [vmem:[%s357 + $0x50] sm:$0xff] %v378
                  %v380 = vld [vmem:[%s356 + $0xb0] sm:$0xff]
                  %381 = vst [vmem:[%s357 + $0x58] sm:$0xff] %v380
                  %v382 = vld [vmem:[%s356 + $0xc0] sm:$0xff]
                  %383 = vst [vmem:[%s357 + $0x60] sm:$0xff] %v382
                  %v384 = vld [vmem:[%s356 + $0xd0] sm:$0xff]
                  %385 = vst [vmem:[%s357 + $0x68] sm:$0xff] %v384
                  %v386 = vld [vmem:[%s356 + $0xe0] sm:$0xff]
                  %387 = vst [vmem:[%s357 + $0x70] sm:$0xff] %v386
                  %v388 = vld [vmem:[%s356 + $0xf0] sm:$0xff]
                  %389 = vst [vmem:[%s357 + $0x78] sm:$0xff] %v388
                $region72: #{pose_attention_forward.1} parent=66 // loop_footer
                  %s355 = sadd.s32 1, %s351
                $region73: #{pose_attention_forward.1} parent=66 // loop_footer_branch
                  %350 = sbr.rel target = $region69
                $region74: #{pose_attention_forward.1} parent=66 // loop_exit
                  _
              $region67: #{pose_attention_forward.1} parent=51 // pred_fallthru
                _
              // Predicated region
              $region75: #{pose_attention_forward.1} parent=51 // pred_check
                _
              $region76: #{pose_attention_forward.1} parent=51 // pred_check_branch
                %391 = sbr.rel target = $region78
              $region77: #{pose_attention_forward.1} parent=51 // pred_region
                _
              $region78: #{pose_attention_forward.1} parent=51 // pred_fallthru
                _
            $region52: #{pose_attention_forward.1} parent=47 // pred_fallthru
              _
            // Predicated region
            $region53: #{pose_attention_forward.1} parent=47 // pred_check
              _
            $region54: #{pose_attention_forward.1} parent=47 // pred_check_branch
              %306 = sbr.rel target = $region56
            $region55: #{pose_attention_forward.1} parent=47 // pred_region
              loop: start=0, step=1, limit=1
              $region57: #{pose_attention_forward.1} parent=55 // loop_pre_header
                _
              $region58: #{pose_attention_forward.1} parent=55 // loop_header
                %s309 = sphi 0, %s313
                %p310 = scmp.ge.s32.totalorder %s309, 1
                %s314 = sphi %s300, %s300
                %s315 = sphi %s293, %s293
              $region59: #{pose_attention_forward.1} parent=55 // loop_header_branch
                %312 = sbr.rel (%p310) target = $region63
              $region60: #{pose_attention_forward.1} parent=55 // loop_body
                %v316 = vld [vmem:[%s314] sm:$0xff]
                %317 = vst [vmem:[%s315] sm:$0xff] %v316
                %v318 = vld [vmem:[%s314 + $0x10] sm:$0xff]
                %319 = vst [vmem:[%s315 + $0x8] sm:$0xff] %v318
                %v320 = vld [vmem:[%s314 + $0x20] sm:$0xff]
                %321 = vst [vmem:[%s315 + $0x10] sm:$0xff] %v320
                %v322 = vld [vmem:[%s314 + $0x30] sm:$0xff]
                %323 = vst [vmem:[%s315 + $0x18] sm:$0xff] %v322
                %v324 = vld [vmem:[%s314 + $0x40] sm:$0xff]
                %325 = vst [vmem:[%s315 + $0x20] sm:$0xff] %v324
                %v326 = vld [vmem:[%s314 + $0x50] sm:$0xff]
                %327 = vst [vmem:[%s315 + $0x28] sm:$0xff] %v326
                %v328 = vld [vmem:[%s314 + $0x60] sm:$0xff]
                %329 = vst [vmem:[%s315 + $0x30] sm:$0xff] %v328
                %v330 = vld [vmem:[%s314 + $0x70] sm:$0xff]
                %331 = vst [vmem:[%s315 + $0x38] sm:$0xff] %v330
                %v332 = vld [vmem:[%s314 + $0x80] sm:$0xff]
                %333 = vst [vmem:[%s315 + $0x40] sm:$0xff] %v332
                %v334 = vld [vmem:[%s314 + $0x90] sm:$0xff]
                %335 = vst [vmem:[%s315 + $0x48] sm:$0xff] %v334
                %v336 = vld [vmem:[%s314 + $0xa0] sm:$0xff]
                %337 = vst [vmem:[%s315 + $0x50] sm:$0xff] %v336
                %v338 = vld [vmem:[%s314 + $0xb0] sm:$0xff]
                %339 = vst [vmem:[%s315 + $0x58] sm:$0xff] %v338
                %v340 = vld [vmem:[%s314 + $0xc0] sm:$0xff]
                %341 = vst [vmem:[%s315 + $0x60] sm:$0xff] %v340
                %v342 = vld [vmem:[%s314 + $0xd0] sm:$0xff]
                %343 = vst [vmem:[%s315 + $0x68] sm:$0xff] %v342
                %v344 = vld [vmem:[%s314 + $0xe0] sm:$0xff]
                %345 = vst [vmem:[%s315 + $0x70] sm:$0xff] %v344
                %v346 = vld [vmem:[%s314 + $0xf0] sm:$0xff]
                %347 = vst [vmem:[%s315 + $0x78] sm:$0xff] %v346
              $region61: #{pose_attention_forward.1} parent=55 // loop_footer
                %s313 = sadd.s32 1, %s309
              $region62: #{pose_attention_forward.1} parent=55 // loop_footer_branch
                %308 = sbr.rel target = $region58
              $region63: #{pose_attention_forward.1} parent=55 // loop_exit
                _
            $region56: #{pose_attention_forward.1} parent=47 // pred_fallthru
              _
          $region48: #{pose_attention_forward.1} parent=43 // pred_fallthru
            _
          %392 = vnop
        $region44: #{pose_attention_forward.1} parent=39 // pred_fallthru
          _
        // Predicated region
        $region79: #{pose_attention_forward.1} parent=39 // pred_check
          %p393 = pneg %p88
        $region80: #{pose_attention_forward.1} parent=39 // pred_check_branch
          %395 = sbr.rel (%p393) target = $region82
        $region81: #{pose_attention_forward.1} parent=39 // pred_region
          %s396 = sand.u32 %s78, 1
          %s397 = sand.u32 %s78, 1
          %s398 = smul.addr %s397, 128
          %s399 = scalar_lea.vmem [#allocation3], %s398
          %s400 = smul.u32 16, %s25
          %s401 = smul.addr %s400, 2
          %s402 = sadd.s32 %s24, %s401
          %s403 = smul.addr %s402, 8
          %s404 = scalar_lea.vmem %s1, %s403
          // Predicated region
          $region83: #{pose_attention_forward.1} parent=81 // pred_check
            _
          $region84: #{pose_attention_forward.1} parent=81 // pred_check_branch
            %406 = sbr.rel (0) target = $region86
          $region85: #{pose_attention_forward.1} parent=81 // pred_region
            // Predicated region
            $region87: #{pose_attention_forward.1} parent=85 // pred_check
              _
            $region88: #{pose_attention_forward.1} parent=85 // pred_check_branch
              %408 = sbr.rel (0) target = $region90
            $region89: #{pose_attention_forward.1} parent=85 // pred_region
              // Predicated region
              $region102: #{pose_attention_forward.1} parent=89 // pred_check
                _
              $region103: #{pose_attention_forward.1} parent=89 // pred_check_branch
                %453 = sbr.rel (0) target = $region105
              $region104: #{pose_attention_forward.1} parent=89 // pred_region
                loop: start=0, step=1, limit=1
                $region106: #{pose_attention_forward.1} parent=104 // loop_pre_header
                  _
                $region107: #{pose_attention_forward.1} parent=104 // loop_header
                  %s455 = sphi 0, %s459
                  %p456 = scmp.ge.s32.totalorder %s455, 1
                  %s460 = sphi %s404, %s404
                  %s461 = sphi %s399, %s399
                $region108: #{pose_attention_forward.1} parent=104 // loop_header_branch
                  %458 = sbr.rel (%p456) target = $region112
                $region109: #{pose_attention_forward.1} parent=104 // loop_body
                  %v462 = vld [vmem:[%s460] sm:$0xff]
                  %463 = vst [vmem:[%s461] sm:$0xff] %v462
                  %v464 = vld [vmem:[%s460 + $0x10] sm:$0xff]
                  %465 = vst [vmem:[%s461 + $0x8] sm:$0xff] %v464
                  %v466 = vld [vmem:[%s460 + $0x20] sm:$0xff]
                  %467 = vst [vmem:[%s461 + $0x10] sm:$0xff] %v466
                  %v468 = vld [vmem:[%s460 + $0x30] sm:$0xff]
                  %469 = vst [vmem:[%s461 + $0x18] sm:$0xff] %v468
                  %v470 = vld [vmem:[%s460 + $0x40] sm:$0xff]
                  %471 = vst [vmem:[%s461 + $0x20] sm:$0xff] %v470
                  %v472 = vld [vmem:[%s460 + $0x50] sm:$0xff]
                  %473 = vst [vmem:[%s461 + $0x28] sm:$0xff] %v472
                  %v474 = vld [vmem:[%s460 + $0x60] sm:$0xff]
                  %475 = vst [vmem:[%s461 + $0x30] sm:$0xff] %v474
                  %v476 = vld [vmem:[%s460 + $0x70] sm:$0xff]
                  %477 = vst [vmem:[%s461 + $0x38] sm:$0xff] %v476
                  %v478 = vld [vmem:[%s460 + $0x80] sm:$0xff]
                  %479 = vst [vmem:[%s461 + $0x40] sm:$0xff] %v478
                  %v480 = vld [vmem:[%s460 + $0x90] sm:$0xff]
                  %481 = vst [vmem:[%s461 + $0x48] sm:$0xff] %v480
                  %v482 = vld [vmem:[%s460 + $0xa0] sm:$0xff]
                  %483 = vst [vmem:[%s461 + $0x50] sm:$0xff] %v482
                  %v484 = vld [vmem:[%s460 + $0xb0] sm:$0xff]
                  %485 = vst [vmem:[%s461 + $0x58] sm:$0xff] %v484
                  %v486 = vld [vmem:[%s460 + $0xc0] sm:$0xff]
                  %487 = vst [vmem:[%s461 + $0x60] sm:$0xff] %v486
                  %v488 = vld [vmem:[%s460 + $0xd0] sm:$0xff]
                  %489 = vst [vmem:[%s461 + $0x68] sm:$0xff] %v488
                  %v490 = vld [vmem:[%s460 + $0xe0] sm:$0xff]
                  %491 = vst [vmem:[%s461 + $0x70] sm:$0xff] %v490
                  %v492 = vld [vmem:[%s460 + $0xf0] sm:$0xff]
                  %493 = vst [vmem:[%s461 + $0x78] sm:$0xff] %v492
                $region110: #{pose_attention_forward.1} parent=104 // loop_footer
                  %s459 = sadd.s32 1, %s455
                $region111: #{pose_attention_forward.1} parent=104 // loop_footer_branch
                  %454 = sbr.rel target = $region107
                $region112: #{pose_attention_forward.1} parent=104 // loop_exit
                  _
              $region105: #{pose_attention_forward.1} parent=89 // pred_fallthru
                _
              // Predicated region
              $region113: #{pose_attention_forward.1} parent=89 // pred_check
                _
              $region114: #{pose_attention_forward.1} parent=89 // pred_check_branch
                %495 = sbr.rel target = $region116
              $region115: #{pose_attention_forward.1} parent=89 // pred_region
                _
              $region116: #{pose_attention_forward.1} parent=89 // pred_fallthru
                _
            $region90: #{pose_attention_forward.1} parent=85 // pred_fallthru
              _
            // Predicated region
            $region91: #{pose_attention_forward.1} parent=85 // pred_check
              _
            $region92: #{pose_attention_forward.1} parent=85 // pred_check_branch
              %410 = sbr.rel target = $region94
            $region93: #{pose_attention_forward.1} parent=85 // pred_region
              loop: start=0, step=1, limit=1
              $region95: #{pose_attention_forward.1} parent=93 // loop_pre_header
                _
              $region96: #{pose_attention_forward.1} parent=93 // loop_header
                %s413 = sphi 0, %s417
                %p414 = scmp.ge.s32.totalorder %s413, 1
                %s418 = sphi %s404, %s404
                %s419 = sphi %s399, %s399
              $region97: #{pose_attention_forward.1} parent=93 // loop_header_branch
                %416 = sbr.rel (%p414) target = $region101
              $region98: #{pose_attention_forward.1} parent=93 // loop_body
                %v420 = vld [vmem:[%s418] sm:$0xff]
                %421 = vst [vmem:[%s419] sm:$0xff] %v420
                %v422 = vld [vmem:[%s418 + $0x10] sm:$0xff]
                %423 = vst [vmem:[%s419 + $0x8] sm:$0xff] %v422
                %v424 = vld [vmem:[%s418 + $0x20] sm:$0xff]
                %425 = vst [vmem:[%s419 + $0x10] sm:$0xff] %v424
                %v426 = vld [vmem:[%s418 + $0x30] sm:$0xff]
                %427 = vst [vmem:[%s419 + $0x18] sm:$0xff] %v426
                %v428 = vld [vmem:[%s418 + $0x40] sm:$0xff]
                %429 = vst [vmem:[%s419 + $0x20] sm:$0xff] %v428
                %v430 = vld [vmem:[%s418 + $0x50] sm:$0xff]
                %431 = vst [vmem:[%s419 + $0x28] sm:$0xff] %v430
                %v432 = vld [vmem:[%s418 + $0x60] sm:$0xff]
                %433 = vst [vmem:[%s419 + $0x30] sm:$0xff] %v432
                %v434 = vld [vmem:[%s418 + $0x70] sm:$0xff]
                %435 = vst [vmem:[%s419 + $0x38] sm:$0xff] %v434
                %v436 = vld [vmem:[%s418 + $0x80] sm:$0xff]
                %437 = vst [vmem:[%s419 + $0x40] sm:$0xff] %v436
                %v438 = vld [vmem:[%s418 + $0x90] sm:$0xff]
                %439 = vst [vmem:[%s419 + $0x48] sm:$0xff] %v438
                %v440 = vld [vmem:[%s418 + $0xa0] sm:$0xff]
                %441 = vst [vmem:[%s419 + $0x50] sm:$0xff] %v440
                %v442 = vld [vmem:[%s418 + $0xb0] sm:$0xff]
                %443 = vst [vmem:[%s419 + $0x58] sm:$0xff] %v442
                %v444 = vld [vmem:[%s418 + $0xc0] sm:$0xff]
                %445 = vst [vmem:[%s419 + $0x60] sm:$0xff] %v444
                %v446 = vld [vmem:[%s418 + $0xd0] sm:$0xff]
                %447 = vst [vmem:[%s419 + $0x68] sm:$0xff] %v446
                %v448 = vld [vmem:[%s418 + $0xe0] sm:$0xff]
                %449 = vst [vmem:[%s419 + $0x70] sm:$0xff] %v448
                %v450 = vld [vmem:[%s418 + $0xf0] sm:$0xff]
                %451 = vst [vmem:[%s419 + $0x78] sm:$0xff] %v450
              $region99: #{pose_attention_forward.1} parent=93 // loop_footer
                %s417 = sadd.s32 1, %s413
              $region100: #{pose_attention_forward.1} parent=93 // loop_footer_branch
                %412 = sbr.rel target = $region96
              $region101: #{pose_attention_forward.1} parent=93 // loop_exit
                _
            $region94: #{pose_attention_forward.1} parent=85 // pred_fallthru
              _
          $region86: #{pose_attention_forward.1} parent=81 // pred_fallthru
            _
          %496 = vnop
        $region82: #{pose_attention_forward.1} parent=39 // pred_fallthru
          _
      $region40: #{pose_attention_forward.1} parent=5 // pred_fallthru
        _
      %p497 = scmp.le.s32.totalorder 1, %s17
      %p498 = scmp.lt.s32.totalorder %s17, 5
      %p499 = pnand %p497, %p498
      %p500 = pneg %p499
      // Predicated region
      $region117: #{pose_attention_forward.1} parent=5 // pred_check
        _
      $region118: #{pose_attention_forward.1} parent=5 // pred_check_branch
        %502 = sbr.rel (%p499) target = $region120
      $region119: #{pose_attention_forward.1} parent=5 // pred_region
        %s503 = ssub.s32 %s17, 1
        %s504 = sand.u32 %s53, 1
        %s505 = sand.u32 %s53, 1
        %s506 = smul.addr %s505, 128
        %s507 = scalar_lea.vmem [#allocation2], %s506
        // Predicated region
        $region121: #{pose_attention_forward.1} parent=119 // pred_check
          %p508 = pneg %p66
        $region122: #{pose_attention_forward.1} parent=119 // pred_check_branch
          %510 = sbr.rel (%p508) target = $region124
        $region123: #{pose_attention_forward.1} parent=119 // pred_region
          _
        $region124: #{pose_attention_forward.1} parent=119 // pred_fallthru
          _
        %s511 = sand.u32 %s81, 1
        %s512 = sand.u32 %s81, 1
        %s513 = smul.addr %s512, 128
        %s514 = scalar_lea.vmem [#allocation3], %s513
        // Predicated region
        $region125: #{pose_attention_forward.1} parent=119 // pred_check
          %p515 = pneg %p94
        $region126: #{pose_attention_forward.1} parent=119 // pred_check_branch
          %517 = sbr.rel (%p515) target = $region128
        $region127: #{pose_attention_forward.1} parent=119 // pred_region
          _
        $region128: #{pose_attention_forward.1} parent=119 // pred_fallthru
          _
        %s518 = sand.u32 %s53, 1
        %s519 = sand.u32 %s53, 1
        %s520 = smul.addr %s519, 128
        %s521 = scalar_lea.vmem [#allocation2], %s520
        %p522 = pneg %p66
        %p523 = pneg %p63
        %s524 = sand.u32 %s81, 1
        %s525 = sand.u32 %s81, 1
        %s526 = smul.addr %s525, 128
        %s527 = scalar_lea.vmem [#allocation3], %s526
        %p528 = pneg %p94
        %p529 = pneg %p91
        %p530 = pneg %p115
        %p531 = pneg %p112
        %p532 = pneg %p136
        %p533 = pneg %p133
        %p534 = pneg %p157
        %p535 = pneg %p154
        %p536 = pneg %p178
        %p537 = pneg %p175
        %p538 = pneg %p199
        %p539 = pneg %p196
        %p540 = pneg %p220
        %p541 = pneg %p217
        %p542 = pneg %p250
        %p543 = pneg %p247
        %s544 = sand.u32 %s237, 1
        %s545 = scalar_lea.sflag [#allocation5], %s544
        %s546 = sand.u32 %s237, 1
        %s547 = smul.addr %s546, 128
        %s548 = scalar_lea.vmem [#allocation4], %s547
        %s549 = smul.u32 16, %s28
        %s550 = smul.u32 16, %s28
        %s551 = smul.u32 8, %s27
        %s552 = smul.u32 2, %s28
        %v553 = vld [vmem:[%s4] sm:$0xff]
        %v554 = vld [vmem:[%s4 + $0x8] sm:$0xff]
        %v555 = vld [vmem:[%s4 + $0x10] sm:$0xff]
        %v556 = vld [vmem:[%s4 + $0x18] sm:$0xff]
        %v557 = vld [vmem:[%s4 + $0x20] sm:$0xff]
        %v558 = vld [vmem:[%s4 + $0x28] sm:$0xff]
        %v559 = vld [vmem:[%s4 + $0x30] sm:$0xff]
        %v560 = vld [vmem:[%s4 + $0x38] sm:$0xff]
        %v561 = vld [vmem:[%s4 + $0x40] sm:$0xff]
        %v562 = vld [vmem:[%s4 + $0x48] sm:$0xff]
        %v563 = vld [vmem:[%s4 + $0x50] sm:$0xff]
        %v564 = vld [vmem:[%s4 + $0x58] sm:$0xff]
        %v565 = vld [vmem:[%s4 + $0x60] sm:$0xff]
        %v566 = vld [vmem:[%s4 + $0x68] sm:$0xff]
        %v567 = vld [vmem:[%s4 + $0x70] sm:$0xff]
        %v568 = vld [vmem:[%s4 + $0x78] sm:$0xff]
        %v569 = vld [vmem:[%s4 + $0x80] sm:$0xff]
        %v570 = vld [vmem:[%s4 + $0x88] sm:$0xff]
        %v571 = vld [vmem:[%s4 + $0x90] sm:$0xff]
        %v572 = vld [vmem:[%s4 + $0x98] sm:$0xff]
        %v573 = vld [vmem:[%s4 + $0xa0] sm:$0xff]
        %v574 = vld [vmem:[%s4 + $0xa8] sm:$0xff]
        %v575 = vld [vmem:[%s4 + $0xb0] sm:$0xff]
        %v576 = vld [vmem:[%s4 + $0xb8] sm:$0xff]
        %v577 = vld [vmem:[%s4 + $0xc0] sm:$0xff]
        %v578 = vld [vmem:[%s4 + $0xc8] sm:$0xff]
        %v579 = vld [vmem:[%s4 + $0xd0] sm:$0xff]
        %v580 = vld [vmem:[%s4 + $0xd8] sm:$0xff]
        %v581 = vld [vmem:[%s4 + $0xe0] sm:$0xff]
        %v582 = vld [vmem:[%s4 + $0xe8] sm:$0xff]
        %v583 = vld [vmem:[%s4 + $0xf0] sm:$0xff]
        %v584 = vld [vmem:[%s4 + $0xf8] sm:$0xff]
        %v585 = vld [vmem:[%s4 + $0x100] sm:$0xff]
        %v586 = vld [vmem:[%s4 + $0x108] sm:$0xff]
        %v587 = vld [vmem:[%s4 + $0x110] sm:$0xff]
        %v588 = vld [vmem:[%s4 + $0x118] sm:$0xff]
        %v589 = vld [vmem:[%s4 + $0x120] sm:$0xff]
        %v590 = vld [vmem:[%s4 + $0x128] sm:$0xff]
        %v591 = vld [vmem:[%s4 + $0x130] sm:$0xff]
        %v592 = vld [vmem:[%s4 + $0x138] sm:$0xff]
        %v593 = vld [vmem:[%s4 + $0x140] sm:$0xff]
        %v594 = vld [vmem:[%s4 + $0x148] sm:$0xff]
        %v595 = vld [vmem:[%s4 + $0x150] sm:$0xff]
        %v596 = vld [vmem:[%s4 + $0x158] sm:$0xff]
        %v597 = vld [vmem:[%s4 + $0x160] sm:$0xff]
        %v598 = vld [vmem:[%s4 + $0x168] sm:$0xff]
        %v599 = vld [vmem:[%s4 + $0x170] sm:$0xff]
        %v600 = vld [vmem:[%s4 + $0x178] sm:$0xff]
        %v601 = vld [vmem:[%s5] sm:$0x7]
        %v602 = vld [vmem:[%s6] sm:$0xff]
        %v603 = vld [vmem:[%s6 + $0x8] sm:$0xff]
        %v604 = vld [vmem:[%s6 + $0x10] sm:$0xff]
        %v605 = vld [vmem:[%s6 + $0x18] sm:$0xff]
        %v606 = vld [vmem:[%s6 + $0x20] sm:$0xff]
        %v607 = vld [vmem:[%s6 + $0x28] sm:$0xff]
        %v608 = vld [vmem:[%s6 + $0x30] sm:$0xff]
        %v609 = vld [vmem:[%s6 + $0x38] sm:$0xff]
        %v610 = vld [vmem:[%s6 + $0x40] sm:$0xff]
        %v611 = vld [vmem:[%s6 + $0x48] sm:$0xff]
        %v612 = vld [vmem:[%s6 + $0x50] sm:$0xff]
        %v613 = vld [vmem:[%s6 + $0x58] sm:$0xff]
        %v614 = vld [vmem:[%s6 + $0x60] sm:$0xff]
        %v615 = vld [vmem:[%s6 + $0x68] sm:$0xff]
        %v616 = vld [vmem:[%s6 + $0x70] sm:$0xff]
        %v617 = vld [vmem:[%s6 + $0x78] sm:$0xff]
        %v618 = vld [vmem:[%s7] sm:$0x1]
        %v619 = vld [vmem:[%s2] sm:$0xff]
        %v620 = vld [vmem:[%s2 + $0x8] sm:$0xff]
        %v621 = vld [vmem:[%s2 + $0x10] sm:$0x1]
        %v622 = vld [vmem:[%s3] sm:$0x1]
        %v623 = vld [vmem:[%s507] sm:$0xff]
        %v624 = vld [vmem:[%s507 + $0x8] sm:$0xff]
        %v625 = vld [vmem:[%s507 + $0x10] sm:$0xff]
        %v626 = vld [vmem:[%s507 + $0x18] sm:$0xff]
        %v627 = vld [vmem:[%s507 + $0x20] sm:$0xff]
        %v628 = vld [vmem:[%s507 + $0x28] sm:$0xff]
        %v629 = vld [vmem:[%s507 + $0x30] sm:$0xff]
        %v630 = vld [vmem:[%s507 + $0x38] sm:$0xff]
        %v631 = vld [vmem:[%s507 + $0x40] sm:$0xff]
        %v632 = vld [vmem:[%s507 + $0x48] sm:$0xff]
        %v633 = vld [vmem:[%s507 + $0x50] sm:$0xff]
        %v634 = vld [vmem:[%s507 + $0x58] sm:$0xff]
        %v635 = vld [vmem:[%s507 + $0x60] sm:$0xff]
        %v636 = vld [vmem:[%s507 + $0x68] sm:$0xff]
        %v637 = vld [vmem:[%s507 + $0x70] sm:$0xff]
        %v638 = vld [vmem:[%s507 + $0x78] sm:$0xff]
        %v639 = vld [vmem:[%s514] sm:$0xff]
        %v640 = vld [vmem:[%s514 + $0x8] sm:$0xff]
        %v641 = vld [vmem:[%s514 + $0x10] sm:$0xff]
        %v642 = vld [vmem:[%s514 + $0x18] sm:$0xff]
        %v643 = vld [vmem:[%s514 + $0x20] sm:$0xff]
        %v644 = vld [vmem:[%s514 + $0x28] sm:$0xff]
        %v645 = vld [vmem:[%s514 + $0x30] sm:$0xff]
        %v646 = vld [vmem:[%s514 + $0x38] sm:$0xff]
        %v647 = vld [vmem:[%s514 + $0x40] sm:$0xff]
        %v648 = vld [vmem:[%s514 + $0x48] sm:$0xff]
        %v649 = vld [vmem:[%s514 + $0x50] sm:$0xff]
        %v650 = vld [vmem:[%s514 + $0x58] sm:$0xff]
        %v651 = vld [vmem:[%s514 + $0x60] sm:$0xff]
        %v652 = vld [vmem:[%s514 + $0x68] sm:$0xff]
        %v653 = vld [vmem:[%s514 + $0x70] sm:$0xff]
        %v654 = vld [vmem:[%s514 + $0x78] sm:$0xff]
        %v656 = vlaneseq
        %v657 = vshrl.u32 %v656, 7
        %v658 = vsub.s32 0, %v657
        %v659 = vrot.slane %v622, %v658
        %vm661 = vcmask 138240
        %v663 = vsel %vm661, %v623, 0
        %v666 = vsel %vm661, %v624, 0
        %v669 = vsel %vm661, %v625, 0
        %v672 = vsel %vm661, %v626, 0
        %v675 = vsel %vm661, %v627, 0
        %v678 = vsel %vm661, %v628, 0
        %v681 = vsel %vm661, %v629, 0
        %v684 = vsel %vm661, %v630, 0
        %v687 = vsel %vm661, %v631, 0
        %v690 = vsel %vm661, %v632, 0
        %v693 = vsel %vm661, %v633, 0
        %v696 = vsel %vm661, %v634, 0
        %v699 = vsel %vm661, %v635, 0
        %v702 = vsel %vm661, %v636, 0
        %v705 = vsel %vm661, %v637, 0
        %v708 = vsel %vm661, %v638, 0
        %vm710 = vcmask 1040384
        %v712 = vsel %vm710, %v621, 0
        %714 = vmatprep.subr.mxu0 0.0
        %715 = vmatpush1.msra.mxu0 %v619
        %716 = vmatprep.subr.mxu0 0.0
        %717 = vmatpush1.msra.mxu0 %v620
        %718 = vmatprep.subr.mxu0 0.0
        %719 = vmatpush1.msra.mxu0 %v712
        %720 = vmatprep.subr.mxu0 0.0
        %721 = vmatpush1.msra.mxu0 0.0
        %722 = vmatprep.subr.mxu0 0.0
        %723 = vmatpush1.msra.mxu0 0.0
        %724 = vmatprep.subr.mxu0 0.0
        %725 = vmatpush1.msra.mxu0 0.0
        %726 = vmatprep.subr.mxu0 0.0
        %727 = vmatpush1.msra.mxu0 0.0
        %728 = vmatprep.subr.mxu0 0.0
        %729 = vmatpush1.msra.mxu0 0.0
        %730 = vmatprep.subr.mxu0 0.0
        %731 = vmatpush1.msra.mxu0 0.0
        %732 = vmatprep.subr.mxu0 0.0
        %733 = vmatpush1.msra.mxu0 0.0
        %734 = vmatprep.subr.mxu0 0.0
        %735 = vmatpush1.msra.mxu0 0.0
        %736 = vmatprep.subr.mxu0 0.0
        %737 = vmatpush1.msra.mxu0 0.0
        %738 = vmatprep.subr.mxu0 0.0
        %739 = vmatpush1.msra.mxu0 0.0
        %740 = vmatprep.subr.mxu0 0.0
        %741 = vmatpush1.msra.mxu0 0.0
        %742 = vmatprep.subr.mxu0 0.0
        %743 = vmatpush1.msra.mxu0 0.0
        %744 = vmatprep.subr.mxu0 0.0
        %745 = vmatpush1.msra.mxu0 0.0
        %746 = vmatprep.subr.mxu0 0.0
        %747 = vmatpush1.msra.mxu0 0.0
        %748 = vmatprep.subr.mxu0 0.0
        %749 = vmatpush1.msra.mxu0 0.0
        %750 = vmatprep.subr.mxu0 0.0
        %751 = vmatpush1.msra.mxu0 0.0
        %752 = vmatprep.subr.mxu0 0.0
        %753 = vmatpush1.msra.mxu0 0.0
        %754 = vmatprep.subr.mxu0 0.0
        %755 = vmatpush1.msra.mxu0 0.0
        %756 = vmatprep.subr.mxu0 0.0
        %757 = vmatpush1.msra.mxu0 0.0
        %758 = vmatprep.subr.mxu0 0.0
        %759 = vmatpush1.msra.mxu0 0.0
        %760 = vmatprep.subr.mxu0 0.0
        %761 = vmatpush1.msra.mxu0 0.0
        %762 = vmatprep.subr.mxu0 0.0
        %763 = vmatpush1.msra.mxu0 0.0
        %764 = vmatprep.subr.mxu0 0.0
        %765 = vmatpush1.msra.mxu0 0.0
        %766 = vmatprep.subr.mxu0 0.0
        %767 = vmatpush1.msra.mxu0 0.0
        %768 = vmatprep.subr.mxu0 0.0
        %769 = vmatpush1.msra.mxu0 0.0
        %770 = vmatprep.subr.mxu0 0.0
        %771 = vmatpush1.msra.mxu0 0.0
        %772 = vmatprep.subr.mxu0 0.0
        %773 = vmatpush1.msra.mxu0 0.0
        %774 = vmatprep.subr.mxu0 0.0
        %775 = vmatpush1.msra.mxu0 0.0
        %776 = vmatprep.subr.mxu0 0.0
        %777 = vmatpush1.msra.mxu0 0.0
        %778 = vmatprep.mubr.f32.mxu0 0.0
        %779 = vmatmul.mubr.f32.gmra.mrb[0].mxu0 %v663
        %v780 = vpop.f32.mrb[0].mxu0
        %v781 = vadd.f32 %v659, %v780
        %v782 = vpop.f32.mrb[0].mxu0
        %783 = vmatprep.mubr.f32.mxu0 0.0
        %784 = vmatmul.mubr.f32.gmra.mrb[0].mxu0 %v666
        %v785 = vpop.f32.mrb[0].mxu0
        %v786 = vadd.f32 %v659, %v785
        %v787 = vpop.f32.mrb[0].mxu0
        %788 = vmatprep.mubr.f32.mxu0 0.0
        %789 = vmatmul.mubr.f32.gmra.mrb[0].mxu0 %v669
        %v790 = vpop.f32.mrb[0].mxu0
        %v791 = vadd.f32 %v659, %v790
        %v792 = vpop.f32.mrb[0].mxu0
        %793 = vmatprep.mubr.f32.mxu0 0.0
        %794 = vmatmul.mubr.f32.gmra.mrb[0].mxu0 %v672
        %v795 = vpop.f32.mrb[0].mxu0
        %v796 = vadd.f32 %v659, %v795
        %v797 = vpop.f32.mrb[0].mxu0
        %798 = vmatprep.mubr.f32.mxu0 0.0
        %799 = vmatmul.mubr.f32.gmra.mrb[0].mxu0 %v675
        %v800 = vpop.f32.mrb[0].mxu0
        %v801 = vadd.f32 %v659, %v800
        %v802 = vpop.f32.mrb[0].mxu0
        %803 = vmatprep.mubr.f32.mxu0 0.0
        %804 = vmatmul.mubr.f32.gmra.mrb[0].mxu0 %v678
        %v805 = vpop.f32.mrb[0].mxu0
        %v806 = vadd.f32 %v659, %v805
        %v807 = vpop.f32.mrb[0].mxu0
        %808 = vmatprep.mubr.f32.mxu0 0.0
        %809 = vmatmul.mubr.f32.gmra.mrb[0].mxu0 %v681
        %v810 = vpop.f32.mrb[0].mxu0
        %v811 = vadd.f32 %v659, %v810
        %v812 = vpop.f32.mrb[0].mxu0
        %813 = vmatprep.mubr.f32.mxu0 0.0
        %814 = vmatmul.mubr.f32.gmra.mrb[0].mxu0 %v684
        %v815 = vpop.f32.mrb[0].mxu0
        %v816 = vadd.f32 %v659, %v815
        %v817 = vpop.f32.mrb[0].mxu0
        %818 = vmatprep.mubr.f32.mxu0 0.0
        %819 = vmatmul.mubr.f32.gmra.mrb[0].mxu0 %v687
        %v820 = vpop.f32.mrb[0].mxu0
        %v821 = vadd.f32 %v659, %v820
        %v822 = vpop.f32.mrb[0].mxu0
        %823 = vmatprep.mubr.f32.mxu0 0.0
        %824 = vmatmul.mubr.f32.gmra.mrb[0].mxu0 %v690
        %v825 = vpop.f32.mrb[0].mxu0
        %v826 = vadd.f32 %v659, %v825
        %v827 = vpop.f32.mrb[0].mxu0
        %828 = vmatprep.mubr.f32.mxu0 0.0
        %829 = vmatmul.mubr.f32.gmra.mrb[0].mxu0 %v693
        %v830 = vpop.f32.mrb[0].mxu0
        %v831 = vadd.f32 %v659, %v830
        %v832 = vpop.f32.mrb[0].mxu0
        %833 = vmatprep.mubr.f32.mxu0 0.0
        %834 = vmatmul.mubr.f32.gmra.mrb[0].mxu0 %v696
        %v835 = vpop.f32.mrb[0].mxu0
        %v836 = vadd.f32 %v659, %v835
        %v837 = vpop.f32.mrb[0].mxu0
        %838 = vmatprep.mubr.f32.mxu0 0.0
        %839 = vmatmul.mubr.f32.gmra.mrb[0].mxu0 %v699
        %v840 = vpop.f32.mrb[0].mxu0
        %v841 = vadd.f32 %v659, %v840
        %v842 = vpop.f32.mrb[0].mxu0
        %843 = vmatprep.mubr.f32.mxu0 0.0
        %844 = vmatmul.mubr.f32.gmra.mrb[0].mxu0 %v702
        %v845 = vpop.f32.mrb[0].mxu0
        %v846 = vadd.f32 %v659, %v845
        %v847 = vpop.f32.mrb[0].mxu0
        %848 = vmatprep.mubr.f32.mxu0 0.0
        %849 = vmatmul.mubr.f32.gmra.mrb[0].mxu0 %v705
        %v850 = vpop.f32.mrb[0].mxu0
        %v851 = vadd.f32 %v659, %v850
        %v852 = vpop.f32.mrb[0].mxu0
        %853 = vmatprep.mubr.f32.mxu0 0.0
        %854 = vmatmul.mubr.f32.gmra.mrb[0].mxu0 %v708
        %v855 = vpop.f32.mrb[0].mxu0
        %v856 = vadd.f32 %v659, %v855
        %v857 = vpop.f32.mrb[0].mxu0
        %858 = vdwg.mxu0
        %v859 = vadd.f32 %v781, %v639
        %v860 = vadd.f32 %v786, %v640
        %v861 = vadd.f32 %v791, %v641
        %v862 = vadd.f32 %v796, %v642
        %v863 = vadd.f32 %v801, %v643
        %v864 = vadd.f32 %v806, %v644
        %v865 = vadd.f32 %v811, %v645
        %v866 = vadd.f32 %v816, %v646
        %v867 = vadd.f32 %v821, %v647
        %v868 = vadd.f32 %v826, %v648
        %v869 = vadd.f32 %v831, %v649
        %v870 = vadd.f32 %v836, %v650
        %v871 = vadd.f32 %v841, %v651
        %v872 = vadd.f32 %v846, %v652
        %v873 = vadd.f32 %v851, %v653
        %v874 = vadd.f32 %v856, %v654
        %v876 = vlaneseq
        %v877 = vshrl.u32 %v876, 7
        %v878 = vsub.s32 0, %v877
        %v879 = vrot.slane %v601, %v878
        %v880 = vlaneseq
        %v881 = vshrl.u32 %v880, 7
        %v882 = vsub.s32 1, %v881
        %v883 = vrot.slane %v601, %v882
        %v884 = vlaneseq
        %v885 = vshrl.u32 %v884, 7
        %v886 = vsub.s32 2, %v885
        %v887 = vrot.slane %v601, %v886
        %891 = vmatprep.subr.mxu0 %v554
        %892 = vmatpush1.msra.mxu0 %v553
        %893 = vmatprep.subr.mxu0 %v557
        %894 = vmatpush1.msra.mxu0 %v556
        %895 = vmatprep.subr.mxu0 %v560
        %896 = vmatpush1.msra.mxu0 %v559
        %897 = vmatprep.subr.mxu0 %v563
        %898 = vmatpush1.msra.mxu0 %v562
        %899 = vmatprep.subr.mxu0 %v566
        %900 = vmatpush1.msra.mxu0 %v565
        %901 = vmatprep.subr.mxu0 %v569
        %902 = vmatpush1.msra.mxu0 %v568
        %903 = vmatprep.subr.mxu0 %v572
        %904 = vmatpush1.msra.mxu0 %v571
        %905 = vmatprep.subr.mxu0 %v575
        %906 = vmatpush1.msra.mxu0 %v574
        %907 = vmatprep.subr.mxu0 %v578
        %908 = vmatpush1.msra.mxu0 %v577
        %909 = vmatprep.subr.mxu0 %v581
        %910 = vmatpush1.msra.mxu0 %v580
        %911 = vmatprep.subr.mxu0 %v584
        %912 = vmatpush1.msra.mxu0 %v583
        %913 = vmatprep.subr.mxu0 %v587
        %914 = vmatpush1.msra.mxu0 %v586
        %915 = vmatprep.subr.mxu0 %v590
        %916 = vmatpush1.msra.mxu0 %v589
        %917 = vmatprep.subr.mxu0 %v593
        %918 = vmatpush1.msra.mxu0 %v592
        %919 = vmatprep.subr.mxu0 %v596
        %920 = vmatpush1.msra.mxu0 %v595
        %921 = vmatprep.subr.mxu0 %v599
        %922 = vmatpush1.msra.mxu0 %v598
        %923 = vmatprep.subr.mxu0 0.0
        %924 = vmatpush1.msra.mxu0 0.0
        %925 = vmatprep.subr.mxu0 0.0
        %926 = vmatpush1.msra.mxu0 0.0
        %927 = vmatprep.subr.mxu0 0.0
        %928 = vmatpush1.msra.mxu0 0.0
        %929 = vmatprep.subr.mxu0 0.0
        %930 = vmatpush1.msra.mxu0 0.0
        %931 = vmatprep.subr.mxu0 0.0
        %932 = vmatpush1.msra.mxu0 0.0
        %933 = vmatprep.subr.mxu0 0.0
        %934 = vmatpush1.msra.mxu0 0.0
        %935 = vmatprep.subr.mxu0 0.0
        %936 = vmatpush1.msra.mxu0 0.0
        %937 = vmatprep.subr.mxu0 0.0
        %938 = vmatpush1.msra.mxu0 0.0
        %939 = vmatprep.subr.mxu0 0.0
        %940 = vmatpush1.msra.mxu0 0.0
        %941 = vmatprep.subr.mxu0 0.0
        %942 = vmatpush1.msra.mxu0 0.0
        %943 = vmatprep.subr.mxu0 0.0
        %944 = vmatpush1.msra.mxu0 0.0
        %945 = vmatprep.subr.mxu0 0.0
        %946 = vmatpush1.msra.mxu0 0.0
        %947 = vmatprep.subr.mxu0 0.0
        %948 = vmatpush1.msra.mxu0 0.0
        %949 = vmatprep.subr.mxu0 0.0
        %950 = vmatpush1.msra.mxu0 0.0
        %951 = vmatprep.subr.mxu0 0.0
        %952 = vmatpush1.msra.mxu0 0.0
        %953 = vmatprep.subr.mxu0 0.0
        %954 = vmatpush1.msra.mxu0 0.0
        %955 = vmatprep.mubr.f32.mxu0 0.0
        %956 = vmatmul.mubr.f32.gmra.mrb[0].mxu0 %v859
        %v957 = vpop.f32.mrb[0].mxu0
        %v958 = vadd.f32 %v879, %v957
        %v959 = vpop.f32.mrb[0].mxu0
        %v960 = vadd.f32 %v883, %v959
        %961 = vmatprep.mubr.f32.mxu0 0.0
        %962 = vmatmul.mubr.f32.gmra.mrb[0].mxu0 %v860
        %v963 = vpop.f32.mrb[0].mxu0
        %v964 = vadd.f32 %v879, %v963
        %v965 = vpop.f32.mrb[0].mxu0
        %v966 = vadd.f32 %v883, %v965
        %967 = vmatprep.mubr.f32.mxu0 0.0
        %968 = vmatmul.mubr.f32.gmra.mrb[0].mxu0 %v861
        %v969 = vpop.f32.mrb[0].mxu0
        %v970 = vadd.f32 %v879, %v969
        %v971 = vpop.f32.mrb[0].mxu0
        %v972 = vadd.f32 %v883, %v971
        %973 = vmatprep.mubr.f32.mxu0 0.0
        %974 = vmatmul.mubr.f32.gmra.mrb[0].mxu0 %v862
        %v975 = vpop.f32.mrb[0].mxu0
        %v976 = vadd.f32 %v879, %v975
        %v977 = vpop.f32.mrb[0].mxu0
        %v978 = vadd.f32 %v883, %v977
        %979 = vmatprep.mubr.f32.mxu0 0.0
        %980 = vmatmul.mubr.f32.gmra.mrb[0].mxu0 %v863
        %v981 = vpop.f32.mrb[0].mxu0
        %v982 = vadd.f32 %v879, %v981
        %v983 = vpop.f32.mrb[0].mxu0
        %v984 = vadd.f32 %v883, %v983
        %985 = vmatprep.mubr.f32.mxu0 0.0
        %986 = vmatmul.mubr.f32.gmra.mrb[0].mxu0 %v864
        %v987 = vpop.f32.mrb[0].mxu0
        %v988 = vadd.f32 %v879, %v987
        %v989 = vpop.f32.mrb[0].mxu0
        %v990 = vadd.f32 %v883, %v989
        %991 = vmatprep.mubr.f32.mxu0 0.0
        %992 = vmatmul.mubr.f32.gmra.mrb[0].mxu0 %v865
        %v993 = vpop.f32.mrb[0].mxu0
        %v994 = vadd.f32 %v879, %v993
        %v995 = vpop.f32.mrb[0].mxu0
        %v996 = vadd.f32 %v883, %v995
        %997 = vmatprep.mubr.f32.mxu0 0.0
        %998 = vmatmul.mubr.f32.gmra.mrb[0].mxu0 %v866
        %v999 = vpop.f32.mrb[0].mxu0
        %v1000 = vadd.f32 %v879, %v999
        %v1001 = vpop.f32.mrb[0].mxu0
        %v1002 = vadd.f32 %v883, %v1001
        %1003 = vmatprep.mubr.f32.mxu0 0.0
        %1004 = vmatmul.mubr.f32.gmra.mrb[0].mxu0 %v867
        %v1005 = vpop.f32.mrb[0].mxu0
        %v1006 = vadd.f32 %v879, %v1005
        %v1007 = vpop.f32.mrb[0].mxu0
        %v1008 = vadd.f32 %v883, %v1007
        %1009 = vmatprep.mubr.f32.mxu0 0.0
        %1010 = vmatmul.mubr.f32.gmra.mrb[0].mxu0 %v868
        %v1011 = vpop.f32.mrb[0].mxu0
        %v1012 = vadd.f32 %v879, %v1011
        %v1013 = vpop.f32.mrb[0].mxu0
        %v1014 = vadd.f32 %v883, %v1013
        %1015 = vmatprep.mubr.f32.mxu0 0.0
        %1016 = vmatmul.mubr.f32.gmra.mrb[0].mxu0 %v869
        %v1017 = vpop.f32.mrb[0].mxu0
        %v1018 = vadd.f32 %v879, %v1017
        %v1019 = vpop.f32.mrb[0].mxu0
        %v1020 = vadd.f32 %v883, %v1019
        %1021 = vmatprep.mubr.f32.mxu0 0.0
        %1022 = vmatmul.mubr.f32.gmra.mrb[0].mxu0 %v870
        %v1023 = vpop.f32.mrb[0].mxu0
        %v1024 = vadd.f32 %v879, %v1023
        %v1025 = vpop.f32.mrb[0].mxu0
        %v1026 = vadd.f32 %v883, %v1025
        %1027 = vmatprep.mubr.f32.mxu0 0.0
        %1028 = vmatmul.mubr.f32.gmra.mrb[0].mxu0 %v871
        %v1029 = vpop.f32.mrb[0].mxu0
        %v1030 = vadd.f32 %v879, %v1029
        %v1031 = vpop.f32.mrb[0].mxu0
        %v1032 = vadd.f32 %v883, %v1031
        %1033 = vmatprep.mubr.f32.mxu0 0.0
        %1034 = vmatmul.mubr.f32.gmra.mrb[0].mxu0 %v872
        %v1035 = vpop.f32.mrb[0].mxu0
        %v1036 = vadd.f32 %v879, %v1035
        %v1037 = vpop.f32.mrb[0].mxu0
        %v1038 = vadd.f32 %v883, %v1037
        %1039 = vmatprep.mubr.f32.mxu0 0.0
        %1040 = vmatmul.mubr.f32.gmra.mrb[0].mxu0 %v873
        %v1041 = vpop.f32.mrb[0].mxu0
        %v1042 = vadd.f32 %v879, %v1041
        %v1043 = vpop.f32.mrb[0].mxu0
        %v1044 = vadd.f32 %v883, %v1043
        %1045 = vmatprep.mubr.f32.mxu0 0.0
        %1046 = vmatmul.mubr.f32.gmra.mrb[0].mxu0 %v874
        %v1047 = vpop.f32.mrb[0].mxu0
        %v1048 = vadd.f32 %v879, %v1047
        %v1049 = vpop.f32.mrb[0].mxu0
        %v1050 = vadd.f32 %v883, %v1049
        %1051 = vdwg.mxu0
        %1052 = vmatprep.subr.mxu0 0.0
        %1053 = vmatpush1.msra.mxu0 %v555
        %1054 = vmatprep.subr.mxu0 0.0
        %1055 = vmatpush1.msra.mxu0 %v558
        %1056 = vmatprep.subr.mxu0 0.0
        %1057 = vmatpush1.msra.mxu0 %v561
        %1058 = vmatprep.subr.mxu0 0.0
        %1059 = vmatpush1.msra.mxu0 %v564
        %1060 = vmatprep.subr.mxu0 0.0
        %1061 = vmatpush1.msra.mxu0 %v567
        %1062 = vmatprep.subr.mxu0 0.0
        %1063 = vmatpush1.msra.mxu0 %v570
        %1064 = vmatprep.subr.mxu0 0.0
        %1065 = vmatpush1.msra.mxu0 %v573
        %1066 = vmatprep.subr.mxu0 0.0
        %1067 = vmatpush1.msra.mxu0 %v576
        %1068 = vmatprep.subr.mxu0 0.0
        %1069 = vmatpush1.msra.mxu0 %v579
        %1070 = vmatprep.subr.mxu0 0.0
        %1071 = vmatpush1.msra.mxu0 %v582
        %1072 = vmatprep.subr.mxu0 0.0
        %1073 = vmatpush1.msra.mxu0 %v585
        %1074 = vmatprep.subr.mxu0 0.0
        %1075 = vmatpush1.msra.mxu0 %v588
        %1076 = vmatprep.subr.mxu0 0.0
        %1077 = vmatpush1.msra.mxu0 %v591
        %1078 = vmatprep.subr.mxu0 0.0
        %1079 = vmatpush1.msra.mxu0 %v594
        %1080 = vmatprep.subr.mxu0 0.0
        %1081 = vmatpush1.msra.mxu0 %v597
        %1082 = vmatprep.subr.mxu0 0.0
        %1083 = vmatpush1.msra.mxu0 %v600
        %1084 = vmatprep.subr.mxu0 0.0
        %1085 = vmatpush1.msra.mxu0 0.0
        %1086 = vmatprep.subr.mxu0 0.0
        %1087 = vmatpush1.msra.mxu0 0.0
        %1088 = vmatprep.subr.mxu0 0.0
        %1089 = vmatpush1.msra.mxu0 0.0
        %1090 = vmatprep.subr.mxu0 0.0
        %1091 = vmatpush1.msra.mxu0 0.0
        %1092 = vmatprep.subr.mxu0 0.0
        %1093 = vmatpush1.msra.mxu0 0.0
        %1094 = vmatprep.subr.mxu0 0.0
        %1095 = vmatpush1.msra.mxu0 0.0
        %1096 = vmatprep.subr.mxu0 0.0
        %1097 = vmatpush1.msra.mxu0 0.0
        %1098 = vmatprep.subr.mxu0 0.0
        %1099 = vmatpush1.msra.mxu0 0.0
        %1100 = vmatprep.subr.mxu0 0.0
        %1101 = vmatpush1.msra.mxu0 0.0
        %1102 = vmatprep.subr.mxu0 0.0
        %1103 = vmatpush1.msra.mxu0 0.0
        %1104 = vmatprep.subr.mxu0 0.0
        %1105 = vmatpush1.msra.mxu0 0.0
        %1106 = vmatprep.subr.mxu0 0.0
        %1107 = vmatpush1.msra.mxu0 0.0
        %1108 = vmatprep.subr.mxu0 0.0
        %1109 = vmatpush1.msra.mxu0 0.0
        %1110 = vmatprep.subr.mxu0 0.0
        %1111 = vmatpush1.msra.mxu0 0.0
        %1112 = vmatprep.subr.mxu0 0.0
        %1113 = vmatpush1.msra.mxu0 0.0
        %1114 = vmatprep.subr.mxu0 0.0
        %1115 = vmatpush1.msra.mxu0 0.0
        %1116 = vmatprep.mubr.f32.mxu0 0.0
        %1117 = vmatmul.mubr.f32.gmra.mrb[0].mxu0 %v859
        %v1118 = vpop.f32.mrb[0].mxu0
        %v1119 = vadd.f32 %v887, %v1118
        %v1120 = vpop.f32.mrb[0].mxu0
        %1121 = vmatprep.mubr.f32.mxu0 0.0
        %1122 = vmatmul.mubr.f32.gmra.mrb[0].mxu0 %v860
        %v1123 = vpop.f32.mrb[0].mxu0
        %v1124 = vadd.f32 %v887, %v1123
        %v1125 = vpop.f32.mrb[0].mxu0
        %1126 = vmatprep.mubr.f32.mxu0 0.0
        %1127 = vmatmul.mubr.f32.gmra.mrb[0].mxu0 %v861
        %v1128 = vpop.f32.mrb[0].mxu0
        %v1129 = vadd.f32 %v887, %v1128
        %v1130 = vpop.f32.mrb[0].mxu0
        %1131 = vmatprep.mubr.f32.mxu0 0.0
        %1132 = vmatmul.mubr.f32.gmra.mrb[0].mxu0 %v862
        %v1133 = vpop.f32.mrb[0].mxu0
        %v1134 = vadd.f32 %v887, %v1133
        %v1135 = vpop.f32.mrb[0].mxu0
        %1136 = vmatprep.mubr.f32.mxu0 0.0
        %1137 = vmatmul.mubr.f32.gmra.mrb[0].mxu0 %v863
        %v1138 = vpop.f32.mrb[0].mxu0
        %v1139 = vadd.f32 %v887, %v1138
        %v1140 = vpop.f32.mrb[0].mxu0
        %1141 = vmatprep.mubr.f32.mxu0 0.0
        %1142 = vmatmul.mubr.f32.gmra.mrb[0].mxu0 %v864
        %v1143 = vpop.f32.mrb[0].mxu0
        %v1144 = vadd.f32 %v887, %v1143
        %v1145 = vpop.f32.mrb[0].mxu0
        %1146 = vmatprep.mubr.f32.mxu0 0.0
        %1147 = vmatmul.mubr.f32.gmra.mrb[0].mxu0 %v865
        %v1148 = vpop.f32.mrb[0].mxu0
        %v1149 = vadd.f32 %v887, %v1148
        %v1150 = vpop.f32.mrb[0].mxu0
        %1151 = vmatprep.mubr.f32.mxu0 0.0
        %1152 = vmatmul.mubr.f32.gmra.mrb[0].mxu0 %v866
        %v1153 = vpop.f32.mrb[0].mxu0
        %v1154 = vadd.f32 %v887, %v1153
        %v1155 = vpop.f32.mrb[0].mxu0
        %1156 = vmatprep.mubr.f32.mxu0 0.0
        %1157 = vmatmul.mubr.f32.gmra.mrb[0].mxu0 %v867
        %v1158 = vpop.f32.mrb[0].mxu0
        %v1159 = vadd.f32 %v887, %v1158
        %v1160 = vpop.f32.mrb[0].mxu0
        %1161 = vmatprep.mubr.f32.mxu0 0.0
        %1162 = vmatmul.mubr.f32.gmra.mrb[0].mxu0 %v868
        %v1163 = vpop.f32.mrb[0].mxu0
        %v1164 = vadd.f32 %v887, %v1163
        %v1165 = vpop.f32.mrb[0].mxu0
        %1166 = vmatprep.mubr.f32.mxu0 0.0
        %1167 = vmatmul.mubr.f32.gmra.mrb[0].mxu0 %v869
        %v1168 = vpop.f32.mrb[0].mxu0
        %v1169 = vadd.f32 %v887, %v1168
        %v1170 = vpop.f32.mrb[0].mxu0
        %1171 = vmatprep.mubr.f32.mxu0 0.0
        %1172 = vmatmul.mubr.f32.gmra.mrb[0].mxu0 %v870
        %v1173 = vpop.f32.mrb[0].mxu0
        %v1174 = vadd.f32 %v887, %v1173
        %v1175 = vpop.f32.mrb[0].mxu0
        %1176 = vmatprep.mubr.f32.mxu0 0.0
        %1177 = vmatmul.mubr.f32.gmra.mrb[0].mxu0 %v871
        %v1178 = vpop.f32.mrb[0].mxu0
        %v1179 = vadd.f32 %v887, %v1178
        %v1180 = vpop.f32.mrb[0].mxu0
        %1181 = vmatprep.mubr.f32.mxu0 0.0
        %1182 = vmatmul.mubr.f32.gmra.mrb[0].mxu0 %v872
        %v1183 = vpop.f32.mrb[0].mxu0
        %v1184 = vadd.f32 %v887, %v1183
        %v1185 = vpop.f32.mrb[0].mxu0
        %1186 = vmatprep.mubr.f32.mxu0 0.0
        %1187 = vmatmul.mubr.f32.gmra.mrb[0].mxu0 %v873
        %v1188 = vpop.f32.mrb[0].mxu0
        %v1189 = vadd.f32 %v887, %v1188
        %v1190 = vpop.f32.mrb[0].mxu0
        %1191 = vmatprep.mubr.f32.mxu0 0.0
        %1192 = vmatmul.mubr.f32.gmra.mrb[0].mxu0 %v874
        %v1193 = vpop.f32.mrb[0].mxu0
        %v1194 = vadd.f32 %v887, %v1193
        %v1195 = vpop.f32.mrb[0].mxu0
        %1196 = vdwg.mxu0
        %1197 = vmatprep.subr.mxu0 0.0
        %1198 = vmatpush1.xpose.msra.mxu0 %v960
        %1199 = vmatprep.subr.mxu0 0.0
        %1200 = vmatpush1.xpose.msra.mxu0 0.0
        %1201 = vmatprep.subr.mxu0 0.0
        %1202 = vmatpush1.xpose.msra.mxu0 0.0
        %1203 = vmatprep.subr.mxu0 0.0
        %1204 = vmatpush1.xpose.msra.mxu0 0.0
        %1205 = vmatprep.subr.mxu0 0.0
        %1206 = vmatpush1.xpose.msra.mxu0 0.0
        %1207 = vmatprep.subr.mxu0 0.0
        %1208 = vmatpush1.xpose.msra.mxu0 0.0
        %1209 = vmatprep.subr.mxu0 0.0
        %1210 = vmatpush1.xpose.msra.mxu0 0.0
        %1211 = vmatprep.subr.mxu0 0.0
        %1212 = vmatpush1.xpose.msra.mxu0 0.0
        %1213 = vmatprep.subr.mxu0 0.0
        %1214 = vmatpush1.xpose.msra.mxu0 0.0
        %1215 = vmatprep.subr.mxu0 0.0
        %1216 = vmatpush1.xpose.msra.mxu0 0.0
        %1217 = vmatprep.subr.mxu0 0.0
        %1218 = vmatpush1.xpose.msra.mxu0 0.0
        %1219 = vmatprep.subr.mxu0 0.0
        %1220 = vmatpush1.xpose.msra.mxu0 0.0
        %1221 = vmatprep.subr.mxu0 0.0
        %1222 = vmatpush1.xpose.msra.mxu0 0.0
        %1223 = vmatprep.subr.mxu0 0.0
        %1224 = vmatpush1.xpose.msra.mxu0 0.0
        %1225 = vmatprep.subr.mxu0 0.0
        %1226 = vmatpush1.xpose.msra.mxu0 0.0
        %1227 = vmatprep.subr.mxu0 0.0
        %1228 = vmatpush1.xpose.msra.mxu0 0.0
        %1229 = vmatprep.subr.mxu0 0.0
        %1230 = vmatpush1.xpose.msra.mxu0 0.0
        %1231 = vmatprep.subr.mxu0 0.0
        %1232 = vmatpush1.xpose.msra.mxu0 0.0
        %1233 = vmatprep.subr.mxu0 0.0
        %1234 = vmatpush1.xpose.msra.mxu0 0.0
        %1235 = vmatprep.subr.mxu0 0.0
        %1236 = vmatpush1.xpose.msra.mxu0 0.0
        %1237 = vmatprep.subr.mxu0 0.0
        %1238 = vmatpush1.xpose.msra.mxu0 0.0
        %1239 = vmatprep.subr.mxu0 0.0
        %1240 = vmatpush1.xpose.msra.mxu0 0.0
        %1241 = vmatprep.subr.mxu0 0.0
        %1242 = vmatpush1.xpose.msra.mxu0 0.0
        %1243 = vmatprep.subr.mxu0 0.0
        %1244 = vmatpush1.xpose.msra.mxu0 0.0
        %1245 = vmatprep.subr.mxu0 0.0
        %1246 = vmatpush1.xpose.msra.mxu0 0.0
        %1247 = vmatprep.subr.mxu0 0.0
        %1248 = vmatpush1.xpose.msra.mxu0 0.0
        %1249 = vmatprep.subr.mxu0 0.0
        %1250 = vmatpush1.xpose.msra.mxu0 0.0
        %1251 = vmatprep.subr.mxu0 0.0
        %1252 = vmatpush1.xpose.msra.mxu0 0.0
        %1253 = vmatprep.subr.mxu0 0.0
        %1254 = vmatpush1.xpose.msra.mxu0 0.0
        %1255 = vmatprep.subr.mxu0 0.0
        %1256 = vmatpush1.xpose.msra.mxu0 0.0
        %1257 = vmatprep.subr.mxu0 0.0
        %1258 = vmatpush1.xpose.msra.mxu0 0.0
        %1259 = vmatprep.subr.mxu0 0.0
        %1260 = vmatpush1.xpose.msra.mxu0 0.0
        %1261 = vmatprep.mubr.f32.mxu0 0.0
        %1262 = vmatmul.mubr.f32.gmra.mrb[0].mxu0 %v958
        %v1263 = vpop.f32.mrb[0].mxu0
        %v1264 = vadd.f32 0.0, %v1263
        %v1265 = vpop.f32.mrb[0].mxu0
        %1266 = vdwg.mxu0
        %1267 = vmatprep.subr.mxu0 0.0
        %1268 = vmatpush1.xpose.msra.mxu0 %v966
        %1269 = vmatprep.subr.mxu0 0.0
        %1270 = vmatpush1.xpose.msra.mxu0 0.0
        %1271 = vmatprep.subr.mxu0 0.0
        %1272 = vmatpush1.xpose.msra.mxu0 0.0
        %1273 = vmatprep.subr.mxu0 0.0
        %1274 = vmatpush1.xpose.msra.mxu0 0.0
        %1275 = vmatprep.subr.mxu0 0.0
        %1276 = vmatpush1.xpose.msra.mxu0 0.0
        %1277 = vmatprep.subr.mxu0 0.0
        %1278 = vmatpush1.xpose.msra.mxu0 0.0
        %1279 = vmatprep.subr.mxu0 0.0
        %1280 = vmatpush1.xpose.msra.mxu0 0.0
        %1281 = vmatprep.subr.mxu0 0.0
        %1282 = vmatpush1.xpose.msra.mxu0 0.0
        %1283 = vmatprep.subr.mxu0 0.0
        %1284 = vmatpush1.xpose.msra.mxu0 0.0
        %1285 = vmatprep.subr.mxu0 0.0
        %1286 = vmatpush1.xpose.msra.mxu0 0.0
        %1287 = vmatprep.subr.mxu0 0.0
        %1288 = vmatpush1.xpose.msra.mxu0 0.0
        %1289 = vmatprep.subr.mxu0 0.0
        %1290 = vmatpush1.xpose.msra.mxu0 0.0
        %1291 = vmatprep.subr.mxu0 0.0
        %1292 = vmatpush1.xpose.msra.mxu0 0.0
        %1293 = vmatprep.subr.mxu0 0.0
        %1294 = vmatpush1.xpose.msra.mxu0 0.0
        %1295 = vmatprep.subr.mxu0 0.0
        %1296 = vmatpush1.xpose.msra.mxu0 0.0
        %1297 = vmatprep.subr.mxu0 0.0
        %1298 = vmatpush1.xpose.msra.mxu0 0.0
        %1299 = vmatprep.subr.mxu0 0.0
        %1300 = vmatpush1.xpose.msra.mxu0 0.0
        %1301 = vmatprep.subr.mxu0 0.0
        %1302 = vmatpush1.xpose.msra.mxu0 0.0
        %1303 = vmatprep.subr.mxu0 0.0
        %1304 = vmatpush1.xpose.msra.mxu0 0.0
        %1305 = vmatprep.subr.mxu0 0.0
        %1306 = vmatpush1.xpose.msra.mxu0 0.0
        %1307 = vmatprep.subr.mxu0 0.0
        %1308 = vmatpush1.xpose.msra.mxu0 0.0
        %1309 = vmatprep.subr.mxu0 0.0
        %1310 = vmatpush1.xpose.msra.mxu0 0.0
        %1311 = vmatprep.subr.mxu0 0.0
        %1312 = vmatpush1.xpose.msra.mxu0 0.0
        %1313 = vmatprep.subr.mxu0 0.0
        %1314 = vmatpush1.xpose.msra.mxu0 0.0
        %1315 = vmatprep.subr.mxu0 0.0
        %1316 = vmatpush1.xpose.msra.mxu0 0.0
        %1317 = vmatprep.subr.mxu0 0.0
        %1318 = vmatpush1.xpose.msra.mxu0 0.0
        %1319 = vmatprep.subr.mxu0 0.0
        %1320 = vmatpush1.xpose.msra.mxu0 0.0
        %1321 = vmatprep.subr.mxu0 0.0
        %1322 = vmatpush1.xpose.msra.mxu0 0.0
        %1323 = vmatprep.subr.mxu0 0.0
        %1324 = vmatpush1.xpose.msra.mxu0 0.0
        %1325 = vmatprep.subr.mxu0 0.0
        %1326 = vmatpush1.xpose.msra.mxu0 0.0
        %1327 = vmatprep.subr.mxu0 0.0
        %1328 = vmatpush1.xpose.msra.mxu0 0.0
        %1329 = vmatprep.subr.mxu0 0.0
        %1330 = vmatpush1.xpose.msra.mxu0 0.0
        %1331 = vmatprep.mubr.f32.mxu0 0.0
        %1332 = vmatmul.mubr.f32.gmra.mrb[0].mxu0 %v964
        %v1333 = vpop.f32.mrb[0].mxu0
        %v1334 = vadd.f32 0.0, %v1333
        %v1335 = vpop.f32.mrb[0].mxu0
        %1336 = vdwg.mxu0
        %1337 = vmatprep.subr.mxu0 0.0
        %1338 = vmatpush1.xpose.msra.mxu0 %v972
        %1339 = vmatprep.subr.mxu0 0.0
        %1340 = vmatpush1.xpose.msra.mxu0 0.0
        %1341 = vmatprep.subr.mxu0 0.0
        %1342 = vmatpush1.xpose.msra.mxu0 0.0
        %1343 = vmatprep.subr.mxu0 0.0
        %1344 = vmatpush1.xpose.msra.mxu0 0.0
        %1345 = vmatprep.subr.mxu0 0.0
        %1346 = vmatpush1.xpose.msra.mxu0 0.0
        %1347 = vmatprep.subr.mxu0 0.0
        %1348 = vmatpush1.xpose.msra.mxu0 0.0
        %1349 = vmatprep.subr.mxu0 0.0
        %1350 = vmatpush1.xpose.msra.mxu0 0.0
        %1351 = vmatprep.subr.mxu0 0.0
        %1352 = vmatpush1.xpose.msra.mxu0 0.0
        %1353 = vmatprep.subr.mxu0 0.0
        %1354 = vmatpush1.xpose.msra.mxu0 0.0
        %1355 = vmatprep.subr.mxu0 0.0
        %1356 = vmatpush1.xpose.msra.mxu0 0.0
        %1357 = vmatprep.subr.mxu0 0.0
        %1358 = vmatpush1.xpose.msra.mxu0 0.0
        %1359 = vmatprep.subr.mxu0 0.0
        %1360 = vmatpush1.xpose.msra.mxu0 0.0
        %1361 = vmatprep.subr.mxu0 0.0
        %1362 = vmatpush1.xpose.msra.mxu0 0.0
        %1363 = vmatprep.subr.mxu0 0.0
        %1364 = vmatpush1.xpose.msra.mxu0 0.0
        %1365 = vmatprep.subr.mxu0 0.0
        %1366 = vmatpush1.xpose.msra.mxu0 0.0
        %1367 = vmatprep.subr.mxu0 0.0
        %1368 = vmatpush1.xpose.msra.mxu0 0.0
        %1369 = vmatprep.subr.mxu0 0.0
        %1370 = vmatpush1.xpose.msra.mxu0 0.0
        %1371 = vmatprep.subr.mxu0 0.0
        %1372 = vmatpush1.xpose.msra.mxu0 0.0
        %1373 = vmatprep.subr.mxu0 0.0
        %1374 = vmatpush1.xpose.msra.mxu0 0.0
        %1375 = vmatprep.subr.mxu0 0.0
        %1376 = vmatpush1.xpose.msra.mxu0 0.0
        %1377 = vmatprep.subr.mxu0 0.0
        %1378 = vmatpush1.xpose.msra.mxu0 0.0
        %1379 = vmatprep.subr.mxu0 0.0
        %1380 = vmatpush1.xpose.msra.mxu0 0.0
        %1381 = vmatprep.subr.mxu0 0.0
        %1382 = vmatpush1.xpose.msra.mxu0 0.0
        %1383 = vmatprep.subr.mxu0 0.0
        %1384 = vmatpush1.xpose.msra.mxu0 0.0
        %1385 = vmatprep.subr.mxu0 0.0
        %1386 = vmatpush1.xpose.msra.mxu0 0.0
        %1387 = vmatprep.subr.mxu0 0.0
        %1388 = vmatpush1.xpose.msra.mxu0 0.0
        %1389 = vmatprep.subr.mxu0 0.0
        %1390 = vmatpush1.xpose.msra.mxu0 0.0
        %1391 = vmatprep.subr.mxu0 0.0
        %1392 = vmatpush1.xpose.msra.mxu0 0.0
        %1393 = vmatprep.subr.mxu0 0.0
        %1394 = vmatpush1.xpose.msra.mxu0 0.0
        %1395 = vmatprep.subr.mxu0 0.0
        %1396 = vmatpush1.xpose.msra.mxu0 0.0
        %1397 = vmatprep.subr.mxu0 0.0
        %1398 = vmatpush1.xpose.msra.mxu0 0.0
        %1399 = vmatprep.subr.mxu0 0.0
        %1400 = vmatpush1.xpose.msra.mxu0 0.0
        %1401 = vmatprep.mubr.f32.mxu0 0.0
        %1402 = vmatmul.mubr.f32.gmra.mrb[0].mxu0 %v970
        %v1403 = vpop.f32.mrb[0].mxu0
        %v1404 = vadd.f32 0.0, %v1403
        %v1405 = vpop.f32.mrb[0].mxu0
        %1406 = vdwg.mxu0
        %1407 = vmatprep.subr.mxu0 0.0
        %1408 = vmatpush1.xpose.msra.mxu0 %v978
        %1409 = vmatprep.subr.mxu0 0.0
        %1410 = vmatpush1.xpose.msra.mxu0 0.0
        %1411 = vmatprep.subr.mxu0 0.0
        %1412 = vmatpush1.xpose.msra.mxu0 0.0
        %1413 = vmatprep.subr.mxu0 0.0
        %1414 = vmatpush1.xpose.msra.mxu0 0.0
        %1415 = vmatprep.subr.mxu0 0.0
        %1416 = vmatpush1.xpose.msra.mxu0 0.0
        %1417 = vmatprep.subr.mxu0 0.0
        %1418 = vmatpush1.xpose.msra.mxu0 0.0
        %1419 = vmatprep.subr.mxu0 0.0
        %1420 = vmatpush1.xpose.msra.mxu0 0.0
        %1421 = vmatprep.subr.mxu0 0.0
        %1422 = vmatpush1.xpose.msra.mxu0 0.0
        %1423 = vmatprep.subr.mxu0 0.0
        %1424 = vmatpush1.xpose.msra.mxu0 0.0
        %1425 = vmatprep.subr.mxu0 0.0
        %1426 = vmatpush1.xpose.msra.mxu0 0.0
        %1427 = vmatprep.subr.mxu0 0.0
        %1428 = vmatpush1.xpose.msra.mxu0 0.0
        %1429 = vmatprep.subr.mxu0 0.0
        %1430 = vmatpush1.xpose.msra.mxu0 0.0
        %1431 = vmatprep.subr.mxu0 0.0
        %1432 = vmatpush1.xpose.msra.mxu0 0.0
        %1433 = vmatprep.subr.mxu0 0.0
        %1434 = vmatpush1.xpose.msra.mxu0 0.0
        %1435 = vmatprep.subr.mxu0 0.0
        %1436 = vmatpush1.xpose.msra.mxu0 0.0
        %1437 = vmatprep.subr.mxu0 0.0
        %1438 = vmatpush1.xpose.msra.mxu0 0.0
        %1439 = vmatprep.subr.mxu0 0.0
        %1440 = vmatpush1.xpose.msra.mxu0 0.0
        %1441 = vmatprep.subr.mxu0 0.0
        %1442 = vmatpush1.xpose.msra.mxu0 0.0
        %1443 = vmatprep.subr.mxu0 0.0
        %1444 = vmatpush1.xpose.msra.mxu0 0.0
        %1445 = vmatprep.subr.mxu0 0.0
        %1446 = vmatpush1.xpose.msra.mxu0 0.0
        %1447 = vmatprep.subr.mxu0 0.0
        %1448 = vmatpush1.xpose.msra.mxu0 0.0
        %1449 = vmatprep.subr.mxu0 0.0
        %1450 = vmatpush1.xpose.msra.mxu0 0.0
        %1451 = vmatprep.subr.mxu0 0.0
        %1452 = vmatpush1.xpose.msra.mxu0 0.0
        %1453 = vmatprep.subr.mxu0 0.0
        %1454 = vmatpush1.xpose.msra.mxu0 0.0
        %1455 = vmatprep.subr.mxu0 0.0
        %1456 = vmatpush1.xpose.msra.mxu0 0.0
        %1457 = vmatprep.subr.mxu0 0.0
        %1458 = vmatpush1.xpose.msra.mxu0 0.0
        %1459 = vmatprep.subr.mxu0 0.0
        %1460 = vmatpush1.xpose.msra.mxu0 0.0
        %1461 = vmatprep.subr.mxu0 0.0
        %1462 = vmatpush1.xpose.msra.mxu0 0.0
        %1463 = vmatprep.subr.mxu0 0.0
        %1464 = vmatpush1.xpose.msra.mxu0 0.0
        %1465 = vmatprep.subr.mxu0 0.0
        %1466 = vmatpush1.xpose.msra.mxu0 0.0
        %1467 = vmatprep.subr.mxu0 0.0
        %1468 = vmatpush1.xpose.msra.mxu0 0.0
        %1469 = vmatprep.subr.mxu0 0.0
        %1470 = vmatpush1.xpose.msra.mxu0 0.0
        %1471 = vmatprep.mubr.f32.mxu0 0.0
        %1472 = vmatmul.mubr.f32.gmra.mrb[0].mxu0 %v976
        %v1473 = vpop.f32.mrb[0].mxu0
        %v1474 = vadd.f32 0.0, %v1473
        %v1475 = vpop.f32.mrb[0].mxu0
        %1476 = vdwg.mxu0
        %1477 = vmatprep.subr.mxu0 0.0
        %1478 = vmatpush1.xpose.msra.mxu0 %v984
        %1479 = vmatprep.subr.mxu0 0.0
        %1480 = vmatpush1.xpose.msra.mxu0 0.0
        %1481 = vmatprep.subr.mxu0 0.0
        %1482 = vmatpush1.xpose.msra.mxu0 0.0
        %1483 = vmatprep.subr.mxu0 0.0
        %1484 = vmatpush1.xpose.msra.mxu0 0.0
        %1485 = vmatprep.subr.mxu0 0.0
        %1486 = vmatpush1.xpose.msra.mxu0 0.0
        %1487 = vmatprep.subr.mxu0 0.0
        %1488 = vmatpush1.xpose.msra.mxu0 0.0
        %1489 = vmatprep.subr.mxu0 0.0
        %1490 = vmatpush1.xpose.msra.mxu0 0.0
        %1491 = vmatprep.subr.mxu0 0.0
        %1492 = vmatpush1.xpose.msra.mxu0 0.0
        %1493 = vmatprep.subr.mxu0 0.0
        %1494 = vmatpush1.xpose.msra.mxu0 0.0
        %1495 = vmatprep.subr.mxu0 0.0
        %1496 = vmatpush1.xpose.msra.mxu0 0.0
        %1497 = vmatprep.subr.mxu0 0.0
        %1498 = vmatpush1.xpose.msra.mxu0 0.0
        %1499 = vmatprep.subr.mxu0 0.0
        %1500 = vmatpush1.xpose.msra.mxu0 0.0
        %1501 = vmatprep.subr.mxu0 0.0
        %1502 = vmatpush1.xpose.msra.mxu0 0.0
        %1503 = vmatprep.subr.mxu0 0.0
        %1504 = vmatpush1.xpose.msra.mxu0 0.0
        %1505 = vmatprep.subr.mxu0 0.0
        %1506 = vmatpush1.xpose.msra.mxu0 0.0
        %1507 = vmatprep.subr.mxu0 0.0
        %1508 = vmatpush1.xpose.msra.mxu0 0.0
        %1509 = vmatprep.subr.mxu0 0.0
        %1510 = vmatpush1.xpose.msra.mxu0 0.0
        %1511 = vmatprep.subr.mxu0 0.0
        %1512 = vmatpush1.xpose.msra.mxu0 0.0
        %1513 = vmatprep.subr.mxu0 0.0
        %1514 = vmatpush1.xpose.msra.mxu0 0.0
        %1515 = vmatprep.subr.mxu0 0.0
        %1516 = vmatpush1.xpose.msra.mxu0 0.0
        %1517 = vmatprep.subr.mxu0 0.0
        %1518 = vmatpush1.xpose.msra.mxu0 0.0
        %1519 = vmatprep.subr.mxu0 0.0
        %1520 = vmatpush1.xpose.msra.mxu0 0.0
        %1521 = vmatprep.subr.mxu0 0.0
        %1522 = vmatpush1.xpose.msra.mxu0 0.0
        %1523 = vmatprep.subr.mxu0 0.0
        %1524 = vmatpush1.xpose.msra.mxu0 0.0
        %1525 = vmatprep.subr.mxu0 0.0
        %1526 = vmatpush1.xpose.msra.mxu0 0.0
        %1527 = vmatprep.subr.mxu0 0.0
        %1528 = vmatpush1.xpose.msra.mxu0 0.0
        %1529 = vmatprep.subr.mxu0 0.0
        %1530 = vmatpush1.xpose.msra.mxu0 0.0
        %1531 = vmatprep.subr.mxu0 0.0
        %1532 = vmatpush1.xpose.msra.mxu0 0.0
        %1533 = vmatprep.subr.mxu0 0.0
        %1534 = vmatpush1.xpose.msra.mxu0 0.0
        %1535 = vmatprep.subr.mxu0 0.0
        %1536 = vmatpush1.xpose.msra.mxu0 0.0
        %1537 = vmatprep.subr.mxu0 0.0
        %1538 = vmatpush1.xpose.msra.mxu0 0.0
        %1539 = vmatprep.subr.mxu0 0.0
        %1540 = vmatpush1.xpose.msra.mxu0 0.0
        %1541 = vmatprep.mubr.f32.mxu0 0.0
        %1542 = vmatmul.mubr.f32.gmra.mrb[0].mxu0 %v982
        %v1543 = vpop.f32.mrb[0].mxu0
        %v1544 = vadd.f32 0.0, %v1543
        %v1545 = vpop.f32.mrb[0].mxu0
        %1546 = vdwg.mxu0
        %1547 = vmatprep.subr.mxu0 0.0
        %1548 = vmatpush1.xpose.msra.mxu0 %v990
        %1549 = vmatprep.subr.mxu0 0.0
        %1550 = vmatpush1.xpose.msra.mxu0 0.0
        %1551 = vmatprep.subr.mxu0 0.0
        %1552 = vmatpush1.xpose.msra.mxu0 0.0
        %1553 = vmatprep.subr.mxu0 0.0
        %1554 = vmatpush1.xpose.msra.mxu0 0.0
        %1555 = vmatprep.subr.mxu0 0.0
        %1556 = vmatpush1.xpose.msra.mxu0 0.0
        %1557 = vmatprep.subr.mxu0 0.0
        %1558 = vmatpush1.xpose.msra.mxu0 0.0
        %1559 = vmatprep.subr.mxu0 0.0
        %1560 = vmatpush1.xpose.msra.mxu0 0.0
        %1561 = vmatprep.subr.mxu0 0.0
        %1562 = vmatpush1.xpose.msra.mxu0 0.0
        %1563 = vmatprep.subr.mxu0 0.0
        %1564 = vmatpush1.xpose.msra.mxu0 0.0
        %1565 = vmatprep.subr.mxu0 0.0
        %1566 = vmatpush1.xpose.msra.mxu0 0.0
        %1567 = vmatprep.subr.mxu0 0.0
        %1568 = vmatpush1.xpose.msra.mxu0 0.0
        %1569 = vmatprep.subr.mxu0 0.0
        %1570 = vmatpush1.xpose.msra.mxu0 0.0
        %1571 = vmatprep.subr.mxu0 0.0
        %1572 = vmatpush1.xpose.msra.mxu0 0.0
        %1573 = vmatprep.subr.mxu0 0.0
        %1574 = vmatpush1.xpose.msra.mxu0 0.0
        %1575 = vmatprep.subr.mxu0 0.0
        %1576 = vmatpush1.xpose.msra.mxu0 0.0
        %1577 = vmatprep.subr.mxu0 0.0
        %1578 = vmatpush1.xpose.msra.mxu0 0.0
        %1579 = vmatprep.subr.mxu0 0.0
        %1580 = vmatpush1.xpose.msra.mxu0 0.0
        %1581 = vmatprep.subr.mxu0 0.0
        %1582 = vmatpush1.xpose.msra.mxu0 0.0
        %1583 = vmatprep.subr.mxu0 0.0
        %1584 = vmatpush1.xpose.msra.mxu0 0.0
        %1585 = vmatprep.subr.mxu0 0.0
        %1586 = vmatpush1.xpose.msra.mxu0 0.0
        %1587 = vmatprep.subr.mxu0 0.0
        %1588 = vmatpush1.xpose.msra.mxu0 0.0
        %1589 = vmatprep.subr.mxu0 0.0
        %1590 = vmatpush1.xpose.msra.mxu0 0.0
        %1591 = vmatprep.subr.mxu0 0.0
        %1592 = vmatpush1.xpose.msra.mxu0 0.0
        %1593 = vmatprep.subr.mxu0 0.0
        %1594 = vmatpush1.xpose.msra.mxu0 0.0
        %1595 = vmatprep.subr.mxu0 0.0
        %1596 = vmatpush1.xpose.msra.mxu0 0.0
        %1597 = vmatprep.subr.mxu0 0.0
        %1598 = vmatpush1.xpose.msra.mxu0 0.0
        %1599 = vmatprep.subr.mxu0 0.0
        %1600 = vmatpush1.xpose.msra.mxu0 0.0
        %1601 = vmatprep.subr.mxu0 0.0
        %1602 = vmatpush1.xpose.msra.mxu0 0.0
        %1603 = vmatprep.subr.mxu0 0.0
        %1604 = vmatpush1.xpose.msra.mxu0 0.0
        %1605 = vmatprep.subr.mxu0 0.0
        %1606 = vmatpush1.xpose.msra.mxu0 0.0
        %1607 = vmatprep.subr.mxu0 0.0
        %1608 = vmatpush1.xpose.msra.mxu0 0.0
        %1609 = vmatprep.subr.mxu0 0.0
        %1610 = vmatpush1.xpose.msra.mxu0 0.0
        %1611 = vmatprep.mubr.f32.mxu0 0.0
        %1612 = vmatmul.mubr.f32.gmra.mrb[0].mxu0 %v988
        %v1613 = vpop.f32.mrb[0].mxu0
        %v1614 = vadd.f32 0.0, %v1613
        %v1615 = vpop.f32.mrb[0].mxu0
        %1616 = vdwg.mxu0
        %1617 = vmatprep.subr.mxu0 0.0
        %1618 = vmatpush1.xpose.msra.mxu0 %v996
        %1619 = vmatprep.subr.mxu0 0.0
        %1620 = vmatpush1.xpose.msra.mxu0 0.0
        %1621 = vmatprep.subr.mxu0 0.0
        %1622 = vmatpush1.xpose.msra.mxu0 0.0
        %1623 = vmatprep.subr.mxu0 0.0
        %1624 = vmatpush1.xpose.msra.mxu0 0.0
        %1625 = vmatprep.subr.mxu0 0.0
        %1626 = vmatpush1.xpose.msra.mxu0 0.0
        %1627 = vmatprep.subr.mxu0 0.0
        %1628 = vmatpush1.xpose.msra.mxu0 0.0
        %1629 = vmatprep.subr.mxu0 0.0
        %1630 = vmatpush1.xpose.msra.mxu0 0.0
        %1631 = vmatprep.subr.mxu0 0.0
        %1632 = vmatpush1.xpose.msra.mxu0 0.0
        %1633 = vmatprep.subr.mxu0 0.0
        %1634 = vmatpush1.xpose.msra.mxu0 0.0
        %1635 = vmatprep.subr.mxu0 0.0
        %1636 = vmatpush1.xpose.msra.mxu0 0.0
        %1637 = vmatprep.subr.mxu0 0.0
        %1638 = vmatpush1.xpose.msra.mxu0 0.0
        %1639 = vmatprep.subr.mxu0 0.0
        %1640 = vmatpush1.xpose.msra.mxu0 0.0
        %1641 = vmatprep.subr.mxu0 0.0
        %1642 = vmatpush1.xpose.msra.mxu0 0.0
        %1643 = vmatprep.subr.mxu0 0.0
        %1644 = vmatpush1.xpose.msra.mxu0 0.0
        %1645 = vmatprep.subr.mxu0 0.0
        %1646 = vmatpush1.xpose.msra.mxu0 0.0
        %1647 = vmatprep.subr.mxu0 0.0
        %1648 = vmatpush1.xpose.msra.mxu0 0.0
        %1649 = vmatprep.subr.mxu0 0.0
        %1650 = vmatpush1.xpose.msra.mxu0 0.0
        %1651 = vmatprep.subr.mxu0 0.0
        %1652 = vmatpush1.xpose.msra.mxu0 0.0
        %1653 = vmatprep.subr.mxu0 0.0
        %1654 = vmatpush1.xpose.msra.mxu0 0.0
        %1655 = vmatprep.subr.mxu0 0.0
        %1656 = vmatpush1.xpose.msra.mxu0 0.0
        %1657 = vmatprep.subr.mxu0 0.0
        %1658 = vmatpush1.xpose.msra.mxu0 0.0
        %1659 = vmatprep.subr.mxu0 0.0
        %1660 = vmatpush1.xpose.msra.mxu0 0.0
        %1661 = vmatprep.subr.mxu0 0.0
        %1662 = vmatpush1.xpose.msra.mxu0 0.0
        %1663 = vmatprep.subr.mxu0 0.0
        %1664 = vmatpush1.xpose.msra.mxu0 0.0
        %1665 = vmatprep.subr.mxu0 0.0
        %1666 = vmatpush1.xpose.msra.mxu0 0.0
        %1667 = vmatprep.subr.mxu0 0.0
        %1668 = vmatpush1.xpose.msra.mxu0 0.0
        %1669 = vmatprep.subr.mxu0 0.0
        %1670 = vmatpush1.xpose.msra.mxu0 0.0
        %1671 = vmatprep.subr.mxu0 0.0
        %1672 = vmatpush1.xpose.msra.mxu0 0.0
        %1673 = vmatprep.subr.mxu0 0.0
        %1674 = vmatpush1.xpose.msra.mxu0 0.0
        %1675 = vmatprep.subr.mxu0 0.0
        %1676 = vmatpush1.xpose.msra.mxu0 0.0
        %1677 = vmatprep.subr.mxu0 0.0
        %1678 = vmatpush1.xpose.msra.mxu0 0.0
        %1679 = vmatprep.subr.mxu0 0.0
        %1680 = vmatpush1.xpose.msra.mxu0 0.0
        %1681 = vmatprep.mubr.f32.mxu0 0.0
        %1682 = vmatmul.mubr.f32.gmra.mrb[0].mxu0 %v994
        %v1683 = vpop.f32.mrb[0].mxu0
        %v1684 = vadd.f32 0.0, %v1683
        %v1685 = vpop.f32.mrb[0].mxu0
        %1686 = vdwg.mxu0
        %1687 = vmatprep.subr.mxu0 0.0
        %1688 = vmatpush1.xpose.msra.mxu0 %v1002
        %1689 = vmatprep.subr.mxu0 0.0
        %1690 = vmatpush1.xpose.msra.mxu0 0.0
        %1691 = vmatprep.subr.mxu0 0.0
        %1692 = vmatpush1.xpose.msra.mxu0 0.0
        %1693 = vmatprep.subr.mxu0 0.0
        %1694 = vmatpush1.xpose.msra.mxu0 0.0
        %1695 = vmatprep.subr.mxu0 0.0
        %1696 = vmatpush1.xpose.msra.mxu0 0.0
        %1697 = vmatprep.subr.mxu0 0.0
        %1698 = vmatpush1.xpose.msra.mxu0 0.0
        %1699 = vmatprep.subr.mxu0 0.0
        %1700 = vmatpush1.xpose.msra.mxu0 0.0
        %1701 = vmatprep.subr.mxu0 0.0
        %1702 = vmatpush1.xpose.msra.mxu0 0.0
        %1703 = vmatprep.subr.mxu0 0.0
        %1704 = vmatpush1.xpose.msra.mxu0 0.0
        %1705 = vmatprep.subr.mxu0 0.0
        %1706 = vmatpush1.xpose.msra.mxu0 0.0
        %1707 = vmatprep.subr.mxu0 0.0
        %1708 = vmatpush1.xpose.msra.mxu0 0.0
        %1709 = vmatprep.subr.mxu0 0.0
        %1710 = vmatpush1.xpose.msra.mxu0 0.0
        %1711 = vmatprep.subr.mxu0 0.0
        %1712 = vmatpush1.xpose.msra.mxu0 0.0
        %1713 = vmatprep.subr.mxu0 0.0
        %1714 = vmatpush1.xpose.msra.mxu0 0.0
        %1715 = vmatprep.subr.mxu0 0.0
        %1716 = vmatpush1.xpose.msra.mxu0 0.0
        %1717 = vmatprep.subr.mxu0 0.0
        %1718 = vmatpush1.xpose.msra.mxu0 0.0
        %1719 = vmatprep.subr.mxu0 0.0
        %1720 = vmatpush1.xpose.msra.mxu0 0.0
        %1721 = vmatprep.subr.mxu0 0.0
        %1722 = vmatpush1.xpose.msra.mxu0 0.0
        %1723 = vmatprep.subr.mxu0 0.0
        %1724 = vmatpush1.xpose.msra.mxu0 0.0
        %1725 = vmatprep.subr.mxu0 0.0
        %1726 = vmatpush1.xpose.msra.mxu0 0.0
        %1727 = vmatprep.subr.mxu0 0.0
        %1728 = vmatpush1.xpose.msra.mxu0 0.0
        %1729 = vmatprep.subr.mxu0 0.0
        %1730 = vmatpush1.xpose.msra.mxu0 0.0
        %1731 = vmatprep.subr.mxu0 0.0
        %1732 = vmatpush1.xpose.msra.mxu0 0.0
        %1733 = vmatprep.subr.mxu0 0.0
        %1734 = vmatpush1.xpose.msra.mxu0 0.0
        %1735 = vmatprep.subr.mxu0 0.0
        %1736 = vmatpush1.xpose.msra.mxu0 0.0
        %1737 = vmatprep.subr.mxu0 0.0
        %1738 = vmatpush1.xpose.msra.mxu0 0.0
        %1739 = vmatprep.subr.mxu0 0.0
        %1740 = vmatpush1.xpose.msra.mxu0 0.0
        %1741 = vmatprep.subr.mxu0 0.0
        %1742 = vmatpush1.xpose.msra.mxu0 0.0
        %1743 = vmatprep.subr.mxu0 0.0
        %1744 = vmatpush1.xpose.msra.mxu0 0.0
        %1745 = vmatprep.subr.mxu0 0.0
        %1746 = vmatpush1.xpose.msra.mxu0 0.0
        %1747 = vmatprep.subr.mxu0 0.0
        %1748 = vmatpush1.xpose.msra.mxu0 0.0
        %1749 = vmatprep.subr.mxu0 0.0
        %1750 = vmatpush1.xpose.msra.mxu0 0.0
        %1751 = vmatprep.mubr.f32.mxu0 0.0
        %1752 = vmatmul.mubr.f32.gmra.mrb[0].mxu0 %v1000
        %v1753 = vpop.f32.mrb[0].mxu0
        %v1754 = vadd.f32 0.0, %v1753
        %v1755 = vpop.f32.mrb[0].mxu0
        %1756 = vdwg.mxu0
        %1757 = vmatprep.subr.mxu0 0.0
        %1758 = vmatpush1.xpose.msra.mxu0 %v1008
        %1759 = vmatprep.subr.mxu0 0.0
        %1760 = vmatpush1.xpose.msra.mxu0 0.0
        %1761 = vmatprep.subr.mxu0 0.0
        %1762 = vmatpush1.xpose.msra.mxu0 0.0
        %1763 = vmatprep.subr.mxu0 0.0
        %1764 = vmatpush1.xpose.msra.mxu0 0.0
        %1765 = vmatprep.subr.mxu0 0.0
        %1766 = vmatpush1.xpose.msra.mxu0 0.0
        %1767 = vmatprep.subr.mxu0 0.0
        %1768 = vmatpush1.xpose.msra.mxu0 0.0
        %1769 = vmatprep.subr.mxu0 0.0
        %1770 = vmatpush1.xpose.msra.mxu0 0.0
        %1771 = vmatprep.subr.mxu0 0.0
        %1772 = vmatpush1.xpose.msra.mxu0 0.0
        %1773 = vmatprep.subr.mxu0 0.0
        %1774 = vmatpush1.xpose.msra.mxu0 0.0
        %1775 = vmatprep.subr.mxu0 0.0
        %1776 = vmatpush1.xpose.msra.mxu0 0.0
        %1777 = vmatprep.subr.mxu0 0.0
        %1778 = vmatpush1.xpose.msra.mxu0 0.0
        %1779 = vmatprep.subr.mxu0 0.0
        %1780 = vmatpush1.xpose.msra.mxu0 0.0
        %1781 = vmatprep.subr.mxu0 0.0
        %1782 = vmatpush1.xpose.msra.mxu0 0.0
        %1783 = vmatprep.subr.mxu0 0.0
        %1784 = vmatpush1.xpose.msra.mxu0 0.0
        %1785 = vmatprep.subr.mxu0 0.0
        %1786 = vmatpush1.xpose.msra.mxu0 0.0
        %1787 = vmatprep.subr.mxu0 0.0
        %1788 = vmatpush1.xpose.msra.mxu0 0.0
        %1789 = vmatprep.subr.mxu0 0.0
        %1790 = vmatpush1.xpose.msra.mxu0 0.0
        %1791 = vmatprep.subr.mxu0 0.0
        %1792 = vmatpush1.xpose.msra.mxu0 0.0
        %1793 = vmatprep.subr.mxu0 0.0
        %1794 = vmatpush1.xpose.msra.mxu0 0.0
        %1795 = vmatprep.subr.mxu0 0.0
        %1796 = vmatpush1.xpose.msra.mxu0 0.0
        %1797 = vmatprep.subr.mxu0 0.0
        %1798 = vmatpush1.xpose.msra.mxu0 0.0
        %1799 = vmatprep.subr.mxu0 0.0
        %1800 = vmatpush1.xpose.msra.mxu0 0.0
        %1801 = vmatprep.subr.mxu0 0.0
        %1802 = vmatpush1.xpose.msra.mxu0 0.0
        %1803 = vmatprep.subr.mxu0 0.0
        %1804 = vmatpush1.xpose.msra.mxu0 0.0
        %1805 = vmatprep.subr.mxu0 0.0
        %1806 = vmatpush1.xpose.msra.mxu0 0.0
        %1807 = vmatprep.subr.mxu0 0.0
        %1808 = vmatpush1.xpose.msra.mxu0 0.0
        %1809 = vmatprep.subr.mxu0 0.0
        %1810 = vmatpush1.xpose.msra.mxu0 0.0
        %1811 = vmatprep.subr.mxu0 0.0
        %1812 = vmatpush1.xpose.msra.mxu0 0.0
        %1813 = vmatprep.subr.mxu0 0.0
        %1814 = vmatpush1.xpose.msra.mxu0 0.0
        %1815 = vmatprep.subr.mxu0 0.0
        %1816 = vmatpush1.xpose.msra.mxu0 0.0
        %1817 = vmatprep.subr.mxu0 0.0
        %1818 = vmatpush1.xpose.msra.mxu0 0.0
        %1819 = vmatprep.subr.mxu0 0.0
        %1820 = vmatpush1.xpose.msra.mxu0 0.0
        %1821 = vmatprep.mubr.f32.mxu0 0.0
        %1822 = vmatmul.mubr.f32.gmra.mrb[0].mxu0 %v1006
        %v1823 = vpop.f32.mrb[0].mxu0
        %v1824 = vadd.f32 0.0, %v1823
        %v1825 = vpop.f32.mrb[0].mxu0
        %1826 = vdwg.mxu0
        %1827 = vmatprep.subr.mxu0 0.0
        %1828 = vmatpush1.xpose.msra.mxu0 %v1014
        %1829 = vmatprep.subr.mxu0 0.0
        %1830 = vmatpush1.xpose.msra.mxu0 0.0
        %1831 = vmatprep.subr.mxu0 0.0
        %1832 = vmatpush1.xpose.msra.mxu0 0.0
        %1833 = vmatprep.subr.mxu0 0.0
        %1834 = vmatpush1.xpose.msra.mxu0 0.0
        %1835 = vmatprep.subr.mxu0 0.0
        %1836 = vmatpush1.xpose.msra.mxu0 0.0
        %1837 = vmatprep.subr.mxu0 0.0
        %1838 = vmatpush1.xpose.msra.mxu0 0.0
        %1839 = vmatprep.subr.mxu0 0.0
        %1840 = vmatpush1.xpose.msra.mxu0 0.0
        %1841 = vmatprep.subr.mxu0 0.0
        %1842 = vmatpush1.xpose.msra.mxu0 0.0
        %1843 = vmatprep.subr.mxu0 0.0
        %1844 = vmatpush1.xpose.msra.mxu0 0.0
        %1845 = vmatprep.subr.mxu0 0.0
        %1846 = vmatpush1.xpose.msra.mxu0 0.0
        %1847 = vmatprep.subr.mxu0 0.0
        %1848 = vmatpush1.xpose.msra.mxu0 0.0
        %1849 = vmatprep.subr.mxu0 0.0
        %1850 = vmatpush1.xpose.msra.mxu0 0.0
        %1851 = vmatprep.subr.mxu0 0.0
        %1852 = vmatpush1.xpose.msra.mxu0 0.0
        %1853 = vmatprep.subr.mxu0 0.0
        %1854 = vmatpush1.xpose.msra.mxu0 0.0
        %1855 = vmatprep.subr.mxu0 0.0
        %1856 = vmatpush1.xpose.msra.mxu0 0.0
        %1857 = vmatprep.subr.mxu0 0.0
        %1858 = vmatpush1.xpose.msra.mxu0 0.0
        %1859 = vmatprep.subr.mxu0 0.0
        %1860 = vmatpush1.xpose.msra.mxu0 0.0
        %1861 = vmatprep.subr.mxu0 0.0
        %1862 = vmatpush1.xpose.msra.mxu0 0.0
        %1863 = vmatprep.subr.mxu0 0.0
        %1864 = vmatpush1.xpose.msra.mxu0 0.0
        %1865 = vmatprep.subr.mxu0 0.0
        %1866 = vmatpush1.xpose.msra.mxu0 0.0
        %1867 = vmatprep.subr.mxu0 0.0
        %1868 = vmatpush1.xpose.msra.mxu0 0.0
        %1869 = vmatprep.subr.mxu0 0.0
        %1870 = vmatpush1.xpose.msra.mxu0 0.0
        %1871 = vmatprep.subr.mxu0 0.0
        %1872 = vmatpush1.xpose.msra.mxu0 0.0
        %1873 = vmatprep.subr.mxu0 0.0
        %1874 = vmatpush1.xpose.msra.mxu0 0.0
        %1875 = vmatprep.subr.mxu0 0.0
        %1876 = vmatpush1.xpose.msra.mxu0 0.0
        %1877 = vmatprep.subr.mxu0 0.0
        %1878 = vmatpush1.xpose.msra.mxu0 0.0
        %1879 = vmatprep.subr.mxu0 0.0
        %1880 = vmatpush1.xpose.msra.mxu0 0.0
        %1881 = vmatprep.subr.mxu0 0.0
        %1882 = vmatpush1.xpose.msra.mxu0 0.0
        %1883 = vmatprep.subr.mxu0 0.0
        %1884 = vmatpush1.xpose.msra.mxu0 0.0
        %1885 = vmatprep.subr.mxu0 0.0
        %1886 = vmatpush1.xpose.msra.mxu0 0.0
        %1887 = vmatprep.subr.mxu0 0.0
        %1888 = vmatpush1.xpose.msra.mxu0 0.0
        %1889 = vmatprep.subr.mxu0 0.0
        %1890 = vmatpush1.xpose.msra.mxu0 0.0
        %1891 = vmatprep.mubr.f32.mxu0 0.0
        %1892 = vmatmul.mubr.f32.gmra.mrb[0].mxu0 %v1012
        %v1893 = vpop.f32.mrb[0].mxu0
        %v1894 = vadd.f32 0.0, %v1893
        %v1895 = vpop.f32.mrb[0].mxu0
        %1896 = vdwg.mxu0
        %1897 = vmatprep.subr.mxu0 0.0
        %1898 = vmatpush1.xpose.msra.mxu0 %v1020
        %1899 = vmatprep.subr.mxu0 0.0
        %1900 = vmatpush1.xpose.msra.mxu0 0.0
        %1901 = vmatprep.subr.mxu0 0.0
        %1902 = vmatpush1.xpose.msra.mxu0 0.0
        %1903 = vmatprep.subr.mxu0 0.0
        %1904 = vmatpush1.xpose.msra.mxu0 0.0
        %1905 = vmatprep.subr.mxu0 0.0
        %1906 = vmatpush1.xpose.msra.mxu0 0.0
        %1907 = vmatprep.subr.mxu0 0.0
        %1908 = vmatpush1.xpose.msra.mxu0 0.0
        %1909 = vmatprep.subr.mxu0 0.0
        %1910 = vmatpush1.xpose.msra.mxu0 0.0
        %1911 = vmatprep.subr.mxu0 0.0
        %1912 = vmatpush1.xpose.msra.mxu0 0.0
        %1913 = vmatprep.subr.mxu0 0.0
        %1914 = vmatpush1.xpose.msra.mxu0 0.0
        %1915 = vmatprep.subr.mxu0 0.0
        %1916 = vmatpush1.xpose.msra.mxu0 0.0
        %1917 = vmatprep.subr.mxu0 0.0
        %1918 = vmatpush1.xpose.msra.mxu0 0.0
        %1919 = vmatprep.subr.mxu0 0.0
        %1920 = vmatpush1.xpose.msra.mxu0 0.0
        %1921 = vmatprep.subr.mxu0 0.0
        %1922 = vmatpush1.xpose.msra.mxu0 0.0
        %1923 = vmatprep.subr.mxu0 0.0
        %1924 = vmatpush1.xpose.msra.mxu0 0.0
        %1925 = vmatprep.subr.mxu0 0.0
        %1926 = vmatpush1.xpose.msra.mxu0 0.0
        %1927 = vmatprep.subr.mxu0 0.0
        %1928 = vmatpush1.xpose.msra.mxu0 0.0
        %1929 = vmatprep.subr.mxu0 0.0
        %1930 = vmatpush1.xpose.msra.mxu0 0.0
        %1931 = vmatprep.subr.mxu0 0.0
        %1932 = vmatpush1.xpose.msra.mxu0 0.0
        %1933 = vmatprep.subr.mxu0 0.0
        %1934 = vmatpush1.xpose.msra.mxu0 0.0
        %1935 = vmatprep.subr.mxu0 0.0
        %1936 = vmatpush1.xpose.msra.mxu0 0.0
        %1937 = vmatprep.subr.mxu0 0.0
        %1938 = vmatpush1.xpose.msra.mxu0 0.0
        %1939 = vmatprep.subr.mxu0 0.0
        %1940 = vmatpush1.xpose.msra.mxu0 0.0
        %1941 = vmatprep.subr.mxu0 0.0
        %1942 = vmatpush1.xpose.msra.mxu0 0.0
        %1943 = vmatprep.subr.mxu0 0.0
        %1944 = vmatpush1.xpose.msra.mxu0 0.0
        %1945 = vmatprep.subr.mxu0 0.0
        %1946 = vmatpush1.xpose.msra.mxu0 0.0
        %1947 = vmatprep.subr.mxu0 0.0
        %1948 = vmatpush1.xpose.msra.mxu0 0.0
        %1949 = vmatprep.subr.mxu0 0.0
        %1950 = vmatpush1.xpose.msra.mxu0 0.0
        %1951 = vmatprep.subr.mxu0 0.0
        %1952 = vmatpush1.xpose.msra.mxu0 0.0
        %1953 = vmatprep.subr.mxu0 0.0
        %1954 = vmatpush1.xpose.msra.mxu0 0.0
        %1955 = vmatprep.subr.mxu0 0.0
        %1956 = vmatpush1.xpose.msra.mxu0 0.0
        %1957 = vmatprep.subr.mxu0 0.0
        %1958 = vmatpush1.xpose.msra.mxu0 0.0
        %1959 = vmatprep.subr.mxu0 0.0
        %1960 = vmatpush1.xpose.msra.mxu0 0.0
        %1961 = vmatprep.mubr.f32.mxu0 0.0
        %1962 = vmatmul.mubr.f32.gmra.mrb[0].mxu0 %v1018
        %v1963 = vpop.f32.mrb[0].mxu0
        %v1964 = vadd.f32 0.0, %v1963
        %v1965 = vpop.f32.mrb[0].mxu0
        %1966 = vdwg.mxu0
        %1967 = vmatprep.subr.mxu0 0.0
        %1968 = vmatpush1.xpose.msra.mxu0 %v1026
        %1969 = vmatprep.subr.mxu0 0.0
        %1970 = vmatpush1.xpose.msra.mxu0 0.0
        %1971 = vmatprep.subr.mxu0 0.0
        %1972 = vmatpush1.xpose.msra.mxu0 0.0
        %1973 = vmatprep.subr.mxu0 0.0
        %1974 = vmatpush1.xpose.msra.mxu0 0.0
        %1975 = vmatprep.subr.mxu0 0.0
        %1976 = vmatpush1.xpose.msra.mxu0 0.0
        %1977 = vmatprep.subr.mxu0 0.0
        %1978 = vmatpush1.xpose.msra.mxu0 0.0
        %1979 = vmatprep.subr.mxu0 0.0
        %1980 = vmatpush1.xpose.msra.mxu0 0.0
        %1981 = vmatprep.subr.mxu0 0.0
        %1982 = vmatpush1.xpose.msra.mxu0 0.0
        %1983 = vmatprep.subr.mxu0 0.0
        %1984 = vmatpush1.xpose.msra.mxu0 0.0
        %1985 = vmatprep.subr.mxu0 0.0
        %1986 = vmatpush1.xpose.msra.mxu0 0.0
        %1987 = vmatprep.subr.mxu0 0.0
        %1988 = vmatpush1.xpose.msra.mxu0 0.0
        %1989 = vmatprep.subr.mxu0 0.0
        %1990 = vmatpush1.xpose.msra.mxu0 0.0
        %1991 = vmatprep.subr.mxu0 0.0
        %1992 = vmatpush1.xpose.msra.mxu0 0.0
        %1993 = vmatprep.subr.mxu0 0.0
        %1994 = vmatpush1.xpose.msra.mxu0 0.0
        %1995 = vmatprep.subr.mxu0 0.0
        %1996 = vmatpush1.xpose.msra.mxu0 0.0
        %1997 = vmatprep.subr.mxu0 0.0
        %1998 = vmatpush1.xpose.msra.mxu0 0.0
        %1999 = vmatprep.subr.mxu0 0.0
        %2000 = vmatpush1.xpose.msra.mxu0 0.0
        %2001 = vmatprep.subr.mxu0 0.0
        %2002 = vmatpush1.xpose.msra.mxu0 0.0
        %2003 = vmatprep.subr.mxu0 0.0
        %2004 = vmatpush1.xpose.msra.mxu0 0.0
        %2005 = vmatprep.subr.mxu0 0.0
        %2006 = vmatpush1.xpose.msra.mxu0 0.0
        %2007 = vmatprep.subr.mxu0 0.0
        %2008 = vmatpush1.xpose.msra.mxu0 0.0
        %2009 = vmatprep.subr.mxu0 0.0
        %2010 = vmatpush1.xpose.msra.mxu0 0.0
        %2011 = vmatprep.subr.mxu0 0.0
        %2012 = vmatpush1.xpose.msra.mxu0 0.0
        %2013 = vmatprep.subr.mxu0 0.0
        %2014 = vmatpush1.xpose.msra.mxu0 0.0
        %2015 = vmatprep.subr.mxu0 0.0
        %2016 = vmatpush1.xpose.msra.mxu0 0.0
        %2017 = vmatprep.subr.mxu0 0.0
        %2018 = vmatpush1.xpose.msra.mxu0 0.0
        %2019 = vmatprep.subr.mxu0 0.0
        %2020 = vmatpush1.xpose.msra.mxu0 0.0
        %2021 = vmatprep.subr.mxu0 0.0
        %2022 = vmatpush1.xpose.msra.mxu0 0.0
        %2023 = vmatprep.subr.mxu0 0.0
        %2024 = vmatpush1.xpose.msra.mxu0 0.0
        %2025 = vmatprep.subr.mxu0 0.0
        %2026 = vmatpush1.xpose.msra.mxu0 0.0
        %2027 = vmatprep.subr.mxu0 0.0
        %2028 = vmatpush1.xpose.msra.mxu0 0.0
        %2029 = vmatprep.subr.mxu0 0.0
        %2030 = vmatpush1.xpose.msra.mxu0 0.0
        %2031 = vmatprep.mubr.f32.mxu0 0.0
        %2032 = vmatmul.mubr.f32.gmra.mrb[0].mxu0 %v1024
        %v2033 = vpop.f32.mrb[0].mxu0
        %v2034 = vadd.f32 0.0, %v2033
        %v2035 = vpop.f32.mrb[0].mxu0
        %2036 = vdwg.mxu0
        %2037 = vmatprep.subr.mxu0 0.0
        %2038 = vmatpush1.xpose.msra.mxu0 %v1032
        %2039 = vmatprep.subr.mxu0 0.0
        %2040 = vmatpush1.xpose.msra.mxu0 0.0
        %2041 = vmatprep.subr.mxu0 0.0
        %2042 = vmatpush1.xpose.msra.mxu0 0.0
        %2043 = vmatprep.subr.mxu0 0.0
        %2044 = vmatpush1.xpose.msra.mxu0 0.0
        %2045 = vmatprep.subr.mxu0 0.0
        %2046 = vmatpush1.xpose.msra.mxu0 0.0
        %2047 = vmatprep.subr.mxu0 0.0
        %2048 = vmatpush1.xpose.msra.mxu0 0.0
        %2049 = vmatprep.subr.mxu0 0.0
        %2050 = vmatpush1.xpose.msra.mxu0 0.0
        %2051 = vmatprep.subr.mxu0 0.0
        %2052 = vmatpush1.xpose.msra.mxu0 0.0
        %2053 = vmatprep.subr.mxu0 0.0
        %2054 = vmatpush1.xpose.msra.mxu0 0.0
        %2055 = vmatprep.subr.mxu0 0.0
        %2056 = vmatpush1.xpose.msra.mxu0 0.0
        %2057 = vmatprep.subr.mxu0 0.0
        %2058 = vmatpush1.xpose.msra.mxu0 0.0
        %2059 = vmatprep.subr.mxu0 0.0
        %2060 = vmatpush1.xpose.msra.mxu0 0.0
        %2061 = vmatprep.subr.mxu0 0.0
        %2062 = vmatpush1.xpose.msra.mxu0 0.0
        %2063 = vmatprep.subr.mxu0 0.0
        %2064 = vmatpush1.xpose.msra.mxu0 0.0
        %2065 = vmatprep.subr.mxu0 0.0
        %2066 = vmatpush1.xpose.msra.mxu0 0.0
        %2067 = vmatprep.subr.mxu0 0.0
        %2068 = vmatpush1.xpose.msra.mxu0 0.0
        %2069 = vmatprep.subr.mxu0 0.0
        %2070 = vmatpush1.xpose.msra.mxu0 0.0
        %2071 = vmatprep.subr.mxu0 0.0
        %2072 = vmatpush1.xpose.msra.mxu0 0.0
        %2073 = vmatprep.subr.mxu0 0.0
        %2074 = vmatpush1.xpose.msra.mxu0 0.0
        %2075 = vmatprep.subr.mxu0 0.0
        %2076 = vmatpush1.xpose.msra.mxu0 0.0
        %2077 = vmatprep.subr.mxu0 0.0
        %2078 = vmatpush1.xpose.msra.mxu0 0.0
        %2079 = vmatprep.subr.mxu0 0.0
        %2080 = vmatpush1.xpose.msra.mxu0 0.0
        %2081 = vmatprep.subr.mxu0 0.0
        %2082 = vmatpush1.xpose.msra.mxu0 0.0
        %2083 = vmatprep.subr.mxu0 0.0
        %2084 = vmatpush1.xpose.msra.mxu0 0.0
        %2085 = vmatprep.subr.mxu0 0.0
        %2086 = vmatpush1.xpose.msra.mxu0 0.0
        %2087 = vmatprep.subr.mxu0 0.0
        %2088 = vmatpush1.xpose.msra.mxu0 0.0
        %2089 = vmatprep.subr.mxu0 0.0
        %2090 = vmatpush1.xpose.msra.mxu0 0.0
        %2091 = vmatprep.subr.mxu0 0.0
        %2092 = vmatpush1.xpose.msra.mxu0 0.0
        %2093 = vmatprep.subr.mxu0 0.0
        %2094 = vmatpush1.xpose.msra.mxu0 0.0
        %2095 = vmatprep.subr.mxu0 0.0
        %2096 = vmatpush1.xpose.msra.mxu0 0.0
        %2097 = vmatprep.subr.mxu0 0.0
        %2098 = vmatpush1.xpose.msra.mxu0 0.0
        %2099 = vmatprep.subr.mxu0 0.0
        %2100 = vmatpush1.xpose.msra.mxu0 0.0
        %2101 = vmatprep.mubr.f32.mxu0 0.0
        %2102 = vmatmul.mubr.f32.gmra.mrb[0].mxu0 %v1030
        %v2103 = vpop.f32.mrb[0].mxu0
        %v2104 = vadd.f32 0.0, %v2103
        %v2105 = vpop.f32.mrb[0].mxu0
        %2106 = vdwg.mxu0
        %2107 = vmatprep.subr.mxu0 0.0
        %2108 = vmatpush1.xpose.msra.mxu0 %v1038
        %2109 = vmatprep.subr.mxu0 0.0
        %2110 = vmatpush1.xpose.msra.mxu0 0.0
        %2111 = vmatprep.subr.mxu0 0.0
        %2112 = vmatpush1.xpose.msra.mxu0 0.0
        %2113 = vmatprep.subr.mxu0 0.0
        %2114 = vmatpush1.xpose.msra.mxu0 0.0
        %2115 = vmatprep.subr.mxu0 0.0
        %2116 = vmatpush1.xpose.msra.mxu0 0.0
        %2117 = vmatprep.subr.mxu0 0.0
        %2118 = vmatpush1.xpose.msra.mxu0 0.0
        %2119 = vmatprep.subr.mxu0 0.0
        %2120 = vmatpush1.xpose.msra.mxu0 0.0
        %2121 = vmatprep.subr.mxu0 0.0
        %2122 = vmatpush1.xpose.msra.mxu0 0.0
        %2123 = vmatprep.subr.mxu0 0.0
        %2124 = vmatpush1.xpose.msra.mxu0 0.0
        %2125 = vmatprep.subr.mxu0 0.0
        %2126 = vmatpush1.xpose.msra.mxu0 0.0
        %2127 = vmatprep.subr.mxu0 0.0
        %2128 = vmatpush1.xpose.msra.mxu0 0.0
        %2129 = vmatprep.subr.mxu0 0.0
        %2130 = vmatpush1.xpose.msra.mxu0 0.0
        %2131 = vmatprep.subr.mxu0 0.0
        %2132 = vmatpush1.xpose.msra.mxu0 0.0
        %2133 = vmatprep.subr.mxu0 0.0
        %2134 = vmatpush1.xpose.msra.mxu0 0.0
        %2135 = vmatprep.subr.mxu0 0.0
        %2136 = vmatpush1.xpose.msra.mxu0 0.0
        %2137 = vmatprep.subr.mxu0 0.0
        %2138 = vmatpush1.xpose.msra.mxu0 0.0
        %2139 = vmatprep.subr.mxu0 0.0
        %2140 = vmatpush1.xpose.msra.mxu0 0.0
        %2141 = vmatprep.subr.mxu0 0.0
        %2142 = vmatpush1.xpose.msra.mxu0 0.0
        %2143 = vmatprep.subr.mxu0 0.0
        %2144 = vmatpush1.xpose.msra.mxu0 0.0
        %2145 = vmatprep.subr.mxu0 0.0
        %2146 = vmatpush1.xpose.msra.mxu0 0.0
        %2147 = vmatprep.subr.mxu0 0.0
        %2148 = vmatpush1.xpose.msra.mxu0 0.0
        %2149 = vmatprep.subr.mxu0 0.0
        %2150 = vmatpush1.xpose.msra.mxu0 0.0
        %2151 = vmatprep.subr.mxu0 0.0
        %2152 = vmatpush1.xpose.msra.mxu0 0.0
        %2153 = vmatprep.subr.mxu0 0.0
        %2154 = vmatpush1.xpose.msra.mxu0 0.0
        %2155 = vmatprep.subr.mxu0 0.0
        %2156 = vmatpush1.xpose.msra.mxu0 0.0
        %2157 = vmatprep.subr.mxu0 0.0
        %2158 = vmatpush1.xpose.msra.mxu0 0.0
        %2159 = vmatprep.subr.mxu0 0.0
        %2160 = vmatpush1.xpose.msra.mxu0 0.0
        %2161 = vmatprep.subr.mxu0 0.0
        %2162 = vmatpush1.xpose.msra.mxu0 0.0
        %2163 = vmatprep.subr.mxu0 0.0
        %2164 = vmatpush1.xpose.msra.mxu0 0.0
        %2165 = vmatprep.subr.mxu0 0.0
        %2166 = vmatpush1.xpose.msra.mxu0 0.0
        %2167 = vmatprep.subr.mxu0 0.0
        %2168 = vmatpush1.xpose.msra.mxu0 0.0
        %2169 = vmatprep.subr.mxu0 0.0
        %2170 = vmatpush1.xpose.msra.mxu0 0.0
        %2171 = vmatprep.mubr.f32.mxu0 0.0
        %2172 = vmatmul.mubr.f32.gmra.mrb[0].mxu0 %v1036
        %v2173 = vpop.f32.mrb[0].mxu0
        %v2174 = vadd.f32 0.0, %v2173
        %v2175 = vpop.f32.mrb[0].mxu0
        %2176 = vdwg.mxu0
        %2177 = vmatprep.subr.mxu0 0.0
        %2178 = vmatpush1.xpose.msra.mxu0 %v1044
        %2179 = vmatprep.subr.mxu0 0.0
        %2180 = vmatpush1.xpose.msra.mxu0 0.0
        %2181 = vmatprep.subr.mxu0 0.0
        %2182 = vmatpush1.xpose.msra.mxu0 0.0
        %2183 = vmatprep.subr.mxu0 0.0
        %2184 = vmatpush1.xpose.msra.mxu0 0.0
        %2185 = vmatprep.subr.mxu0 0.0
        %2186 = vmatpush1.xpose.msra.mxu0 0.0
        %2187 = vmatprep.subr.mxu0 0.0
        %2188 = vmatpush1.xpose.msra.mxu0 0.0
        %2189 = vmatprep.subr.mxu0 0.0
        %2190 = vmatpush1.xpose.msra.mxu0 0.0
        %2191 = vmatprep.subr.mxu0 0.0
        %2192 = vmatpush1.xpose.msra.mxu0 0.0
        %2193 = vmatprep.subr.mxu0 0.0
        %2194 = vmatpush1.xpose.msra.mxu0 0.0
        %2195 = vmatprep.subr.mxu0 0.0
        %2196 = vmatpush1.xpose.msra.mxu0 0.0
        %2197 = vmatprep.subr.mxu0 0.0
        %2198 = vmatpush1.xpose.msra.mxu0 0.0
        %2199 = vmatprep.subr.mxu0 0.0
        %2200 = vmatpush1.xpose.msra.mxu0 0.0
        %2201 = vmatprep.subr.mxu0 0.0
        %2202 = vmatpush1.xpose.msra.mxu0 0.0
        %2203 = vmatprep.subr.mxu0 0.0
        %2204 = vmatpush1.xpose.msra.mxu0 0.0
        %2205 = vmatprep.subr.mxu0 0.0
        %2206 = vmatpush1.xpose.msra.mxu0 0.0
        %2207 = vmatprep.subr.mxu0 0.0
        %2208 = vmatpush1.xpose.msra.mxu0 0.0
        %2209 = vmatprep.subr.mxu0 0.0
        %2210 = vmatpush1.xpose.msra.mxu0 0.0
        %2211 = vmatprep.subr.mxu0 0.0
        %2212 = vmatpush1.xpose.msra.mxu0 0.0
        %2213 = vmatprep.subr.mxu0 0.0
        %2214 = vmatpush1.xpose.msra.mxu0 0.0
        %2215 = vmatprep.subr.mxu0 0.0
        %2216 = vmatpush1.xpose.msra.mxu0 0.0
        %2217 = vmatprep.subr.mxu0 0.0
        %2218 = vmatpush1.xpose.msra.mxu0 0.0
        %2219 = vmatprep.subr.mxu0 0.0
        %2220 = vmatpush1.xpose.msra.mxu0 0.0
        %2221 = vmatprep.subr.mxu0 0.0
        %2222 = vmatpush1.xpose.msra.mxu0 0.0
        %2223 = vmatprep.subr.mxu0 0.0
        %2224 = vmatpush1.xpose.msra.mxu0 0.0
        %2225 = vmatprep.subr.mxu0 0.0
        %2226 = vmatpush1.xpose.msra.mxu0 0.0
        %2227 = vmatprep.subr.mxu0 0.0
        %2228 = vmatpush1.xpose.msra.mxu0 0.0
        %2229 = vmatprep.subr.mxu0 0.0
        %2230 = vmatpush1.xpose.msra.mxu0 0.0
        %2231 = vmatprep.subr.mxu0 0.0
        %2232 = vmatpush1.xpose.msra.mxu0 0.0
        %2233 = vmatprep.subr.mxu0 0.0
        %2234 = vmatpush1.xpose.msra.mxu0 0.0
        %2235 = vmatprep.subr.mxu0 0.0
        %2236 = vmatpush1.xpose.msra.mxu0 0.0
        %2237 = vmatprep.subr.mxu0 0.0
        %2238 = vmatpush1.xpose.msra.mxu0 0.0
        %2239 = vmatprep.subr.mxu0 0.0
        %2240 = vmatpush1.xpose.msra.mxu0 0.0
        %2241 = vmatprep.mubr.f32.mxu0 0.0
        %2242 = vmatmul.mubr.f32.gmra.mrb[0].mxu0 %v1042
        %v2243 = vpop.f32.mrb[0].mxu0
        %v2244 = vadd.f32 0.0, %v2243
        %v2245 = vpop.f32.mrb[0].mxu0
        %2246 = vdwg.mxu0
        %2247 = vmatprep.subr.mxu0 0.0
        %2248 = vmatpush1.xpose.msra.mxu0 %v1050
        %2249 = vmatprep.subr.mxu0 0.0
        %2250 = vmatpush1.xpose.msra.mxu0 0.0
        %2251 = vmatprep.subr.mxu0 0.0
        %2252 = vmatpush1.xpose.msra.mxu0 0.0
        %2253 = vmatprep.subr.mxu0 0.0
        %2254 = vmatpush1.xpose.msra.mxu0 0.0
        %2255 = vmatprep.subr.mxu0 0.0
        %2256 = vmatpush1.xpose.msra.mxu0 0.0
        %2257 = vmatprep.subr.mxu0 0.0
        %2258 = vmatpush1.xpose.msra.mxu0 0.0
        %2259 = vmatprep.subr.mxu0 0.0
        %2260 = vmatpush1.xpose.msra.mxu0 0.0
        %2261 = vmatprep.subr.mxu0 0.0
        %2262 = vmatpush1.xpose.msra.mxu0 0.0
        %2263 = vmatprep.subr.mxu0 0.0
        %2264 = vmatpush1.xpose.msra.mxu0 0.0
        %2265 = vmatprep.subr.mxu0 0.0
        %2266 = vmatpush1.xpose.msra.mxu0 0.0
        %2267 = vmatprep.subr.mxu0 0.0
        %2268 = vmatpush1.xpose.msra.mxu0 0.0
        %2269 = vmatprep.subr.mxu0 0.0
        %2270 = vmatpush1.xpose.msra.mxu0 0.0
        %2271 = vmatprep.subr.mxu0 0.0
        %2272 = vmatpush1.xpose.msra.mxu0 0.0
        %2273 = vmatprep.subr.mxu0 0.0
        %2274 = vmatpush1.xpose.msra.mxu0 0.0
        %2275 = vmatprep.subr.mxu0 0.0
        %2276 = vmatpush1.xpose.msra.mxu0 0.0
        %2277 = vmatprep.subr.mxu0 0.0
        %2278 = vmatpush1.xpose.msra.mxu0 0.0
        %2279 = vmatprep.subr.mxu0 0.0
        %2280 = vmatpush1.xpose.msra.mxu0 0.0
        %2281 = vmatprep.subr.mxu0 0.0
        %2282 = vmatpush1.xpose.msra.mxu0 0.0
        %2283 = vmatprep.subr.mxu0 0.0
        %2284 = vmatpush1.xpose.msra.mxu0 0.0
        %2285 = vmatprep.subr.mxu0 0.0
        %2286 = vmatpush1.xpose.msra.mxu0 0.0
        %2287 = vmatprep.subr.mxu0 0.0
        %2288 = vmatpush1.xpose.msra.mxu0 0.0
        %2289 = vmatprep.subr.mxu0 0.0
        %2290 = vmatpush1.xpose.msra.mxu0 0.0
        %2291 = vmatprep.subr.mxu0 0.0
        %2292 = vmatpush1.xpose.msra.mxu0 0.0
        %2293 = vmatprep.subr.mxu0 0.0
        %2294 = vmatpush1.xpose.msra.mxu0 0.0
        %2295 = vmatprep.subr.mxu0 0.0
        %2296 = vmatpush1.xpose.msra.mxu0 0.0
        %2297 = vmatprep.subr.mxu0 0.0
        %2298 = vmatpush1.xpose.msra.mxu0 0.0
        %2299 = vmatprep.subr.mxu0 0.0
        %2300 = vmatpush1.xpose.msra.mxu0 0.0
        %2301 = vmatprep.subr.mxu0 0.0
        %2302 = vmatpush1.xpose.msra.mxu0 0.0
        %2303 = vmatprep.subr.mxu0 0.0
        %2304 = vmatpush1.xpose.msra.mxu0 0.0
        %2305 = vmatprep.subr.mxu0 0.0
        %2306 = vmatpush1.xpose.msra.mxu0 0.0
        %2307 = vmatprep.subr.mxu0 0.0
        %2308 = vmatpush1.xpose.msra.mxu0 0.0
        %2309 = vmatprep.subr.mxu0 0.0
        %2310 = vmatpush1.xpose.msra.mxu0 0.0
        %2311 = vmatprep.mubr.f32.mxu0 0.0
        %2312 = vmatmul.mubr.f32.gmra.mrb[0].mxu0 %v1048
        %v2313 = vpop.f32.mrb[0].mxu0
        %v2314 = vadd.f32 0.0, %v2313
        %v2315 = vpop.f32.mrb[0].mxu0
        %2316 = vdwg.mxu0
        %vm2317 = vcmask 64512
        %v2318 = vsel %vm2317, %v1264, -inf
        %2319 = vmax.xlane.f32.xlu0 %v2318
        %v2320 = vpop.xlane.xlu0 %2319
        %v2321 = vsel %vm2317, %v1334, -inf
        %2322 = vmax.xlane.f32.xlu0 %v2321
        %v2323 = vpop.xlane.xlu0 %2322
        %v2324 = vsel %vm2317, %v1404, -inf
        %2325 = vmax.xlane.f32.xlu0 %v2324
        %v2326 = vpop.xlane.xlu0 %2325
        %v2327 = vsel %vm2317, %v1474, -inf
        %2328 = vmax.xlane.f32.xlu0 %v2327
        %v2329 = vpop.xlane.xlu0 %2328
        %v2330 = vsel %vm2317, %v1544, -inf
        %2331 = vmax.xlane.f32.xlu0 %v2330
        %v2332 = vpop.xlane.xlu0 %2331
        %v2333 = vsel %vm2317, %v1614, -inf
        %2334 = vmax.xlane.f32.xlu0 %v2333
        %v2335 = vpop.xlane.xlu0 %2334
        %v2336 = vsel %vm2317, %v1684, -inf
        %2337 = vmax.xlane.f32.xlu0 %v2336
        %v2338 = vpop.xlane.xlu0 %2337
        %v2339 = vsel %vm2317, %v1754, -inf
        %2340 = vmax.xlane.f32.xlu0 %v2339
        %v2341 = vpop.xlane.xlu0 %2340
        %v2342 = vsel %vm2317, %v1824, -inf
        %2343 = vmax.xlane.f32.xlu0 %v2342
        %v2344 = vpop.xlane.xlu0 %2343
        %v2345 = vsel %vm2317, %v1894, -inf
        %2346 = vmax.xlane.f32.xlu0 %v2345
        %v2347 = vpop.xlane.xlu0 %2346
        %v2348 = vsel %vm2317, %v1964, -inf
        %2349 = vmax.xlane.f32.xlu0 %v2348
        %v2350 = vpop.xlane.xlu0 %2349
        %v2351 = vsel %vm2317, %v2034, -inf
        %2352 = vmax.xlane.f32.xlu0 %v2351
        %v2353 = vpop.xlane.xlu0 %2352
        %v2354 = vsel %vm2317, %v2104, -inf
        %2355 = vmax.xlane.f32.xlu0 %v2354
        %v2356 = vpop.xlane.xlu0 %2355
        %v2357 = vsel %vm2317, %v2174, -inf
        %2358 = vmax.xlane.f32.xlu0 %v2357
        %v2359 = vpop.xlane.xlu0 %2358
        %v2360 = vsel %vm2317, %v2244, -inf
        %2361 = vmax.xlane.f32.xlu0 %v2360
        %v2362 = vpop.xlane.xlu0 %2361
        %v2363 = vsel %vm2317, %v2314, -inf
        %2364 = vmax.xlane.f32.xlu0 %v2363
        %v2365 = vpop.xlane.xlu0 %2364
        %v2366 = vsub.f32 %v1264, %v2320
        %v2367 = vsub.f32 %v1334, %v2323
        %v2368 = vsub.f32 %v1404, %v2326
        %v2369 = vsub.f32 %v1474, %v2329
        %v2370 = vsub.f32 %v1544, %v2332
        %v2371 = vsub.f32 %v1614, %v2335
        %v2372 = vsub.f32 %v1684, %v2338
        %v2373 = vsub.f32 %v1754, %v2341
        %v2374 = vsub.f32 %v1824, %v2344
        %v2375 = vsub.f32 %v1894, %v2347
        %v2376 = vsub.f32 %v1964, %v2350
        %v2377 = vsub.f32 %v2034, %v2353
        %v2378 = vsub.f32 %v2104, %v2356
        %v2379 = vsub.f32 %v2174, %v2359
        %v2380 = vsub.f32 %v2244, %v2362
        %v2381 = vsub.f32 %v2314, %v2365
        %v2382 = vmul.f32 %v2366, 1.442695
        %v2383 = vpow.pop %v2382
        %v2384 = vmul.f32 %v2367, 1.442695
        %v2385 = vpow.pop %v2384
        %v2386 = vmul.f32 %v2368, 1.442695
        %v2387 = vpow.pop %v2386
        %v2388 = vmul.f32 %v2369, 1.442695
        %v2389 = vpow.pop %v2388
        %v2390 = vmul.f32 %v2370, 1.442695
        %v2391 = vpow.pop %v2390
        %v2392 = vmul.f32 %v2371, 1.442695
        %v2393 = vpow.pop %v2392
        %v2394 = vmul.f32 %v2372, 1.442695
        %v2395 = vpow.pop %v2394
        %v2396 = vmul.f32 %v2373, 1.442695
        %v2397 = vpow.pop %v2396
        %v2398 = vmul.f32 %v2374, 1.442695
        %v2399 = vpow.pop %v2398
        %v2400 = vmul.f32 %v2375, 1.442695
        %v2401 = vpow.pop %v2400
        %v2402 = vmul.f32 %v2376, 1.442695
        %v2403 = vpow.pop %v2402
        %v2404 = vmul.f32 %v2377, 1.442695
        %v2405 = vpow.pop %v2404
        %v2406 = vmul.f32 %v2378, 1.442695
        %v2407 = vpow.pop %v2406
        %v2408 = vmul.f32 %v2379, 1.442695
        %v2409 = vpow.pop %v2408
        %v2410 = vmul.f32 %v2380, 1.442695
        %v2411 = vpow.pop %v2410
        %v2412 = vmul.f32 %v2381, 1.442695
        %v2413 = vpow.pop %v2412
        %v2414 = vsel %vm2317, %v2383, 0.0
        %2415 = vadd.xlane.f32.xlu0 %v2414
        %v2416 = vpop.xlane.xlu0 %2415
        %v2417 = vsel %vm2317, %v2385, 0.0
        %2418 = vadd.xlane.f32.xlu0 %v2417
        %v2419 = vpop.xlane.xlu0 %2418
        %v2420 = vsel %vm2317, %v2387, 0.0
        %2421 = vadd.xlane.f32.xlu0 %v2420
        %v2422 = vpop.xlane.xlu0 %2421
        %v2423 = vsel %vm2317, %v2389, 0.0
        %2424 = vadd.xlane.f32.xlu0 %v2423
        %v2425 = vpop.xlane.xlu0 %2424
        %v2426 = vsel %vm2317, %v2391, 0.0
        %2427 = vadd.xlane.f32.xlu0 %v2426
        %v2428 = vpop.xlane.xlu0 %2427
        %v2429 = vsel %vm2317, %v2393, 0.0
        %2430 = vadd.xlane.f32.xlu0 %v2429
        %v2431 = vpop.xlane.xlu0 %2430
        %v2432 = vsel %vm2317, %v2395, 0.0
        %2433 = vadd.xlane.f32.xlu0 %v2432
        %v2434 = vpop.xlane.xlu0 %2433
        %v2435 = vsel %vm2317, %v2397, 0.0
        %2436 = vadd.xlane.f32.xlu0 %v2435
        %v2437 = vpop.xlane.xlu0 %2436
        %v2438 = vsel %vm2317, %v2399, 0.0
        %2439 = vadd.xlane.f32.xlu0 %v2438
        %v2440 = vpop.xlane.xlu0 %2439
        %v2441 = vsel %vm2317, %v2401, 0.0
        %2442 = vadd.xlane.f32.xlu0 %v2441
        %v2443 = vpop.xlane.xlu0 %2442
        %v2444 = vsel %vm2317, %v2403, 0.0
        %2445 = vadd.xlane.f32.xlu0 %v2444
        %v2446 = vpop.xlane.xlu0 %2445
        %v2447 = vsel %vm2317, %v2405, 0.0
        %2448 = vadd.xlane.f32.xlu0 %v2447
        %v2449 = vpop.xlane.xlu0 %2448
        %v2450 = vsel %vm2317, %v2407, 0.0
        %2451 = vadd.xlane.f32.xlu0 %v2450
        %v2452 = vpop.xlane.xlu0 %2451
        %v2453 = vsel %vm2317, %v2409, 0.0
        %2454 = vadd.xlane.f32.xlu0 %v2453
        %v2455 = vpop.xlane.xlu0 %2454
        %v2456 = vsel %vm2317, %v2411, 0.0
        %2457 = vadd.xlane.f32.xlu0 %v2456
        %v2458 = vpop.xlane.xlu0 %2457
        %v2459 = vsel %vm2317, %v2413, 0.0
        %2460 = vadd.xlane.f32.xlu0 %v2459
        %v2461 = vpop.xlane.xlu0 %2460
        %v2462 = vrcp.pop %v2416
        %v2463 = vrcp.pop %v2419
        %v2464 = vrcp.pop %v2422
        %v2465 = vrcp.pop %v2425
        %v2466 = vrcp.pop %v2428
        %v2467 = vrcp.pop %v2431
        %v2468 = vrcp.pop %v2434
        %v2469 = vrcp.pop %v2437
        %v2470 = vrcp.pop %v2440
        %v2471 = vrcp.pop %v2443
        %v2472 = vrcp.pop %v2446
        %v2473 = vrcp.pop %v2449
        %v2474 = vrcp.pop %v2452
        %v2475 = vrcp.pop %v2455
        %v2476 = vrcp.pop %v2458
        %v2477 = vrcp.pop %v2461
        %v2478 = vmul.f32 %v2383, %v2462
        %v2479 = vmul.f32 %v2385, %v2463
        %v2480 = vmul.f32 %v2387, %v2464
        %v2481 = vmul.f32 %v2389, %v2465
        %v2482 = vmul.f32 %v2391, %v2466
        %v2483 = vmul.f32 %v2393, %v2467
        %v2484 = vmul.f32 %v2395, %v2468
        %v2485 = vmul.f32 %v2397, %v2469
        %v2486 = vmul.f32 %v2399, %v2470
        %v2487 = vmul.f32 %v2401, %v2471
        %v2488 = vmul.f32 %v2403, %v2472
        %v2489 = vmul.f32 %v2405, %v2473
        %v2490 = vmul.f32 %v2407, %v2474
        %v2491 = vmul.f32 %v2409, %v2475
        %v2492 = vmul.f32 %v2411, %v2476
        %v2493 = vmul.f32 %v2413, %v2477
        %v2495 = vsel %vm2317, %v2478, 0
        %2497 = vmatprep.subr.mxu0 0.0
        %2498 = vmatpush1.msra.mxu0 %v1119
        %2499 = vmatprep.subr.mxu0 0.0
        %2500 = vmatpush1.msra.mxu0 0.0
        %2501 = vmatprep.subr.mxu0 0.0
        %2502 = vmatpush1.msra.mxu0 0.0
        %2503 = vmatprep.subr.mxu0 0.0
        %2504 = vmatpush1.msra.mxu0 0.0
        %2505 = vmatprep.subr.mxu0 0.0
        %2506 = vmatpush1.msra.mxu0 0.0
        %2507 = vmatprep.subr.mxu0 0.0
        %2508 = vmatpush1.msra.mxu0 0.0
        %2509 = vmatprep.subr.mxu0 0.0
        %2510 = vmatpush1.msra.mxu0 0.0
        %2511 = vmatprep.subr.mxu0 0.0
        %2512 = vmatpush1.msra.mxu0 0.0
        %2513 = vmatprep.subr.mxu0 0.0
        %2514 = vmatpush1.msra.mxu0 0.0
        %2515 = vmatprep.subr.mxu0 0.0
        %2516 = vmatpush1.msra.mxu0 0.0
        %2517 = vmatprep.subr.mxu0 0.0
        %2518 = vmatpush1.msra.mxu0 0.0
        %2519 = vmatprep.subr.mxu0 0.0
        %2520 = vmatpush1.msra.mxu0 0.0
        %2521 = vmatprep.subr.mxu0 0.0
        %2522 = vmatpush1.msra.mxu0 0.0
        %2523 = vmatprep.subr.mxu0 0.0
        %2524 = vmatpush1.msra.mxu0 0.0
        %2525 = vmatprep.subr.mxu0 0.0
        %2526 = vmatpush1.msra.mxu0 0.0
        %2527 = vmatprep.subr.mxu0 0.0
        %2528 = vmatpush1.msra.mxu0 0.0
        %2529 = vmatprep.subr.mxu0 0.0
        %2530 = vmatpush1.msra.mxu0 0.0
        %2531 = vmatprep.subr.mxu0 0.0
        %2532 = vmatpush1.msra.mxu0 0.0
        %2533 = vmatprep.subr.mxu0 0.0
        %2534 = vmatpush1.msra.mxu0 0.0
        %2535 = vmatprep.subr.mxu0 0.0
        %2536 = vmatpush1.msra.mxu0 0.0
        %2537 = vmatprep.subr.mxu0 0.0
        %2538 = vmatpush1.msra.mxu0 0.0
        %2539 = vmatprep.subr.mxu0 0.0
        %2540 = vmatpush1.msra.mxu0 0.0
        %2541 = vmatprep.subr.mxu0 0.0
        %2542 = vmatpush1.msra.mxu0 0.0
        %2543 = vmatprep.subr.mxu0 0.0
        %2544 = vmatpush1.msra.mxu0 0.0
        %2545 = vmatprep.subr.mxu0 0.0
        %2546 = vmatpush1.msra.mxu0 0.0
        %2547 = vmatprep.subr.mxu0 0.0
        %2548 = vmatpush1.msra.mxu0 0.0
        %2549 = vmatprep.subr.mxu0 0.0
        %2550 = vmatpush1.msra.mxu0 0.0
        %2551 = vmatprep.subr.mxu0 0.0
        %2552 = vmatpush1.msra.mxu0 0.0
        %2553 = vmatprep.subr.mxu0 0.0
        %2554 = vmatpush1.msra.mxu0 0.0
        %2555 = vmatprep.subr.mxu0 0.0
        %2556 = vmatpush1.msra.mxu0 0.0
        %2557 = vmatprep.subr.mxu0 0.0
        %2558 = vmatpush1.msra.mxu0 0.0
        %2559 = vmatprep.subr.mxu0 0.0
        %2560 = vmatpush1.msra.mxu0 0.0
        %2561 = vmatprep.mubr.f32.mxu0 0.0
        %2562 = vmatmul.mubr.f32.gmra.mrb[0].mxu0 %v2495
        %v2563 = vpop.f32.mrb[0].mxu0
        %v2564 = vadd.f32 0.0, %v2563
        %v2565 = vpop.f32.mrb[0].mxu0
        %2566 = vdwg.mxu0
        %v2568 = vsel %vm2317, %v2479, 0
        %2570 = vmatprep.subr.mxu0 0.0
        %2571 = vmatpush1.msra.mxu0 %v1124
        %2572 = vmatprep.subr.mxu0 0.0
        %2573 = vmatpush1.msra.mxu0 0.0
        %2574 = vmatprep.subr.mxu0 0.0
        %2575 = vmatpush1.msra.mxu0 0.0
        %2576 = vmatprep.subr.mxu0 0.0
        %2577 = vmatpush1.msra.mxu0 0.0
        %2578 = vmatprep.subr.mxu0 0.0
        %2579 = vmatpush1.msra.mxu0 0.0
        %2580 = vmatprep.subr.mxu0 0.0
        %2581 = vmatpush1.msra.mxu0 0.0
        %2582 = vmatprep.subr.mxu0 0.0
        %2583 = vmatpush1.msra.mxu0 0.0
        %2584 = vmatprep.subr.mxu0 0.0
        %2585 = vmatpush1.msra.mxu0 0.0
        %2586 = vmatprep.subr.mxu0 0.0
        %2587 = vmatpush1.msra.mxu0 0.0
        %2588 = vmatprep.subr.mxu0 0.0
        %2589 = vmatpush1.msra.mxu0 0.0
        %2590 = vmatprep.subr.mxu0 0.0
        %2591 = vmatpush1.msra.mxu0 0.0
        %2592 = vmatprep.subr.mxu0 0.0
        %2593 = vmatpush1.msra.mxu0 0.0
        %2594 = vmatprep.subr.mxu0 0.0
        %2595 = vmatpush1.msra.mxu0 0.0
        %2596 = vmatprep.subr.mxu0 0.0
        %2597 = vmatpush1.msra.mxu0 0.0
        %2598 = vmatprep.subr.mxu0 0.0
        %2599 = vmatpush1.msra.mxu0 0.0
        %2600 = vmatprep.subr.mxu0 0.0
        %2601 = vmatpush1.msra.mxu0 0.0
        %2602 = vmatprep.subr.mxu0 0.0
        %2603 = vmatpush1.msra.mxu0 0.0
        %2604 = vmatprep.subr.mxu0 0.0
        %2605 = vmatpush1.msra.mxu0 0.0
        %2606 = vmatprep.subr.mxu0 0.0
        %2607 = vmatpush1.msra.mxu0 0.0
        %2608 = vmatprep.subr.mxu0 0.0
        %2609 = vmatpush1.msra.mxu0 0.0
        %2610 = vmatprep.subr.mxu0 0.0
        %2611 = vmatpush1.msra.mxu0 0.0
        %2612 = vmatprep.subr.mxu0 0.0
        %2613 = vmatpush1.msra.mxu0 0.0
        %2614 = vmatprep.subr.mxu0 0.0
        %2615 = vmatpush1.msra.mxu0 0.0
        %2616 = vmatprep.subr.mxu0 0.0
        %2617 = vmatpush1.msra.mxu0 0.0
        %2618 = vmatprep.subr.mxu0 0.0
        %2619 = vmatpush1.msra.mxu0 0.0
        %2620 = vmatprep.subr.mxu0 0.0
        %2621 = vmatpush1.msra.mxu0 0.0
        %2622 = vmatprep.subr.mxu0 0.0
        %2623 = vmatpush1.msra.mxu0 0.0
        %2624 = vmatprep.subr.mxu0 0.0
        %2625 = vmatpush1.msra.mxu0 0.0
        %2626 = vmatprep.subr.mxu0 0.0
        %2627 = vmatpush1.msra.mxu0 0.0
        %2628 = vmatprep.subr.mxu0 0.0
        %2629 = vmatpush1.msra.mxu0 0.0
        %2630 = vmatprep.subr.mxu0 0.0
        %2631 = vmatpush1.msra.mxu0 0.0
        %2632 = vmatprep.subr.mxu0 0.0
        %2633 = vmatpush1.msra.mxu0 0.0
        %2634 = vmatprep.mubr.f32.mxu0 0.0
        %2635 = vmatmul.mubr.f32.gmra.mrb[0].mxu0 %v2568
        %v2636 = vpop.f32.mrb[0].mxu0
        %v2637 = vadd.f32 0.0, %v2636
        %v2638 = vpop.f32.mrb[0].mxu0
        %2639 = vdwg.mxu0
        %v2641 = vsel %vm2317, %v2480, 0
        %2643 = vmatprep.subr.mxu0 0.0
        %2644 = vmatpush1.msra.mxu0 %v1129
        %2645 = vmatprep.subr.mxu0 0.0
        %2646 = vmatpush1.msra.mxu0 0.0
        %2647 = vmatprep.subr.mxu0 0.0
        %2648 = vmatpush1.msra.mxu0 0.0
        %2649 = vmatprep.subr.mxu0 0.0
        %2650 = vmatpush1.msra.mxu0 0.0
        %2651 = vmatprep.subr.mxu0 0.0
        %2652 = vmatpush1.msra.mxu0 0.0
        %2653 = vmatprep.subr.mxu0 0.0
        %2654 = vmatpush1.msra.mxu0 0.0
        %2655 = vmatprep.subr.mxu0 0.0
        %2656 = vmatpush1.msra.mxu0 0.0
        %2657 = vmatprep.subr.mxu0 0.0
        %2658 = vmatpush1.msra.mxu0 0.0
        %2659 = vmatprep.subr.mxu0 0.0
        %2660 = vmatpush1.msra.mxu0 0.0
        %2661 = vmatprep.subr.mxu0 0.0
        %2662 = vmatpush1.msra.mxu0 0.0
        %2663 = vmatprep.subr.mxu0 0.0
        %2664 = vmatpush1.msra.mxu0 0.0
        %2665 = vmatprep.subr.mxu0 0.0
        %2666 = vmatpush1.msra.mxu0 0.0
        %2667 = vmatprep.subr.mxu0 0.0
        %2668 = vmatpush1.msra.mxu0 0.0
        %2669 = vmatprep.subr.mxu0 0.0
        %2670 = vmatpush1.msra.mxu0 0.0
        %2671 = vmatprep.subr.mxu0 0.0
        %2672 = vmatpush1.msra.mxu0 0.0
        %2673 = vmatprep.subr.mxu0 0.0
        %2674 = vmatpush1.msra.mxu0 0.0
        %2675 = vmatprep.subr.mxu0 0.0
        %2676 = vmatpush1.msra.mxu0 0.0
        %2677 = vmatprep.subr.mxu0 0.0
        %2678 = vmatpush1.msra.mxu0 0.0
        %2679 = vmatprep.subr.mxu0 0.0
        %2680 = vmatpush1.msra.mxu0 0.0
        %2681 = vmatprep.subr.mxu0 0.0
        %2682 = vmatpush1.msra.mxu0 0.0
        %2683 = vmatprep.subr.mxu0 0.0
        %2684 = vmatpush1.msra.mxu0 0.0
        %2685 = vmatprep.subr.mxu0 0.0
        %2686 = vmatpush1.msra.mxu0 0.0
        %2687 = vmatprep.subr.mxu0 0.0
        %2688 = vmatpush1.msra.mxu0 0.0
        %2689 = vmatprep.subr.mxu0 0.0
        %2690 = vmatpush1.msra.mxu0 0.0
        %2691 = vmatprep.subr.mxu0 0.0
        %2692 = vmatpush1.msra.mxu0 0.0
        %2693 = vmatprep.subr.mxu0 0.0
        %2694 = vmatpush1.msra.mxu0 0.0
        %2695 = vmatprep.subr.mxu0 0.0
        %2696 = vmatpush1.msra.mxu0 0.0
        %2697 = vmatprep.subr.mxu0 0.0
        %2698 = vmatpush1.msra.mxu0 0.0
        %2699 = vmatprep.subr.mxu0 0.0
        %2700 = vmatpush1.msra.mxu0 0.0
        %2701 = vmatprep.subr.mxu0 0.0
        %2702 = vmatpush1.msra.mxu0 0.0
        %2703 = vmatprep.subr.mxu0 0.0
        %2704 = vmatpush1.msra.mxu0 0.0
        %2705 = vmatprep.subr.mxu0 0.0
        %2706 = vmatpush1.msra.mxu0 0.0
        %2707 = vmatprep.mubr.f32.mxu0 0.0
        %2708 = vmatmul.mubr.f32.gmra.mrb[0].mxu0 %v2641
        %v2709 = vpop.f32.mrb[0].mxu0
        %v2710 = vadd.f32 0.0, %v2709
        %v2711 = vpop.f32.mrb[0].mxu0
        %2712 = vdwg.mxu0
        %v2714 = vsel %vm2317, %v2481, 0
        %2716 = vmatprep.subr.mxu0 0.0
        %2717 = vmatpush1.msra.mxu0 %v1134
        %2718 = vmatprep.subr.mxu0 0.0
        %2719 = vmatpush1.msra.mxu0 0.0
        %2720 = vmatprep.subr.mxu0 0.0
        %2721 = vmatpush1.msra.mxu0 0.0
        %2722 = vmatprep.subr.mxu0 0.0
        %2723 = vmatpush1.msra.mxu0 0.0
        %2724 = vmatprep.subr.mxu0 0.0
        %2725 = vmatpush1.msra.mxu0 0.0
        %2726 = vmatprep.subr.mxu0 0.0
        %2727 = vmatpush1.msra.mxu0 0.0
        %2728 = vmatprep.subr.mxu0 0.0
        %2729 = vmatpush1.msra.mxu0 0.0
        %2730 = vmatprep.subr.mxu0 0.0
        %2731 = vmatpush1.msra.mxu0 0.0
        %2732 = vmatprep.subr.mxu0 0.0
        %2733 = vmatpush1.msra.mxu0 0.0
        %2734 = vmatprep.subr.mxu0 0.0
        %2735 = vmatpush1.msra.mxu0 0.0
        %2736 = vmatprep.subr.mxu0 0.0
        %2737 = vmatpush1.msra.mxu0 0.0
        %2738 = vmatprep.subr.mxu0 0.0
        %2739 = vmatpush1.msra.mxu0 0.0
        %2740 = vmatprep.subr.mxu0 0.0
        %2741 = vmatpush1.msra.mxu0 0.0
        %2742 = vmatprep.subr.mxu0 0.0
        %2743 = vmatpush1.msra.mxu0 0.0
        %2744 = vmatprep.subr.mxu0 0.0
        %2745 = vmatpush1.msra.mxu0 0.0
        %2746 = vmatprep.subr.mxu0 0.0
        %2747 = vmatpush1.msra.mxu0 0.0
        %2748 = vmatprep.subr.mxu0 0.0
        %2749 = vmatpush1.msra.mxu0 0.0
        %2750 = vmatprep.subr.mxu0 0.0
        %2751 = vmatpush1.msra.mxu0 0.0
        %2752 = vmatprep.subr.mxu0 0.0
        %2753 = vmatpush1.msra.mxu0 0.0
        %2754 = vmatprep.subr.mxu0 0.0
        %2755 = vmatpush1.msra.mxu0 0.0
        %2756 = vmatprep.subr.mxu0 0.0
        %2757 = vmatpush1.msra.mxu0 0.0
        %2758 = vmatprep.subr.mxu0 0.0
        %2759 = vmatpush1.msra.mxu0 0.0
        %2760 = vmatprep.subr.mxu0 0.0
        %2761 = vmatpush1.msra.mxu0 0.0
        %2762 = vmatprep.subr.mxu0 0.0
        %2763 = vmatpush1.msra.mxu0 0.0
        %2764 = vmatprep.subr.mxu0 0.0
        %2765 = vmatpush1.msra.mxu0 0.0
        %2766 = vmatprep.subr.mxu0 0.0
        %2767 = vmatpush1.msra.mxu0 0.0
        %2768 = vmatprep.subr.mxu0 0.0
        %2769 = vmatpush1.msra.mxu0 0.0
        %2770 = vmatprep.subr.mxu0 0.0
        %2771 = vmatpush1.msra.mxu0 0.0
        %2772 = vmatprep.subr.mxu0 0.0
        %2773 = vmatpush1.msra.mxu0 0.0
        %2774 = vmatprep.subr.mxu0 0.0
        %2775 = vmatpush1.msra.mxu0 0.0
        %2776 = vmatprep.subr.mxu0 0.0
        %2777 = vmatpush1.msra.mxu0 0.0
        %2778 = vmatprep.subr.mxu0 0.0
        %2779 = vmatpush1.msra.mxu0 0.0
        %2780 = vmatprep.mubr.f32.mxu0 0.0
        %2781 = vmatmul.mubr.f32.gmra.mrb[0].mxu0 %v2714
        %v2782 = vpop.f32.mrb[0].mxu0
        %v2783 = vadd.f32 0.0, %v2782
        %v2784 = vpop.f32.mrb[0].mxu0
        %2785 = vdwg.mxu0
        %v2787 = vsel %vm2317, %v2482, 0
        %2789 = vmatprep.subr.mxu0 0.0
        %2790 = vmatpush1.msra.mxu0 %v1139
        %2791 = vmatprep.subr.mxu0 0.0
        %2792 = vmatpush1.msra.mxu0 0.0
        %2793 = vmatprep.subr.mxu0 0.0
        %2794 = vmatpush1.msra.mxu0 0.0
        %2795 = vmatprep.subr.mxu0 0.0
        %2796 = vmatpush1.msra.mxu0 0.0
        %2797 = vmatprep.subr.mxu0 0.0
        %2798 = vmatpush1.msra.mxu0 0.0
        %2799 = vmatprep.subr.mxu0 0.0
        %2800 = vmatpush1.msra.mxu0 0.0
        %2801 = vmatprep.subr.mxu0 0.0
        %2802 = vmatpush1.msra.mxu0 0.0
        %2803 = vmatprep.subr.mxu0 0.0
        %2804 = vmatpush1.msra.mxu0 0.0
        %2805 = vmatprep.subr.mxu0 0.0
        %2806 = vmatpush1.msra.mxu0 0.0
        %2807 = vmatprep.subr.mxu0 0.0
        %2808 = vmatpush1.msra.mxu0 0.0
        %2809 = vmatprep.subr.mxu0 0.0
        %2810 = vmatpush1.msra.mxu0 0.0
        %2811 = vmatprep.subr.mxu0 0.0
        %2812 = vmatpush1.msra.mxu0 0.0
        %2813 = vmatprep.subr.mxu0 0.0
        %2814 = vmatpush1.msra.mxu0 0.0
        %2815 = vmatprep.subr.mxu0 0.0
        %2816 = vmatpush1.msra.mxu0 0.0
        %2817 = vmatprep.subr.mxu0 0.0
        %2818 = vmatpush1.msra.mxu0 0.0
        %2819 = vmatprep.subr.mxu0 0.0
        %2820 = vmatpush1.msra.mxu0 0.0
        %2821 = vmatprep.subr.mxu0 0.0
        %2822 = vmatpush1.msra.mxu0 0.0
        %2823 = vmatprep.subr.mxu0 0.0
        %2824 = vmatpush1.msra.mxu0 0.0
        %2825 = vmatprep.subr.mxu0 0.0
        %2826 = vmatpush1.msra.mxu0 0.0
        %2827 = vmatprep.subr.mxu0 0.0
        %2828 = vmatpush1.msra.mxu0 0.0
        %2829 = vmatprep.subr.mxu0 0.0
        %2830 = vmatpush1.msra.mxu0 0.0
        %2831 = vmatprep.subr.mxu0 0.0
        %2832 = vmatpush1.msra.mxu0 0.0
        %2833 = vmatprep.subr.mxu0 0.0
        %2834 = vmatpush1.msra.mxu0 0.0
        %2835 = vmatprep.subr.mxu0 0.0
        %2836 = vmatpush1.msra.mxu0 0.0
        %2837 = vmatprep.subr.mxu0 0.0
        %2838 = vmatpush1.msra.mxu0 0.0
        %2839 = vmatprep.subr.mxu0 0.0
        %2840 = vmatpush1.msra.mxu0 0.0
        %2841 = vmatprep.subr.mxu0 0.0
        %2842 = vmatpush1.msra.mxu0 0.0
        %2843 = vmatprep.subr.mxu0 0.0
        %2844 = vmatpush1.msra.mxu0 0.0
        %2845 = vmatprep.subr.mxu0 0.0
        %2846 = vmatpush1.msra.mxu0 0.0
        %2847 = vmatprep.subr.mxu0 0.0
        %2848 = vmatpush1.msra.mxu0 0.0
        %2849 = vmatprep.subr.mxu0 0.0
        %2850 = vmatpush1.msra.mxu0 0.0
        %2851 = vmatprep.subr.mxu0 0.0
        %2852 = vmatpush1.msra.mxu0 0.0
        %2853 = vmatprep.mubr.f32.mxu0 0.0
        %2854 = vmatmul.mubr.f32.gmra.mrb[0].mxu0 %v2787
        %v2855 = vpop.f32.mrb[0].mxu0
        %v2856 = vadd.f32 0.0, %v2855
        %v2857 = vpop.f32.mrb[0].mxu0
        %2858 = vdwg.mxu0
        %v2860 = vsel %vm2317, %v2483, 0
        %2862 = vmatprep.subr.mxu0 0.0
        %2863 = vmatpush1.msra.mxu0 %v1144
        %2864 = vmatprep.subr.mxu0 0.0
        %2865 = vmatpush1.msra.mxu0 0.0
        %2866 = vmatprep.subr.mxu0 0.0
        %2867 = vmatpush1.msra.mxu0 0.0
        %2868 = vmatprep.subr.mxu0 0.0
        %2869 = vmatpush1.msra.mxu0 0.0
        %2870 = vmatprep.subr.mxu0 0.0
        %2871 = vmatpush1.msra.mxu0 0.0
        %2872 = vmatprep.subr.mxu0 0.0
        %2873 = vmatpush1.msra.mxu0 0.0
        %2874 = vmatprep.subr.mxu0 0.0
        %2875 = vmatpush1.msra.mxu0 0.0
        %2876 = vmatprep.subr.mxu0 0.0
        %2877 = vmatpush1.msra.mxu0 0.0
        %2878 = vmatprep.subr.mxu0 0.0
        %2879 = vmatpush1.msra.mxu0 0.0
        %2880 = vmatprep.subr.mxu0 0.0
        %2881 = vmatpush1.msra.mxu0 0.0
        %2882 = vmatprep.subr.mxu0 0.0
        %2883 = vmatpush1.msra.mxu0 0.0
        %2884 = vmatprep.subr.mxu0 0.0
        %2885 = vmatpush1.msra.mxu0 0.0
        %2886 = vmatprep.subr.mxu0 0.0
        %2887 = vmatpush1.msra.mxu0 0.0
        %2888 = vmatprep.subr.mxu0 0.0
        %2889 = vmatpush1.msra.mxu0 0.0
        %2890 = vmatprep.subr.mxu0 0.0
        %2891 = vmatpush1.msra.mxu0 0.0
        %2892 = vmatprep.subr.mxu0 0.0
        %2893 = vmatpush1.msra.mxu0 0.0
        %2894 = vmatprep.subr.mxu0 0.0
        %2895 = vmatpush1.msra.mxu0 0.0
        %2896 = vmatprep.subr.mxu0 0.0
        %2897 = vmatpush1.msra.mxu0 0.0
        %2898 = vmatprep.subr.mxu0 0.0
        %2899 = vmatpush1.msra.mxu0 0.0
        %2900 = vmatprep.subr.mxu0 0.0
        %2901 = vmatpush1.msra.mxu0 0.0
        %2902 = vmatprep.subr.mxu0 0.0
        %2903 = vmatpush1.msra.mxu0 0.0
        %2904 = vmatprep.subr.mxu0 0.0
        %2905 = vmatpush1.msra.mxu0 0.0
        %2906 = vmatprep.subr.mxu0 0.0
        %2907 = vmatpush1.msra.mxu0 0.0
        %2908 = vmatprep.subr.mxu0 0.0
        %2909 = vmatpush1.msra.mxu0 0.0
        %2910 = vmatprep.subr.mxu0 0.0
        %2911 = vmatpush1.msra.mxu0 0.0
        %2912 = vmatprep.subr.mxu0 0.0
        %2913 = vmatpush1.msra.mxu0 0.0
        %2914 = vmatprep.subr.mxu0 0.0
        %2915 = vmatpush1.msra.mxu0 0.0
        %2916 = vmatprep.subr.mxu0 0.0
        %2917 = vmatpush1.msra.mxu0 0.0
        %2918 = vmatprep.subr.mxu0 0.0
        %2919 = vmatpush1.msra.mxu0 0.0
        %2920 = vmatprep.subr.mxu0 0.0
        %2921 = vmatpush1.msra.mxu0 0.0
        %2922 = vmatprep.subr.mxu0 0.0
        %2923 = vmatpush1.msra.mxu0 0.0
        %2924 = vmatprep.subr.mxu0 0.0
        %2925 = vmatpush1.msra.mxu0 0.0
        %2926 = vmatprep.mubr.f32.mxu0 0.0
        %2927 = vmatmul.mubr.f32.gmra.mrb[0].mxu0 %v2860
        %v2928 = vpop.f32.mrb[0].mxu0
        %v2929 = vadd.f32 0.0, %v2928
        %v2930 = vpop.f32.mrb[0].mxu0
        %2931 = vdwg.mxu0
        %v2933 = vsel %vm2317, %v2484, 0
        %2935 = vmatprep.subr.mxu0 0.0
        %2936 = vmatpush1.msra.mxu0 %v1149
        %2937 = vmatprep.subr.mxu0 0.0
        %2938 = vmatpush1.msra.mxu0 0.0
        %2939 = vmatprep.subr.mxu0 0.0
        %2940 = vmatpush1.msra.mxu0 0.0
        %2941 = vmatprep.subr.mxu0 0.0
        %2942 = vmatpush1.msra.mxu0 0.0
        %2943 = vmatprep.subr.mxu0 0.0
        %2944 = vmatpush1.msra.mxu0 0.0
        %2945 = vmatprep.subr.mxu0 0.0
        %2946 = vmatpush1.msra.mxu0 0.0
        %2947 = vmatprep.subr.mxu0 0.0
        %2948 = vmatpush1.msra.mxu0 0.0
        %2949 = vmatprep.subr.mxu0 0.0
        %2950 = vmatpush1.msra.mxu0 0.0
        %2951 = vmatprep.subr.mxu0 0.0
        %2952 = vmatpush1.msra.mxu0 0.0
        %2953 = vmatprep.subr.mxu0 0.0
        %2954 = vmatpush1.msra.mxu0 0.0
        %2955 = vmatprep.subr.mxu0 0.0
        %2956 = vmatpush1.msra.mxu0 0.0
        %2957 = vmatprep.subr.mxu0 0.0
        %2958 = vmatpush1.msra.mxu0 0.0
        %2959 = vmatprep.subr.mxu0 0.0
        %2960 = vmatpush1.msra.mxu0 0.0
        %2961 = vmatprep.subr.mxu0 0.0
        %2962 = vmatpush1.msra.mxu0 0.0
        %2963 = vmatprep.subr.mxu0 0.0
        %2964 = vmatpush1.msra.mxu0 0.0
        %2965 = vmatprep.subr.mxu0 0.0
        %2966 = vmatpush1.msra.mxu0 0.0
        %2967 = vmatprep.subr.mxu0 0.0
        %2968 = vmatpush1.msra.mxu0 0.0
        %2969 = vmatprep.subr.mxu0 0.0
        %2970 = vmatpush1.msra.mxu0 0.0
        %2971 = vmatprep.subr.mxu0 0.0
        %2972 = vmatpush1.msra.mxu0 0.0
        %2973 = vmatprep.subr.mxu0 0.0
        %2974 = vmatpush1.msra.mxu0 0.0
        %2975 = vmatprep.subr.mxu0 0.0
        %2976 = vmatpush1.msra.mxu0 0.0
        %2977 = vmatprep.subr.mxu0 0.0
        %2978 = vmatpush1.msra.mxu0 0.0
        %2979 = vmatprep.subr.mxu0 0.0
        %2980 = vmatpush1.msra.mxu0 0.0
        %2981 = vmatprep.subr.mxu0 0.0
        %2982 = vmatpush1.msra.mxu0 0.0
        %2983 = vmatprep.subr.mxu0 0.0
        %2984 = vmatpush1.msra.mxu0 0.0
        %2985 = vmatprep.subr.mxu0 0.0
        %2986 = vmatpush1.msra.mxu0 0.0
        %2987 = vmatprep.subr.mxu0 0.0
        %2988 = vmatpush1.msra.mxu0 0.0
        %2989 = vmatprep.subr.mxu0 0.0
        %2990 = vmatpush1.msra.mxu0 0.0
        %2991 = vmatprep.subr.mxu0 0.0
        %2992 = vmatpush1.msra.mxu0 0.0
        %2993 = vmatprep.subr.mxu0 0.0
        %2994 = vmatpush1.msra.mxu0 0.0
        %2995 = vmatprep.subr.mxu0 0.0
        %2996 = vmatpush1.msra.mxu0 0.0
        %2997 = vmatprep.subr.mxu0 0.0
        %2998 = vmatpush1.msra.mxu0 0.0
        %2999 = vmatprep.mubr.f32.mxu0 0.0
        %3000 = vmatmul.mubr.f32.gmra.mrb[0].mxu0 %v2933
        %v3001 = vpop.f32.mrb[0].mxu0
        %v3002 = vadd.f32 0.0, %v3001
        %v3003 = vpop.f32.mrb[0].mxu0
        %3004 = vdwg.mxu0
        %v3006 = vsel %vm2317, %v2485, 0
        %3008 = vmatprep.subr.mxu0 0.0
        %3009 = vmatpush1.msra.mxu0 %v1154
        %3010 = vmatprep.subr.mxu0 0.0
        %3011 = vmatpush1.msra.mxu0 0.0
        %3012 = vmatprep.subr.mxu0 0.0
        %3013 = vmatpush1.msra.mxu0 0.0
        %3014 = vmatprep.subr.mxu0 0.0
        %3015 = vmatpush1.msra.mxu0 0.0
        %3016 = vmatprep.subr.mxu0 0.0
        %3017 = vmatpush1.msra.mxu0 0.0
        %3018 = vmatprep.subr.mxu0 0.0
        %3019 = vmatpush1.msra.mxu0 0.0
        %3020 = vmatprep.subr.mxu0 0.0
        %3021 = vmatpush1.msra.mxu0 0.0
        %3022 = vmatprep.subr.mxu0 0.0
        %3023 = vmatpush1.msra.mxu0 0.0
        %3024 = vmatprep.subr.mxu0 0.0
        %3025 = vmatpush1.msra.mxu0 0.0
        %3026 = vmatprep.subr.mxu0 0.0
        %3027 = vmatpush1.msra.mxu0 0.0
        %3028 = vmatprep.subr.mxu0 0.0
        %3029 = vmatpush1.msra.mxu0 0.0
        %3030 = vmatprep.subr.mxu0 0.0
        %3031 = vmatpush1.msra.mxu0 0.0
        %3032 = vmatprep.subr.mxu0 0.0
        %3033 = vmatpush1.msra.mxu0 0.0
        %3034 = vmatprep.subr.mxu0 0.0
        %3035 = vmatpush1.msra.mxu0 0.0
        %3036 = vmatprep.subr.mxu0 0.0
        %3037 = vmatpush1.msra.mxu0 0.0
        %3038 = vmatprep.subr.mxu0 0.0
        %3039 = vmatpush1.msra.mxu0 0.0
        %3040 = vmatprep.subr.mxu0 0.0
        %3041 = vmatpush1.msra.mxu0 0.0
        %3042 = vmatprep.subr.mxu0 0.0
        %3043 = vmatpush1.msra.mxu0 0.0
        %3044 = vmatprep.subr.mxu0 0.0
        %3045 = vmatpush1.msra.mxu0 0.0
        %3046 = vmatprep.subr.mxu0 0.0
        %3047 = vmatpush1.msra.mxu0 0.0
        %3048 = vmatprep.subr.mxu0 0.0
        %3049 = vmatpush1.msra.mxu0 0.0
        %3050 = vmatprep.subr.mxu0 0.0
        %3051 = vmatpush1.msra.mxu0 0.0
        %3052 = vmatprep.subr.mxu0 0.0
        %3053 = vmatpush1.msra.mxu0 0.0
        %3054 = vmatprep.subr.mxu0 0.0
        %3055 = vmatpush1.msra.mxu0 0.0
        %3056 = vmatprep.subr.mxu0 0.0
        %3057 = vmatpush1.msra.mxu0 0.0
        %3058 = vmatprep.subr.mxu0 0.0
        %3059 = vmatpush1.msra.mxu0 0.0
        %3060 = vmatprep.subr.mxu0 0.0
        %3061 = vmatpush1.msra.mxu0 0.0
        %3062 = vmatprep.subr.mxu0 0.0
        %3063 = vmatpush1.msra.mxu0 0.0
        %3064 = vmatprep.subr.mxu0 0.0
        %3065 = vmatpush1.msra.mxu0 0.0
        %3066 = vmatprep.subr.mxu0 0.0
        %3067 = vmatpush1.msra.mxu0 0.0
        %3068 = vmatprep.subr.mxu0 0.0
        %3069 = vmatpush1.msra.mxu0 0.0
        %3070 = vmatprep.subr.mxu0 0.0
        %3071 = vmatpush1.msra.mxu0 0.0
        %3072 = vmatprep.mubr.f32.mxu0 0.0
        %3073 = vmatmul.mubr.f32.gmra.mrb[0].mxu0 %v3006
        %v3074 = vpop.f32.mrb[0].mxu0
        %v3075 = vadd.f32 0.0, %v3074
        %v3076 = vpop.f32.mrb[0].mxu0
        %3077 = vdwg.mxu0
        %v3079 = vsel %vm2317, %v2486, 0
        %3081 = vmatprep.subr.mxu0 0.0
        %3082 = vmatpush1.msra.mxu0 %v1159
        %3083 = vmatprep.subr.mxu0 0.0
        %3084 = vmatpush1.msra.mxu0 0.0
        %3085 = vmatprep.subr.mxu0 0.0
        %3086 = vmatpush1.msra.mxu0 0.0
        %3087 = vmatprep.subr.mxu0 0.0
        %3088 = vmatpush1.msra.mxu0 0.0
        %3089 = vmatprep.subr.mxu0 0.0
        %3090 = vmatpush1.msra.mxu0 0.0
        %3091 = vmatprep.subr.mxu0 0.0
        %3092 = vmatpush1.msra.mxu0 0.0
        %3093 = vmatprep.subr.mxu0 0.0
        %3094 = vmatpush1.msra.mxu0 0.0
        %3095 = vmatprep.subr.mxu0 0.0
        %3096 = vmatpush1.msra.mxu0 0.0
        %3097 = vmatprep.subr.mxu0 0.0
        %3098 = vmatpush1.msra.mxu0 0.0
        %3099 = vmatprep.subr.mxu0 0.0
        %3100 = vmatpush1.msra.mxu0 0.0
        %3101 = vmatprep.subr.mxu0 0.0
        %3102 = vmatpush1.msra.mxu0 0.0
        %3103 = vmatprep.subr.mxu0 0.0
        %3104 = vmatpush1.msra.mxu0 0.0
        %3105 = vmatprep.subr.mxu0 0.0
        %3106 = vmatpush1.msra.mxu0 0.0
        %3107 = vmatprep.subr.mxu0 0.0
        %3108 = vmatpush1.msra.mxu0 0.0
        %3109 = vmatprep.subr.mxu0 0.0
        %3110 = vmatpush1.msra.mxu0 0.0
        %3111 = vmatprep.subr.mxu0 0.0
        %3112 = vmatpush1.msra.mxu0 0.0
        %3113 = vmatprep.subr.mxu0 0.0
        %3114 = vmatpush1.msra.mxu0 0.0
        %3115 = vmatprep.subr.mxu0 0.0
        %3116 = vmatpush1.msra.mxu0 0.0
        %3117 = vmatprep.subr.mxu0 0.0
        %3118 = vmatpush1.msra.mxu0 0.0
        %3119 = vmatprep.subr.mxu0 0.0
        %3120 = vmatpush1.msra.mxu0 0.0
        %3121 = vmatprep.subr.mxu0 0.0
        %3122 = vmatpush1.msra.mxu0 0.0
        %3123 = vmatprep.subr.mxu0 0.0
        %3124 = vmatpush1.msra.mxu0 0.0
        %3125 = vmatprep.subr.mxu0 0.0
        %3126 = vmatpush1.msra.mxu0 0.0
        %3127 = vmatprep.subr.mxu0 0.0
        %3128 = vmatpush1.msra.mxu0 0.0
        %3129 = vmatprep.subr.mxu0 0.0
        %3130 = vmatpush1.msra.mxu0 0.0
        %3131 = vmatprep.subr.mxu0 0.0
        %3132 = vmatpush1.msra.mxu0 0.0
        %3133 = vmatprep.subr.mxu0 0.0
        %3134 = vmatpush1.msra.mxu0 0.0
        %3135 = vmatprep.subr.mxu0 0.0
        %3136 = vmatpush1.msra.mxu0 0.0
        %3137 = vmatprep.subr.mxu0 0.0
        %3138 = vmatpush1.msra.mxu0 0.0
        %3139 = vmatprep.subr.mxu0 0.0
        %3140 = vmatpush1.msra.mxu0 0.0
        %3141 = vmatprep.subr.mxu0 0.0
        %3142 = vmatpush1.msra.mxu0 0.0
        %3143 = vmatprep.subr.mxu0 0.0
        %3144 = vmatpush1.msra.mxu0 0.0
        %3145 = vmatprep.mubr.f32.mxu0 0.0
        %3146 = vmatmul.mubr.f32.gmra.mrb[0].mxu0 %v3079
        %v3147 = vpop.f32.mrb[0].mxu0
        %v3148 = vadd.f32 0.0, %v3147
        %v3149 = vpop.f32.mrb[0].mxu0
        %3150 = vdwg.mxu0
        %v3152 = vsel %vm2317, %v2487, 0
        %3154 = vmatprep.subr.mxu0 0.0
        %3155 = vmatpush1.msra.mxu0 %v1164
        %3156 = vmatprep.subr.mxu0 0.0
        %3157 = vmatpush1.msra.mxu0 0.0
        %3158 = vmatprep.subr.mxu0 0.0
        %3159 = vmatpush1.msra.mxu0 0.0
        %3160 = vmatprep.subr.mxu0 0.0
        %3161 = vmatpush1.msra.mxu0 0.0
        %3162 = vmatprep.subr.mxu0 0.0
        %3163 = vmatpush1.msra.mxu0 0.0
        %3164 = vmatprep.subr.mxu0 0.0
        %3165 = vmatpush1.msra.mxu0 0.0
        %3166 = vmatprep.subr.mxu0 0.0
        %3167 = vmatpush1.msra.mxu0 0.0
        %3168 = vmatprep.subr.mxu0 0.0
        %3169 = vmatpush1.msra.mxu0 0.0
        %3170 = vmatprep.subr.mxu0 0.0
        %3171 = vmatpush1.msra.mxu0 0.0
        %3172 = vmatprep.subr.mxu0 0.0
        %3173 = vmatpush1.msra.mxu0 0.0
        %3174 = vmatprep.subr.mxu0 0.0
        %3175 = vmatpush1.msra.mxu0 0.0
        %3176 = vmatprep.subr.mxu0 0.0
        %3177 = vmatpush1.msra.mxu0 0.0
        %3178 = vmatprep.subr.mxu0 0.0
        %3179 = vmatpush1.msra.mxu0 0.0
        %3180 = vmatprep.subr.mxu0 0.0
        %3181 = vmatpush1.msra.mxu0 0.0
        %3182 = vmatprep.subr.mxu0 0.0
        %3183 = vmatpush1.msra.mxu0 0.0
        %3184 = vmatprep.subr.mxu0 0.0
        %3185 = vmatpush1.msra.mxu0 0.0
        %3186 = vmatprep.subr.mxu0 0.0
        %3187 = vmatpush1.msra.mxu0 0.0
        %3188 = vmatprep.subr.mxu0 0.0
        %3189 = vmatpush1.msra.mxu0 0.0
        %3190 = vmatprep.subr.mxu0 0.0
        %3191 = vmatpush1.msra.mxu0 0.0
        %3192 = vmatprep.subr.mxu0 0.0
        %3193 = vmatpush1.msra.mxu0 0.0
        %3194 = vmatprep.subr.mxu0 0.0
        %3195 = vmatpush1.msra.mxu0 0.0
        %3196 = vmatprep.subr.mxu0 0.0
        %3197 = vmatpush1.msra.mxu0 0.0
        %3198 = vmatprep.subr.mxu0 0.0
        %3199 = vmatpush1.msra.mxu0 0.0
        %3200 = vmatprep.subr.mxu0 0.0
        %3201 = vmatpush1.msra.mxu0 0.0
        %3202 = vmatprep.subr.mxu0 0.0
        %3203 = vmatpush1.msra.mxu0 0.0
        %3204 = vmatprep.subr.mxu0 0.0
        %3205 = vmatpush1.msra.mxu0 0.0
        %3206 = vmatprep.subr.mxu0 0.0
        %3207 = vmatpush1.msra.mxu0 0.0
        %3208 = vmatprep.subr.mxu0 0.0
        %3209 = vmatpush1.msra.mxu0 0.0
        %3210 = vmatprep.subr.mxu0 0.0
        %3211 = vmatpush1.msra.mxu0 0.0
        %3212 = vmatprep.subr.mxu0 0.0
        %3213 = vmatpush1.msra.mxu0 0.0
        %3214 = vmatprep.subr.mxu0 0.0
        %3215 = vmatpush1.msra.mxu0 0.0
        %3216 = vmatprep.subr.mxu0 0.0
        %3217 = vmatpush1.msra.mxu0 0.0
        %3218 = vmatprep.mubr.f32.mxu0 0.0
        %3219 = vmatmul.mubr.f32.gmra.mrb[0].mxu0 %v3152
        %v3220 = vpop.f32.mrb[0].mxu0
        %v3221 = vadd.f32 0.0, %v3220
        %v3222 = vpop.f32.mrb[0].mxu0
        %3223 = vdwg.mxu0
        %v3225 = vsel %vm2317, %v2488, 0
        %3227 = vmatprep.subr.mxu0 0.0
        %3228 = vmatpush1.msra.mxu0 %v1169
        %3229 = vmatprep.subr.mxu0 0.0
        %3230 = vmatpush1.msra.mxu0 0.0
        %3231 = vmatprep.subr.mxu0 0.0
        %3232 = vmatpush1.msra.mxu0 0.0
        %3233 = vmatprep.subr.mxu0 0.0
        %3234 = vmatpush1.msra.mxu0 0.0
        %3235 = vmatprep.subr.mxu0 0.0
        %3236 = vmatpush1.msra.mxu0 0.0
        %3237 = vmatprep.subr.mxu0 0.0
        %3238 = vmatpush1.msra.mxu0 0.0
        %3239 = vmatprep.subr.mxu0 0.0
        %3240 = vmatpush1.msra.mxu0 0.0
        %3241 = vmatprep.subr.mxu0 0.0
        %3242 = vmatpush1.msra.mxu0 0.0
        %3243 = vmatprep.subr.mxu0 0.0
        %3244 = vmatpush1.msra.mxu0 0.0
        %3245 = vmatprep.subr.mxu0 0.0
        %3246 = vmatpush1.msra.mxu0 0.0
        %3247 = vmatprep.subr.mxu0 0.0
        %3248 = vmatpush1.msra.mxu0 0.0
        %3249 = vmatprep.subr.mxu0 0.0
        %3250 = vmatpush1.msra.mxu0 0.0
        %3251 = vmatprep.subr.mxu0 0.0
        %3252 = vmatpush1.msra.mxu0 0.0
        %3253 = vmatprep.subr.mxu0 0.0
        %3254 = vmatpush1.msra.mxu0 0.0
        %3255 = vmatprep.subr.mxu0 0.0
        %3256 = vmatpush1.msra.mxu0 0.0
        %3257 = vmatprep.subr.mxu0 0.0
        %3258 = vmatpush1.msra.mxu0 0.0
        %3259 = vmatprep.subr.mxu0 0.0
        %3260 = vmatpush1.msra.mxu0 0.0
        %3261 = vmatprep.subr.mxu0 0.0
        %3262 = vmatpush1.msra.mxu0 0.0
        %3263 = vmatprep.subr.mxu0 0.0
        %3264 = vmatpush1.msra.mxu0 0.0
        %3265 = vmatprep.subr.mxu0 0.0
        %3266 = vmatpush1.msra.mxu0 0.0
        %3267 = vmatprep.subr.mxu0 0.0
        %3268 = vmatpush1.msra.mxu0 0.0
        %3269 = vmatprep.subr.mxu0 0.0
        %3270 = vmatpush1.msra.mxu0 0.0
        %3271 = vmatprep.subr.mxu0 0.0
        %3272 = vmatpush1.msra.mxu0 0.0
        %3273 = vmatprep.subr.mxu0 0.0
        %3274 = vmatpush1.msra.mxu0 0.0
        %3275 = vmatprep.subr.mxu0 0.0
        %3276 = vmatpush1.msra.mxu0 0.0
        %3277 = vmatprep.subr.mxu0 0.0
        %3278 = vmatpush1.msra.mxu0 0.0
        %3279 = vmatprep.subr.mxu0 0.0
        %3280 = vmatpush1.msra.mxu0 0.0
        %3281 = vmatprep.subr.mxu0 0.0
        %3282 = vmatpush1.msra.mxu0 0.0
        %3283 = vmatprep.subr.mxu0 0.0
        %3284 = vmatpush1.msra.mxu0 0.0
        %3285 = vmatprep.subr.mxu0 0.0
        %3286 = vmatpush1.msra.mxu0 0.0
        %3287 = vmatprep.subr.mxu0 0.0
        %3288 = vmatpush1.msra.mxu0 0.0
        %3289 = vmatprep.subr.mxu0 0.0
        %3290 = vmatpush1.msra.mxu0 0.0
        %3291 = vmatprep.mubr.f32.mxu0 0.0
        %3292 = vmatmul.mubr.f32.gmra.mrb[0].mxu0 %v3225
        %v3293 = vpop.f32.mrb[0].mxu0
        %v3294 = vadd.f32 0.0, %v3293
        %v3295 = vpop.f32.mrb[0].mxu0
        %3296 = vdwg.mxu0
        %v3298 = vsel %vm2317, %v2489, 0
        %3300 = vmatprep.subr.mxu0 0.0
        %3301 = vmatpush1.msra.mxu0 %v1174
        %3302 = vmatprep.subr.mxu0 0.0
        %3303 = vmatpush1.msra.mxu0 0.0
        %3304 = vmatprep.subr.mxu0 0.0
        %3305 = vmatpush1.msra.mxu0 0.0
        %3306 = vmatprep.subr.mxu0 0.0
        %3307 = vmatpush1.msra.mxu0 0.0
        %3308 = vmatprep.subr.mxu0 0.0
        %3309 = vmatpush1.msra.mxu0 0.0
        %3310 = vmatprep.subr.mxu0 0.0
        %3311 = vmatpush1.msra.mxu0 0.0
        %3312 = vmatprep.subr.mxu0 0.0
        %3313 = vmatpush1.msra.mxu0 0.0
        %3314 = vmatprep.subr.mxu0 0.0
        %3315 = vmatpush1.msra.mxu0 0.0
        %3316 = vmatprep.subr.mxu0 0.0
        %3317 = vmatpush1.msra.mxu0 0.0
        %3318 = vmatprep.subr.mxu0 0.0
        %3319 = vmatpush1.msra.mxu0 0.0
        %3320 = vmatprep.subr.mxu0 0.0
        %3321 = vmatpush1.msra.mxu0 0.0
        %3322 = vmatprep.subr.mxu0 0.0
        %3323 = vmatpush1.msra.mxu0 0.0
        %3324 = vmatprep.subr.mxu0 0.0
        %3325 = vmatpush1.msra.mxu0 0.0
        %3326 = vmatprep.subr.mxu0 0.0
        %3327 = vmatpush1.msra.mxu0 0.0
        %3328 = vmatprep.subr.mxu0 0.0
        %3329 = vmatpush1.msra.mxu0 0.0
        %3330 = vmatprep.subr.mxu0 0.0
        %3331 = vmatpush1.msra.mxu0 0.0
        %3332 = vmatprep.subr.mxu0 0.0
        %3333 = vmatpush1.msra.mxu0 0.0
        %3334 = vmatprep.subr.mxu0 0.0
        %3335 = vmatpush1.msra.mxu0 0.0
        %3336 = vmatprep.subr.mxu0 0.0
        %3337 = vmatpush1.msra.mxu0 0.0
        %3338 = vmatprep.subr.mxu0 0.0
        %3339 = vmatpush1.msra.mxu0 0.0
        %3340 = vmatprep.subr.mxu0 0.0
        %3341 = vmatpush1.msra.mxu0 0.0
        %3342 = vmatprep.subr.mxu0 0.0
        %3343 = vmatpush1.msra.mxu0 0.0
        %3344 = vmatprep.subr.mxu0 0.0
        %3345 = vmatpush1.msra.mxu0 0.0
        %3346 = vmatprep.subr.mxu0 0.0
        %3347 = vmatpush1.msra.mxu0 0.0
        %3348 = vmatprep.subr.mxu0 0.0
        %3349 = vmatpush1.msra.mxu0 0.0
        %3350 = vmatprep.subr.mxu0 0.0
        %3351 = vmatpush1.msra.mxu0 0.0
        %3352 = vmatprep.subr.mxu0 0.0
        %3353 = vmatpush1.msra.mxu0 0.0
        %3354 = vmatprep.subr.mxu0 0.0
        %3355 = vmatpush1.msra.mxu0 0.0
        %3356 = vmatprep.subr.mxu0 0.0
        %3357 = vmatpush1.msra.mxu0 0.0
        %3358 = vmatprep.subr.mxu0 0.0
        %3359 = vmatpush1.msra.mxu0 0.0
        %3360 = vmatprep.subr.mxu0 0.0
        %3361 = vmatpush1.msra.mxu0 0.0
        %3362 = vmatprep.subr.mxu0 0.0
        %3363 = vmatpush1.msra.mxu0 0.0
        %3364 = vmatprep.mubr.f32.mxu0 0.0
        %3365 = vmatmul.mubr.f32.gmra.mrb[0].mxu0 %v3298
        %v3366 = vpop.f32.mrb[0].mxu0
        %v3367 = vadd.f32 0.0, %v3366
        %v3368 = vpop.f32.mrb[0].mxu0
        %3369 = vdwg.mxu0
        %v3371 = vsel %vm2317, %v2490, 0
        %3373 = vmatprep.subr.mxu0 0.0
        %3374 = vmatpush1.msra.mxu0 %v1179
        %3375 = vmatprep.subr.mxu0 0.0
        %3376 = vmatpush1.msra.mxu0 0.0
        %3377 = vmatprep.subr.mxu0 0.0
        %3378 = vmatpush1.msra.mxu0 0.0
        %3379 = vmatprep.subr.mxu0 0.0
        %3380 = vmatpush1.msra.mxu0 0.0
        %3381 = vmatprep.subr.mxu0 0.0
        %3382 = vmatpush1.msra.mxu0 0.0
        %3383 = vmatprep.subr.mxu0 0.0
        %3384 = vmatpush1.msra.mxu0 0.0
        %3385 = vmatprep.subr.mxu0 0.0
        %3386 = vmatpush1.msra.mxu0 0.0
        %3387 = vmatprep.subr.mxu0 0.0
        %3388 = vmatpush1.msra.mxu0 0.0
        %3389 = vmatprep.subr.mxu0 0.0
        %3390 = vmatpush1.msra.mxu0 0.0
        %3391 = vmatprep.subr.mxu0 0.0
        %3392 = vmatpush1.msra.mxu0 0.0
        %3393 = vmatprep.subr.mxu0 0.0
        %3394 = vmatpush1.msra.mxu0 0.0
        %3395 = vmatprep.subr.mxu0 0.0
        %3396 = vmatpush1.msra.mxu0 0.0
        %3397 = vmatprep.subr.mxu0 0.0
        %3398 = vmatpush1.msra.mxu0 0.0
        %3399 = vmatprep.subr.mxu0 0.0
        %3400 = vmatpush1.msra.mxu0 0.0
        %3401 = vmatprep.subr.mxu0 0.0
        %3402 = vmatpush1.msra.mxu0 0.0
        %3403 = vmatprep.subr.mxu0 0.0
        %3404 = vmatpush1.msra.mxu0 0.0
        %3405 = vmatprep.subr.mxu0 0.0
        %3406 = vmatpush1.msra.mxu0 0.0
        %3407 = vmatprep.subr.mxu0 0.0
        %3408 = vmatpush1.msra.mxu0 0.0
        %3409 = vmatprep.subr.mxu0 0.0
        %3410 = vmatpush1.msra.mxu0 0.0
        %3411 = vmatprep.subr.mxu0 0.0
        %3412 = vmatpush1.msra.mxu0 0.0
        %3413 = vmatprep.subr.mxu0 0.0
        %3414 = vmatpush1.msra.mxu0 0.0
        %3415 = vmatprep.subr.mxu0 0.0
        %3416 = vmatpush1.msra.mxu0 0.0
        %3417 = vmatprep.subr.mxu0 0.0
        %3418 = vmatpush1.msra.mxu0 0.0
        %3419 = vmatprep.subr.mxu0 0.0
        %3420 = vmatpush1.msra.mxu0 0.0
        %3421 = vmatprep.subr.mxu0 0.0
        %3422 = vmatpush1.msra.mxu0 0.0
        %3423 = vmatprep.subr.mxu0 0.0
        %3424 = vmatpush1.msra.mxu0 0.0
        %3425 = vmatprep.subr.mxu0 0.0
        %3426 = vmatpush1.msra.mxu0 0.0
        %3427 = vmatprep.subr.mxu0 0.0
        %3428 = vmatpush1.msra.mxu0 0.0
        %3429 = vmatprep.subr.mxu0 0.0
        %3430 = vmatpush1.msra.mxu0 0.0
        %3431 = vmatprep.subr.mxu0 0.0
        %3432 = vmatpush1.msra.mxu0 0.0
        %3433 = vmatprep.subr.mxu0 0.0
        %3434 = vmatpush1.msra.mxu0 0.0
        %3435 = vmatprep.subr.mxu0 0.0
        %3436 = vmatpush1.msra.mxu0 0.0
        %3437 = vmatprep.mubr.f32.mxu0 0.0
        %3438 = vmatmul.mubr.f32.gmra.mrb[0].mxu0 %v3371
        %v3439 = vpop.f32.mrb[0].mxu0
        %v3440 = vadd.f32 0.0, %v3439
        %v3441 = vpop.f32.mrb[0].mxu0
        %3442 = vdwg.mxu0
        %v3444 = vsel %vm2317, %v2491, 0
        %3446 = vmatprep.subr.mxu0 0.0
        %3447 = vmatpush1.msra.mxu0 %v1184
        %3448 = vmatprep.subr.mxu0 0.0
        %3449 = vmatpush1.msra.mxu0 0.0
        %3450 = vmatprep.subr.mxu0 0.0
        %3451 = vmatpush1.msra.mxu0 0.0
        %3452 = vmatprep.subr.mxu0 0.0
        %3453 = vmatpush1.msra.mxu0 0.0
        %3454 = vmatprep.subr.mxu0 0.0
        %3455 = vmatpush1.msra.mxu0 0.0
        %3456 = vmatprep.subr.mxu0 0.0
        %3457 = vmatpush1.msra.mxu0 0.0
        %3458 = vmatprep.subr.mxu0 0.0
        %3459 = vmatpush1.msra.mxu0 0.0
        %3460 = vmatprep.subr.mxu0 0.0
        %3461 = vmatpush1.msra.mxu0 0.0
        %3462 = vmatprep.subr.mxu0 0.0
        %3463 = vmatpush1.msra.mxu0 0.0
        %3464 = vmatprep.subr.mxu0 0.0
        %3465 = vmatpush1.msra.mxu0 0.0
        %3466 = vmatprep.subr.mxu0 0.0
        %3467 = vmatpush1.msra.mxu0 0.0
        %3468 = vmatprep.subr.mxu0 0.0
        %3469 = vmatpush1.msra.mxu0 0.0
        %3470 = vmatprep.subr.mxu0 0.0
        %3471 = vmatpush1.msra.mxu0 0.0
        %3472 = vmatprep.subr.mxu0 0.0
        %3473 = vmatpush1.msra.mxu0 0.0
        %3474 = vmatprep.subr.mxu0 0.0
        %3475 = vmatpush1.msra.mxu0 0.0
        %3476 = vmatprep.subr.mxu0 0.0
        %3477 = vmatpush1.msra.mxu0 0.0
        %3478 = vmatprep.subr.mxu0 0.0
        %3479 = vmatpush1.msra.mxu0 0.0
        %3480 = vmatprep.subr.mxu0 0.0
        %3481 = vmatpush1.msra.mxu0 0.0
        %3482 = vmatprep.subr.mxu0 0.0
        %3483 = vmatpush1.msra.mxu0 0.0
        %3484 = vmatprep.subr.mxu0 0.0
        %3485 = vmatpush1.msra.mxu0 0.0
        %3486 = vmatprep.subr.mxu0 0.0
        %3487 = vmatpush1.msra.mxu0 0.0
        %3488 = vmatprep.subr.mxu0 0.0
        %3489 = vmatpush1.msra.mxu0 0.0
        %3490 = vmatprep.subr.mxu0 0.0
        %3491 = vmatpush1.msra.mxu0 0.0
        %3492 = vmatprep.subr.mxu0 0.0
        %3493 = vmatpush1.msra.mxu0 0.0
        %3494 = vmatprep.subr.mxu0 0.0
        %3495 = vmatpush1.msra.mxu0 0.0
        %3496 = vmatprep.subr.mxu0 0.0
        %3497 = vmatpush1.msra.mxu0 0.0
        %3498 = vmatprep.subr.mxu0 0.0
        %3499 = vmatpush1.msra.mxu0 0.0
        %3500 = vmatprep.subr.mxu0 0.0
        %3501 = vmatpush1.msra.mxu0 0.0
        %3502 = vmatprep.subr.mxu0 0.0
        %3503 = vmatpush1.msra.mxu0 0.0
        %3504 = vmatprep.subr.mxu0 0.0
        %3505 = vmatpush1.msra.mxu0 0.0
        %3506 = vmatprep.subr.mxu0 0.0
        %3507 = vmatpush1.msra.mxu0 0.0
        %3508 = vmatprep.subr.mxu0 0.0
        %3509 = vmatpush1.msra.mxu0 0.0
        %3510 = vmatprep.mubr.f32.mxu0 0.0
        %3511 = vmatmul.mubr.f32.gmra.mrb[0].mxu0 %v3444
        %v3512 = vpop.f32.mrb[0].mxu0
        %v3513 = vadd.f32 0.0, %v3512
        %v3514 = vpop.f32.mrb[0].mxu0
        %3515 = vdwg.mxu0
        %v3517 = vsel %vm2317, %v2492, 0
        %3519 = vmatprep.subr.mxu0 0.0
        %3520 = vmatpush1.msra.mxu0 %v1189
        %3521 = vmatprep.subr.mxu0 0.0
        %3522 = vmatpush1.msra.mxu0 0.0
        %3523 = vmatprep.subr.mxu0 0.0
        %3524 = vmatpush1.msra.mxu0 0.0
        %3525 = vmatprep.subr.mxu0 0.0
        %3526 = vmatpush1.msra.mxu0 0.0
        %3527 = vmatprep.subr.mxu0 0.0
        %3528 = vmatpush1.msra.mxu0 0.0
        %3529 = vmatprep.subr.mxu0 0.0
        %3530 = vmatpush1.msra.mxu0 0.0
        %3531 = vmatprep.subr.mxu0 0.0
        %3532 = vmatpush1.msra.mxu0 0.0
        %3533 = vmatprep.subr.mxu0 0.0
        %3534 = vmatpush1.msra.mxu0 0.0
        %3535 = vmatprep.subr.mxu0 0.0
        %3536 = vmatpush1.msra.mxu0 0.0
        %3537 = vmatprep.subr.mxu0 0.0
        %3538 = vmatpush1.msra.mxu0 0.0
        %3539 = vmatprep.subr.mxu0 0.0
        %3540 = vmatpush1.msra.mxu0 0.0
        %3541 = vmatprep.subr.mxu0 0.0
        %3542 = vmatpush1.msra.mxu0 0.0
        %3543 = vmatprep.subr.mxu0 0.0
        %3544 = vmatpush1.msra.mxu0 0.0
        %3545 = vmatprep.subr.mxu0 0.0
        %3546 = vmatpush1.msra.mxu0 0.0
        %3547 = vmatprep.subr.mxu0 0.0
        %3548 = vmatpush1.msra.mxu0 0.0
        %3549 = vmatprep.subr.mxu0 0.0
        %3550 = vmatpush1.msra.mxu0 0.0
        %3551 = vmatprep.subr.mxu0 0.0
        %3552 = vmatpush1.msra.mxu0 0.0
        %3553 = vmatprep.subr.mxu0 0.0
        %3554 = vmatpush1.msra.mxu0 0.0
        %3555 = vmatprep.subr.mxu0 0.0
        %3556 = vmatpush1.msra.mxu0 0.0
        %3557 = vmatprep.subr.mxu0 0.0
        %3558 = vmatpush1.msra.mxu0 0.0
        %3559 = vmatprep.subr.mxu0 0.0
        %3560 = vmatpush1.msra.mxu0 0.0
        %3561 = vmatprep.subr.mxu0 0.0
        %3562 = vmatpush1.msra.mxu0 0.0
        %3563 = vmatprep.subr.mxu0 0.0
        %3564 = vmatpush1.msra.mxu0 0.0
        %3565 = vmatprep.subr.mxu0 0.0
        %3566 = vmatpush1.msra.mxu0 0.0
        %3567 = vmatprep.subr.mxu0 0.0
        %3568 = vmatpush1.msra.mxu0 0.0
        %3569 = vmatprep.subr.mxu0 0.0
        %3570 = vmatpush1.msra.mxu0 0.0
        %3571 = vmatprep.subr.mxu0 0.0
        %3572 = vmatpush1.msra.mxu0 0.0
        %3573 = vmatprep.subr.mxu0 0.0
        %3574 = vmatpush1.msra.mxu0 0.0
        %3575 = vmatprep.subr.mxu0 0.0
        %3576 = vmatpush1.msra.mxu0 0.0
        %3577 = vmatprep.subr.mxu0 0.0
        %3578 = vmatpush1.msra.mxu0 0.0
        %3579 = vmatprep.subr.mxu0 0.0
        %3580 = vmatpush1.msra.mxu0 0.0
        %3581 = vmatprep.subr.mxu0 0.0
        %3582 = vmatpush1.msra.mxu0 0.0
        %3583 = vmatprep.mubr.f32.mxu0 0.0
        %3584 = vmatmul.mubr.f32.gmra.mrb[0].mxu0 %v3517
        %v3585 = vpop.f32.mrb[0].mxu0
        %v3586 = vadd.f32 0.0, %v3585
        %v3587 = vpop.f32.mrb[0].mxu0
        %3588 = vdwg.mxu0
        %v3590 = vsel %vm2317, %v2493, 0
        %3592 = vmatprep.subr.mxu0 0.0
        %3593 = vmatpush1.msra.mxu0 %v1194
        %3594 = vmatprep.subr.mxu0 0.0
        %3595 = vmatpush1.msra.mxu0 0.0
        %3596 = vmatprep.subr.mxu0 0.0
        %3597 = vmatpush1.msra.mxu0 0.0
        %3598 = vmatprep.subr.mxu0 0.0
        %3599 = vmatpush1.msra.mxu0 0.0
        %3600 = vmatprep.subr.mxu0 0.0
        %3601 = vmatpush1.msra.mxu0 0.0
        %3602 = vmatprep.subr.mxu0 0.0
        %3603 = vmatpush1.msra.mxu0 0.0
        %3604 = vmatprep.subr.mxu0 0.0
        %3605 = vmatpush1.msra.mxu0 0.0
        %3606 = vmatprep.subr.mxu0 0.0
        %3607 = vmatpush1.msra.mxu0 0.0
        %3608 = vmatprep.subr.mxu0 0.0
        %3609 = vmatpush1.msra.mxu0 0.0
        %3610 = vmatprep.subr.mxu0 0.0
        %3611 = vmatpush1.msra.mxu0 0.0
        %3612 = vmatprep.subr.mxu0 0.0
        %3613 = vmatpush1.msra.mxu0 0.0
        %3614 = vmatprep.subr.mxu0 0.0
        %3615 = vmatpush1.msra.mxu0 0.0
        %3616 = vmatprep.subr.mxu0 0.0
        %3617 = vmatpush1.msra.mxu0 0.0
        %3618 = vmatprep.subr.mxu0 0.0
        %3619 = vmatpush1.msra.mxu0 0.0
        %3620 = vmatprep.subr.mxu0 0.0
        %3621 = vmatpush1.msra.mxu0 0.0
        %3622 = vmatprep.subr.mxu0 0.0
        %3623 = vmatpush1.msra.mxu0 0.0
        %3624 = vmatprep.subr.mxu0 0.0
        %3625 = vmatpush1.msra.mxu0 0.0
        %3626 = vmatprep.subr.mxu0 0.0
        %3627 = vmatpush1.msra.mxu0 0.0
        %3628 = vmatprep.subr.mxu0 0.0
        %3629 = vmatpush1.msra.mxu0 0.0
        %3630 = vmatprep.subr.mxu0 0.0
        %3631 = vmatpush1.msra.mxu0 0.0
        %3632 = vmatprep.subr.mxu0 0.0
        %3633 = vmatpush1.msra.mxu0 0.0
        %3634 = vmatprep.subr.mxu0 0.0
        %3635 = vmatpush1.msra.mxu0 0.0
        %3636 = vmatprep.subr.mxu0 0.0
        %3637 = vmatpush1.msra.mxu0 0.0
        %3638 = vmatprep.subr.mxu0 0.0
        %3639 = vmatpush1.msra.mxu0 0.0
        %3640 = vmatprep.subr.mxu0 0.0
        %3641 = vmatpush1.msra.mxu0 0.0
        %3642 = vmatprep.subr.mxu0 0.0
        %3643 = vmatpush1.msra.mxu0 0.0
        %3644 = vmatprep.subr.mxu0 0.0
        %3645 = vmatpush1.msra.mxu0 0.0
        %3646 = vmatprep.subr.mxu0 0.0
        %3647 = vmatpush1.msra.mxu0 0.0
        %3648 = vmatprep.subr.mxu0 0.0
        %3649 = vmatpush1.msra.mxu0 0.0
        %3650 = vmatprep.subr.mxu0 0.0
        %3651 = vmatpush1.msra.mxu0 0.0
        %3652 = vmatprep.subr.mxu0 0.0
        %3653 = vmatpush1.msra.mxu0 0.0
        %3654 = vmatprep.subr.mxu0 0.0
        %3655 = vmatpush1.msra.mxu0 0.0
        %3656 = vmatprep.mubr.f32.mxu0 0.0
        %3657 = vmatmul.mubr.f32.gmra.mrb[0].mxu0 %v3590
        %v3658 = vpop.f32.mrb[0].mxu0
        %v3659 = vadd.f32 0.0, %v3658
        %v3660 = vpop.f32.mrb[0].mxu0
        %3661 = vdwg.mxu0
        %v3663 = vlaneseq
        %v3664 = vshrl.u32 %v3663, 7
        %v3665 = vsub.s32 0, %v3664
        %v3666 = vrot.slane %v618, %v3665
        %3668 = vmatprep.subr.mxu0 0.0
        %3669 = vmatpush1.msra.mxu0 %v602
        %3670 = vmatprep.subr.mxu0 0.0
        %3671 = vmatpush1.msra.mxu0 %v603
        %3672 = vmatprep.subr.mxu0 0.0
        %3673 = vmatpush1.msra.mxu0 %v604
        %3674 = vmatprep.subr.mxu0 0.0
        %3675 = vmatpush1.msra.mxu0 %v605
        %3676 = vmatprep.subr.mxu0 0.0
        %3677 = vmatpush1.msra.mxu0 %v606
        %3678 = vmatprep.subr.mxu0 0.0
        %3679 = vmatpush1.msra.mxu0 %v607
        %3680 = vmatprep.subr.mxu0 0.0
        %3681 = vmatpush1.msra.mxu0 %v608
        %3682 = vmatprep.subr.mxu0 0.0
        %3683 = vmatpush1.msra.mxu0 %v609
        %3684 = vmatprep.subr.mxu0 0.0
        %3685 = vmatpush1.msra.mxu0 %v610
        %3686 = vmatprep.subr.mxu0 0.0
        %3687 = vmatpush1.msra.mxu0 %v611
        %3688 = vmatprep.subr.mxu0 0.0
        %3689 = vmatpush1.msra.mxu0 %v612
        %3690 = vmatprep.subr.mxu0 0.0
        %3691 = vmatpush1.msra.mxu0 %v613
        %3692 = vmatprep.subr.mxu0 0.0
        %3693 = vmatpush1.msra.mxu0 %v614
        %3694 = vmatprep.subr.mxu0 0.0
        %3695 = vmatpush1.msra.mxu0 %v615
        %3696 = vmatprep.subr.mxu0 0.0
        %3697 = vmatpush1.msra.mxu0 %v616
        %3698 = vmatprep.subr.mxu0 0.0
        %3699 = vmatpush1.msra.mxu0 %v617
        %3700 = vmatprep.subr.mxu0 0.0
        %3701 = vmatpush1.msra.mxu0 0.0
        %3702 = vmatprep.subr.mxu0 0.0
        %3703 = vmatpush1.msra.mxu0 0.0
        %3704 = vmatprep.subr.mxu0 0.0
        %3705 = vmatpush1.msra.mxu0 0.0
        %3706 = vmatprep.subr.mxu0 0.0
        %3707 = vmatpush1.msra.mxu0 0.0
        %3708 = vmatprep.subr.mxu0 0.0
        %3709 = vmatpush1.msra.mxu0 0.0
        %3710 = vmatprep.subr.mxu0 0.0
        %3711 = vmatpush1.msra.mxu0 0.0
        %3712 = vmatprep.subr.mxu0 0.0
        %3713 = vmatpush1.msra.mxu0 0.0
        %3714 = vmatprep.subr.mxu0 0.0
        %3715 = vmatpush1.msra.mxu0 0.0
        %3716 = vmatprep.subr.mxu0 0.0
        %3717 = vmatpush1.msra.mxu0 0.0
        %3718 = vmatprep.subr.mxu0 0.0
        %3719 = vmatpush1.msra.mxu0 0.0
        %3720 = vmatprep.subr.mxu0 0.0
        %3721 = vmatpush1.msra.mxu0 0.0
        %3722 = vmatprep.subr.mxu0 0.0
        %3723 = vmatpush1.msra.mxu0 0.0
        %3724 = vmatprep.subr.mxu0 0.0
        %3725 = vmatpush1.msra.mxu0 0.0
        %3726 = vmatprep.subr.mxu0 0.0
        %3727 = vmatpush1.msra.mxu0 0.0
        %3728 = vmatprep.subr.mxu0 0.0
        %3729 = vmatpush1.msra.mxu0 0.0
        %3730 = vmatprep.subr.mxu0 0.0
        %3731 = vmatpush1.msra.mxu0 0.0
        %3732 = vmatprep.mubr.f32.mxu0 0.0
        %3733 = vmatmul.mubr.f32.gmra.mrb[0].mxu0 %v2564
        %v3734 = vpop.f32.mrb[0].mxu0
        %v3735 = vadd.f32 %v3666, %v3734
        %v3736 = vpop.f32.mrb[0].mxu0
        %3737 = vmatprep.mubr.f32.mxu0 0.0
        %3738 = vmatmul.mubr.f32.gmra.mrb[0].mxu0 %v2637
        %v3739 = vpop.f32.mrb[0].mxu0
        %v3740 = vadd.f32 %v3666, %v3739
        %v3741 = vpop.f32.mrb[0].mxu0
        %3742 = vmatprep.mubr.f32.mxu0 0.0
        %3743 = vmatmul.mubr.f32.gmra.mrb[0].mxu0 %v2710
        %v3744 = vpop.f32.mrb[0].mxu0
        %v3745 = vadd.f32 %v3666, %v3744
        %v3746 = vpop.f32.mrb[0].mxu0
        %3747 = vmatprep.mubr.f32.mxu0 0.0
        %3748 = vmatmul.mubr.f32.gmra.mrb[0].mxu0 %v2783
        %v3749 = vpop.f32.mrb[0].mxu0
        %v3750 = vadd.f32 %v3666, %v3749
        %v3751 = vpop.f32.mrb[0].mxu0
        %3752 = vmatprep.mubr.f32.mxu0 0.0
        %3753 = vmatmul.mubr.f32.gmra.mrb[0].mxu0 %v2856
        %v3754 = vpop.f32.mrb[0].mxu0
        %v3755 = vadd.f32 %v3666, %v3754
        %v3756 = vpop.f32.mrb[0].mxu0
        %3757 = vmatprep.mubr.f32.mxu0 0.0
        %3758 = vmatmul.mubr.f32.gmra.mrb[0].mxu0 %v2929
        %v3759 = vpop.f32.mrb[0].mxu0
        %v3760 = vadd.f32 %v3666, %v3759
        %v3761 = vpop.f32.mrb[0].mxu0
        %3762 = vmatprep.mubr.f32.mxu0 0.0
        %3763 = vmatmul.mubr.f32.gmra.mrb[0].mxu0 %v3002
        %v3764 = vpop.f32.mrb[0].mxu0
        %v3765 = vadd.f32 %v3666, %v3764
        %v3766 = vpop.f32.mrb[0].mxu0
        %3767 = vmatprep.mubr.f32.mxu0 0.0
        %3768 = vmatmul.mubr.f32.gmra.mrb[0].mxu0 %v3075
        %v3769 = vpop.f32.mrb[0].mxu0
        %v3770 = vadd.f32 %v3666, %v3769
        %v3771 = vpop.f32.mrb[0].mxu0
        %3772 = vmatprep.mubr.f32.mxu0 0.0
        %3773 = vmatmul.mubr.f32.gmra.mrb[0].mxu0 %v3148
        %v3774 = vpop.f32.mrb[0].mxu0
        %v3775 = vadd.f32 %v3666, %v3774
        %v3776 = vpop.f32.mrb[0].mxu0
        %3777 = vmatprep.mubr.f32.mxu0 0.0
        %3778 = vmatmul.mubr.f32.gmra.mrb[0].mxu0 %v3221
        %v3779 = vpop.f32.mrb[0].mxu0
        %v3780 = vadd.f32 %v3666, %v3779
        %v3781 = vpop.f32.mrb[0].mxu0
        %3782 = vmatprep.mubr.f32.mxu0 0.0
        %3783 = vmatmul.mubr.f32.gmra.mrb[0].mxu0 %v3294
        %v3784 = vpop.f32.mrb[0].mxu0
        %v3785 = vadd.f32 %v3666, %v3784
        %v3786 = vpop.f32.mrb[0].mxu0
        %3787 = vmatprep.mubr.f32.mxu0 0.0
        %3788 = vmatmul.mubr.f32.gmra.mrb[0].mxu0 %v3367
        %v3789 = vpop.f32.mrb[0].mxu0
        %v3790 = vadd.f32 %v3666, %v3789
        %v3791 = vpop.f32.mrb[0].mxu0
        %3792 = vmatprep.mubr.f32.mxu0 0.0
        %3793 = vmatmul.mubr.f32.gmra.mrb[0].mxu0 %v3440
        %v3794 = vpop.f32.mrb[0].mxu0
        %v3795 = vadd.f32 %v3666, %v3794
        %v3796 = vpop.f32.mrb[0].mxu0
        %3797 = vmatprep.mubr.f32.mxu0 0.0
        %3798 = vmatmul.mubr.f32.gmra.mrb[0].mxu0 %v3513
        %v3799 = vpop.f32.mrb[0].mxu0
        %v3800 = vadd.f32 %v3666, %v3799
        %v3801 = vpop.f32.mrb[0].mxu0
        %3802 = vmatprep.mubr.f32.mxu0 0.0
        %3803 = vmatmul.mubr.f32.gmra.mrb[0].mxu0 %v3586
        %v3804 = vpop.f32.mrb[0].mxu0
        %v3805 = vadd.f32 %v3666, %v3804
        %v3806 = vpop.f32.mrb[0].mxu0
        %3807 = vmatprep.mubr.f32.mxu0 0.0
        %3808 = vmatmul.mubr.f32.gmra.mrb[0].mxu0 %v3659
        %v3809 = vpop.f32.mrb[0].mxu0
        %v3810 = vadd.f32 %v3666, %v3809
        %v3811 = vpop.f32.mrb[0].mxu0
        %3812 = vdwg.mxu0
        %3813 = vst [vmem:[%s548] sm:$0xff] %v3735
        %3814 = vst [vmem:[%s548 + $0x10] sm:$0xff] %v3740
        %3815 = vst [vmem:[%s548 + $0x20] sm:$0xff] %v3745
        %3816 = vst [vmem:[%s548 + $0x30] sm:$0xff] %v3750
        %3817 = vst [vmem:[%s548 + $0x40] sm:$0xff] %v3755
        %3818 = vst [vmem:[%s548 + $0x50] sm:$0xff] %v3760
        %3819 = vst [vmem:[%s548 + $0x60] sm:$0xff] %v3765
        %3820 = vst [vmem:[%s548 + $0x70] sm:$0xff] %v3770
        %3821 = vst [vmem:[%s548 + $0x8] sm:$0xff] %v3775
        %3822 = vst [vmem:[%s548 + $0x18] sm:$0xff] %v3780
        %3823 = vst [vmem:[%s548 + $0x28] sm:$0xff] %v3785
        %3824 = vst [vmem:[%s548 + $0x38] sm:$0xff] %v3790
        %3825 = vst [vmem:[%s548 + $0x48] sm:$0xff] %v3795
        %3826 = vst [vmem:[%s548 + $0x58] sm:$0xff] %v3800
        %3827 = vst [vmem:[%s548 + $0x68] sm:$0xff] %v3805
        %3828 = vst [vmem:[%s548 + $0x78] sm:$0xff] %v3810
        %s3829 = sand.u32 %s237, 1
        %s3830 = scalar_lea.sflag [#allocation5], %s3829
        %s3831 = sand.u32 %s237, 1
        %s3832 = smul.addr %s3831, 128
        %s3833 = scalar_lea.vmem [#allocation4], %s3832
        // Predicated region
        $region129: #{pose_attention_forward.1} parent=119 // pred_check
          %p3834 = pneg %p247
        $region130: #{pose_attention_forward.1} parent=119 // pred_check_branch
          %3836 = sbr.rel (%p3834) target = $region132
        $region131: #{pose_attention_forward.1} parent=119 // pred_region
          %s3837 = smul.u32 8, %s27
          %s3838 = smul.u32 2, %s28
          %s3840 = ssub.s32 2048, 2048
          %3841 = vsyncadd %s3830, %s3840
          %s3842 = smul.addr %s3837, 2
          %s3843 = sadd.s32 %s3838, %s3842
          %s3844 = smul.addr %s29, 32
          %s3845 = sadd.s32 %s3843, %s3844
          %s3846 = smul.addr %s3845, 128
          %s3847 = scalar_lea.hbm %s8, %s3846
          %s3848 = sshll.u32 %s3833, 4
          %s3849 = int_to_ptr.vmem [resolvable:$true] %s3848
          %3854 = dma.vmem_to_hbm [thread:$0]  %s3849, 2048, %s3847, %s3830, 128, 128, 8
        $region132: #{pose_attention_forward.1} parent=119 // pred_fallthru
          _
      $region120: #{pose_attention_forward.1} parent=5 // pred_fallthru
        _
      %p3855 = scmp.le.s32.totalorder 2, %s17
      // Predicated region
      $region133: #{pose_attention_forward.1} parent=5 // pred_check
        %p3856 = pneg %p3855
      $region134: #{pose_attention_forward.1} parent=5 // pred_check_branch
        %3858 = sbr.rel (%p3856) target = $region136
      $region135: #{pose_attention_forward.1} parent=5 // pred_region
        %s3859 = ssub.s32 %s17, 2
        // Predicated region
        $region137: #{pose_attention_forward.1} parent=135 // pred_check
          %p3860 = pneg %p253
        $region138: #{pose_attention_forward.1} parent=135 // pred_check_branch
          %3862 = sbr.rel (%p3860) target = $region140
        $region139: #{pose_attention_forward.1} parent=135 // pred_region
          %s3863 = sand.u32 %s238, 1
          %s3864 = scalar_lea.sflag [#allocation5], %s3863
          %s3865 = sand.u32 %s238, 1
          %s3866 = smul.addr %s3865, 128
          %s3867 = scalar_lea.vmem [#allocation4], %s3866
          %3868 = dma.done %s3864, 2048
        $region140: #{pose_attention_forward.1} parent=135 // pred_fallthru
          _
      $region136: #{pose_attention_forward.1} parent=5 // pred_fallthru
        _
    $region6: #{pose_attention_forward.1} parent=1 // loop_footer
      %s21 = sadd.s32 1, %s17
    $region7: #{pose_attention_forward.1} parent=1 // loop_footer_branch
      %16 = sbr.rel target = $region3
    $region8: #{pose_attention_forward.1} parent=1 // loop_exit
      _
    %3869 = vsyncpa [#allocation5], 1
    %s3870 = scalar_lea.sflag [#allocation5], 1
    %3871 = vsyncpa %s3870, 1

</llo_original>
